<compile_context>
chip_gen: v7x
topology: tpu7x:2x2x1
jax: 0.10.0
libtpu: 0.0.40
codegen_flags: <defaults>
</compile_context>

<pallas_src>
import math

import jax
import jax.numpy as jnp
import numpy as np
from jax.experimental import pallas as pl
from jax.experimental.pallas import tpu as pltpu

# ----------------------------------------------------------------------------
# Static network dimensions (28x28 single-channel input implied by 20*4*4=320).
# ----------------------------------------------------------------------------
_H = _W = 28
_K = 5
_OC1, _P1H = 10, 12        # conv1 out channels, pooled H (and W) after block_1
_OC2, _P2H = 20, 4         # conv2 out channels, pooled H (and W) after block_2
_FC1, _NCLS = 50, 10

# (cp, s) order shared by kernel and docs:
#   cp = column parity inside the 2x2 pooling window of conv1's output,
#   s  = parity of the pooled (block_1 output) column.
_S1_CS_ORDER = ((0, 0), (0, 1), (1, 0), (1, 1))


# ----------------------------------------------------------------------------
# Fused Pallas kernel: whole forward pass for one image, everything in VMEM.
# ----------------------------------------------------------------------------
def _mynet_fused_kernel(x_ref, t1_ref, t2_ref, w1c_ref, w2t_ref,
                        b1_ref, b2_ref, fb1_ref, fb2_ref, o_ref):
    f32, bf16 = jnp.float32, jnp.bfloat16

    t1_blk = [t1_ref[j] for j in range(_K)]    # each [28, 240] bf16
    t2_blk = [t2_ref[j] for j in range(_K)]    # each [120, 160] bf16

    # ---- block_1: Conv2d(1->10, k=5) + MaxPool2d(2) + ReLU -------------------
    # pooled1[s][u, oc*12 + ph] = max over the 2x2 window of conv1 output at
    # pooled position (ph, pw=2u+s)  (bias added after the max - same result).
    pooled1 = [None, None]
    for (cp, s) in _S1_CS_ORDER:
        acc = None
        for j in range(_K):
            t = 2 * s + cp + j                 # conv1 input-column offset
            r, dm = t % 4, t // 4              # mod-4 residue / extra shift
            lhs = x_ref[0, r, dm:dm + 6, :]    # [6, 28] bf16 (transposed image)
            part = jnp.dot(lhs, t1_blk[j],     # [6, 240]  lanes = rp0 | rp1
                           preferred_element_type=f32)
            acc = part if acc is None else acc + part
        m = jnp.maximum(acc[:, :120], acc[:, 120:])            # max over row parity
        pooled1[s] = m if pooled1[s] is None else jnp.maximum(pooled1[s], m)
    h1 = [jnp.maximum(pooled1[s] + b1_ref[...], 0.0) for s in (0, 1)]  # [6,120] f32

    # ---- block_2: Conv2d(10->20, k=5) + Dropout2d + MaxPool2d(2) + ReLU ------
    # TODO(synk): Dropout2d(0.5) is identity in eval/inference mode; training-time
    # channel-wise dropout is not implemented.
    pooled2 = None
    for cp2 in range(2):
        acc = None
        for j in range(_K):
            t = cp2 + j
            s, dm = t % 2, t // 2
            lhs = h1[s][dm:dm + 4, :].astype(bf16)             # [4, 120]
            part = jnp.dot(lhs, t2_blk[j],                     # [4, 160]
                           preferred_element_type=f32)
            acc = part if acc is None else acc + part
        m = jnp.maximum(acc[:, :80], acc[:, 80:])              # max over row parity
        pooled2 = m if pooled2 is None else jnp.maximum(pooled2, m)
    h2 = jnp.maximum(pooled2 + b2_ref[...], 0.0)               # [4, 80] f32
    # h2[pw2, oc2*4 + ph2] == flattened feature index 4*(oc2*4+ph2) + pw2

    # ---- classifier: Flatten -> Linear(320,50) -> Linear(50,10) -> log_softmax
    h = fb1_ref[...]                                           # [1, 50] f32
    for col in range(4):
        h = h + jnp.dot(h2[col:col + 1, :].astype(bf16), w1c_ref[col],
                        preferred_element_type=f32)            # [1, 50]
    logits = jnp.dot(h.astype(bf16), w2t_ref[...],
                     preferred_element_type=f32) + fb2_ref[...]  # [1, 10]
    mx = jnp.max(logits, axis=1, keepdims=True)
    sh = logits - mx
    lse = jnp.log(jnp.sum(jnp.exp(sh), axis=1, keepdims=True))
    o_ref[0] = sh - lse


def _fused_forward(xt4, kp):
    """xt4: [B, 4, 7, 28] bf16 (transposed, column-mod-4-split image)."""
    B = xt4.shape[0]
    return pl.pallas_call(
        _mynet_fused_kernel,
        out_shape=jax.ShapeDtypeStruct((B, 1, _NCLS), jnp.float32),
        grid=(B,),
        in_specs=[
            pl.BlockSpec((1, 4, 7, _H), lambda b: (b, 0, 0, 0)),       # image
            pl.BlockSpec((_K, _H, 2 * _OC1 * _P1H), lambda b: (0, 0, 0)),   # conv1 Toeplitz
            pl.BlockSpec((_K, _OC1 * _P1H, 2 * _OC2 * _P2H), lambda b: (0, 0, 0)),  # conv2 Toeplitz
            pl.BlockSpec((4, _OC2 * _P2H, _FC1), lambda b: (0, 0, 0)),  # fc1 (per flat column)
            pl.BlockSpec((_FC1, _NCLS), lambda b: (0, 0)),              # fc2
            pl.BlockSpec((1, _OC1 * _P1H), lambda b: (0, 0)),           # conv1 bias rows
            pl.BlockSpec((1, _OC2 * _P2H), lambda b: (0, 0)),           # conv2 bias rows
            pl.BlockSpec((1, _FC1), lambda b: (0, 0)),                  # fc1 bias
            pl.BlockSpec((1, _NCLS), lambda b: (0, 0)),                 # fc2 bias
        ],
        out_specs=pl.BlockSpec((1, 1, _NCLS), lambda b: (b, 0, 0)),
        compiler_params=pltpu.CompilerParams(
            dimension_semantics=("parallel",),       # shards batch over v7x's 2 TCs
            vmem_limit_bytes=16 * 1024 * 1024,
        ),
    )(xt4, kp["t1"], kp["t2"], kp["w1c"], kp["w2t"],
      kp["b1"], kp["b2"], kp["fb1"], kp["fb2"])


@jax.jit
def my_network_forward(x, kparams):
    """Forward pass.  x: [B, 1, 28, 28] float32 (NCHW) -> log-probs [B, 10]."""
    B = x.shape[0]
    # Transpose so image columns become the leading axis, then split columns by
    # residue mod 4 (this is what lets conv1's pooling become elementwise).
    xt = jnp.transpose(x[:, 0, :, :], (0, 2, 1))                    # [B, col, row]
    xt4 = jnp.stack([xt[:, r::4, :] for r in range(4)], axis=1)     # [B, 4, 7, 28]
    out = _fused_forward(xt4.astype(jnp.bfloat16), kparams)
    return out.reshape(B, _NCLS)


# ----------------------------------------------------------------------------
# One-time host-side repack of PyTorch-layout parameters into kernel layout.
# ----------------------------------------------------------------------------
def build_kernel_params(params):
    w1 = np.asarray(params["conv1_w"], np.float32)   # [10, 1, 5, 5]
    b1 = np.asarray(params["conv1_b"], np.float32)   # [10]
    w2 = np.asarray(params["conv2_w"], np.float32)   # [20, 10, 5, 5]
    b2 = np.asarray(params["conv2_b"], np.float32)   # [20]
    f1w = np.asarray(params["fc1_w"], np.float32)    # [50, 320]
    f1b = np.asarray(params["fc1_b"], np.float32)    # [50]
    f2w = np.asarray(params["fc2_w"], np.float32)    # [10, 50]
    f2b = np.asarray(params["fc2_b"], np.float32)    # [10]

    # conv1 row-Toeplitz: t1[j, row, rp*120 + oc*12 + ph] = w1[oc, 0, row-(2ph+rp), j]
    t1 = np.zeros((_K, _H, 2 * _OC1 * _P1H), np.float32)
    for j in range(_K):
        for rp in range(2):
            off = rp * _OC1 * _P1H
            for ph in range(_P1H):
                for i in range(_K):
                    row = 2 * ph + rp + i
                    t1[j, row, off + np.arange(_OC1) * _P1H + ph] = w1[:, 0, i, j]
    b1_row = np.repeat(b1, _P1H)[None, :]            # [1, 120]

    # conv2 row-Toeplitz over (c1, y) rows:
    # t2[j, c1*12 + y, rp2*80 + oc2*4 + ph2] = w2[oc2, c1, y-(2ph2+rp2), j]
    t2 = np.zeros((_K, _OC1 * _P1H, 2 * _OC2 * _P2H), np.float32)
    for j in range(_K):
        for rp2 in range(2):
            off = rp2 * _OC2 * _P2H
            for ph2 in range(_P2H):
                for i in range(_K):
                    y = 2 * ph2 + rp2 + i
                    for c1 in range(_OC1):
                        t2[j, c1 * _P1H + y,
                           off + np.arange(_OC2) * _P2H + ph2] = w2[:, c1, i, j]
    b2_row = np.repeat(b2, _P2H)[None, :]            # [1, 80]

    # classifier: kernel features are h2[pw2, r] with r = oc2*4+ph2 and PyTorch
    # flatten index f = 4*r + pw2  ->  slice fc1_w per pw2 column.
    w1c = np.zeros((4, _OC2 * _P2H, _FC1), np.float32)
    for col in range(4):
        w1c[col] = f1w[:, np.arange(_OC2 * _P2H) * 4 + col].T
    w2t = f2w.T                                      # [50, 10]

    bf16 = jnp.bfloat16
    return {
        "t1": jnp.asarray(t1, dtype=bf16),
        "t2": jnp.asarray(t2, dtype=bf16),
        "w1c": jnp.asarray(w1c, dtype=bf16),
        "w2t": jnp.asarray(w2t, dtype=bf16),
        "b1": jnp.asarray(b1_row, dtype=jnp.float32),
        "b2": jnp.asarray(b2_row, dtype=jnp.float32),
        "fb1": jnp.asarray(f1b[None, :], dtype=jnp.float32),
        "fb2": jnp.asarray(f2b[None, :], dtype=jnp.float32),
    }


# ----------------------------------------------------------------------------
# Deterministic example parameters + pure-JAX reference for verification.
# ----------------------------------------------------------------------------
def init_params(key):
    """PyTorch-style uniform(-1/sqrt(fan_in), 1/sqrt(fan_in)) init."""
    ks = jax.random.split(key, 8)

    def u(k, shape, fan_in):
        bound = 1.0 / math.sqrt(fan_in)
        return jax.random.uniform(k, shape, jnp.float32, -bound, bound)

    return {
        "conv1_w": u(ks[0], (10, 1, 5, 5), 25),
        "conv1_b": u(ks[1], (10,), 25),
        "conv2_w": u(ks[2], (20, 10, 5, 5), 250),
        "conv2_b": u(ks[3], (20,), 250),
        "fc1_w": u(ks[4], (50, 320), 320),
        "fc1_b": u(ks[5], (50,), 320),
        "fc2_w": u(ks[6], (10, 50), 50),
        "fc2_b": u(ks[7], (10,), 50),
    }


@jax.jit
def reference_forward(x, params):
    """Pure-JAX float32 reference of the PyTorch module (eval mode)."""
    dn = ("NCHW", "OIHW", "NCHW")

    def block(y, w, b):
        y = jax.lax.conv_general_dilated(y, w, (1, 1), "VALID",
                                         dimension_numbers=dn)
        y = y + b[None, :, None, None]
        y = jax.lax.reduce_window(y, -jnp.inf, jax.lax.max,
                                  (1, 1, 2, 2), (1, 1, 2, 2), "VALID")
        return jnp.maximum(y, 0.0)

    y = block(x, params["conv1_w"], params["conv1_b"])
    y = block(y, params["conv2_w"], params["conv2_b"])
    y = y.reshape(x.shape[0], -1)
    y = y @ params["fc1_w"].T + params["fc1_b"]
    y = y @ params["fc2_w"].T + params["fc2_b"]
    return jax.nn.log_softmax(y, axis=1)


if __name__ == "__main__":
    key = jax.random.PRNGKey(0)
    pkey, xkey = jax.random.split(key)
    params = init_params(pkey)
    kparams = build_kernel_params(params)
    x = jax.random.normal(xkey, (2, 1, 28, 28), dtype=jnp.float32)

    out = my_network_forward(x, kparams)
    out = jax.block_until_ready(out)

    assert out.shape == (2, 10), out.shape
    assert bool(jnp.all(jnp.isfinite(out)))
    # log_softmax rows must exp-sum to ~1.
    assert jnp.allclose(jnp.sum(jnp.exp(out), axis=1), 1.0, atol=1e-4)
    # Cross-check against the float32 XLA reference (bf16 MXU operands -> loose tol).
    ref = reference_forward(x, params)
    max_err = float(jnp.max(jnp.abs(out - ref)))
    assert max_err < 7.5e-2, f"max abs error vs reference: {max_err}"
    print("KERNEL_OK")
</pallas_src>

<mosaic_0001>
module attributes {stable_mosaic.version = 11 : i64} {
  func.func @_mynet_fused_kernel(%arg0: i32, %arg1: memref<1x4x7x28xbf16, #tpu.memory_space<vmem>>, %arg2: memref<5x28x240xbf16, #tpu.memory_space<vmem>>, %arg3: memref<5x120x160xbf16, #tpu.memory_space<vmem>>, %arg4: memref<4x80x50xbf16, #tpu.memory_space<vmem>>, %arg5: memref<50x10xbf16, #tpu.memory_space<vmem>>, %arg6: memref<1x120xf32, #tpu.memory_space<vmem>>, %arg7: memref<1x80xf32, #tpu.memory_space<vmem>>, %arg8: memref<1x50xf32, #tpu.memory_space<vmem>>, %arg9: memref<1x10xf32, #tpu.memory_space<vmem>>, %arg10: memref<1x1x10xf32, #tpu.memory_space<vmem>>) attributes {dimension_semantics = [#tpu.dimension_semantics<parallel>], iteration_bounds = array<i64: 2>, scalar_prefetch = 0 : i64, scratch_operands = 0 : i64, tpu.core_type = #tpu.core_type<tc>, window_params = [{transform_indices = @transform_0, window_bounds = array<i64: 1, 4, 7, 28>}, {pipeline_mode = #tpu.pipeline_mode<synchronous>, transform_indices = @transform_1, window_bounds = array<i64: 5, 28, 240>}, {pipeline_mode = #tpu.pipeline_mode<synchronous>, transform_indices = @transform_2, window_bounds = array<i64: 5, 120, 160>}, {pipeline_mode = #tpu.pipeline_mode<synchronous>, transform_indices = @transform_3, window_bounds = array<i64: 4, 80, 50>}, {pipeline_mode = #tpu.pipeline_mode<synchronous>, transform_indices = @transform_4, window_bounds = array<i64: 50, 10>}, {pipeline_mode = #tpu.pipeline_mode<synchronous>, transform_indices = @transform_5, window_bounds = array<i64: 1, 120>}, {pipeline_mode = #tpu.pipeline_mode<synchronous>, transform_indices = @transform_6, window_bounds = array<i64: 1, 80>}, {pipeline_mode = #tpu.pipeline_mode<synchronous>, transform_indices = @transform_7, window_bounds = array<i64: 1, 50>}, {pipeline_mode = #tpu.pipeline_mode<synchronous>, transform_indices = @transform_8, window_bounds = array<i64: 1, 10>}, {transform_indices = @transform_9, window_bounds = array<i64: 1, 1, 10>}]} {
    %c0 = arith.constant 0 : index
    %c0_0 = arith.constant 0 : index
    %c0_1 = arith.constant 0 : index
    %0 = vector.load %arg2[%c0, %c0_0, %c0_1] : memref<5x28x240xbf16, #tpu.memory_space<vmem>>, vector<1x28x240xbf16>
    %1 = vector.shape_cast %0 : vector<1x28x240xbf16> to vector<28x240xbf16>
    %c1 = arith.constant 1 : index
    %c0_2 = arith.constant 0 : index
    %c0_3 = arith.constant 0 : index
    %2 = vector.load %arg2[%c1, %c0_2, %c0_3] : memref<5x28x240xbf16, #tpu.memory_space<vmem>>, vector<1x28x240xbf16>
    %3 = vector.shape_cast %2 : vector<1x28x240xbf16> to vector<28x240xbf16>
    %c2 = arith.constant 2 : index
    %c0_4 = arith.constant 0 : index
    %c0_5 = arith.constant 0 : index
    %4 = vector.load %arg2[%c2, %c0_4, %c0_5] : memref<5x28x240xbf16, #tpu.memory_space<vmem>>, vector<1x28x240xbf16>
    %5 = vector.shape_cast %4 : vector<1x28x240xbf16> to vector<28x240xbf16>
    %c3 = arith.constant 3 : index
    %c0_6 = arith.constant 0 : index
    %c0_7 = arith.constant 0 : index
    %6 = vector.load %arg2[%c3, %c0_6, %c0_7] : memref<5x28x240xbf16, #tpu.memory_space<vmem>>, vector<1x28x240xbf16>
    %7 = vector.shape_cast %6 : vector<1x28x240xbf16> to vector<28x240xbf16>
    %c4 = arith.constant 4 : index
    %c0_8 = arith.constant 0 : index
    %c0_9 = arith.constant 0 : index
    %8 = vector.load %arg2[%c4, %c0_8, %c0_9] : memref<5x28x240xbf16, #tpu.memory_space<vmem>>, vector<1x28x240xbf16>
    %9 = vector.shape_cast %8 : vector<1x28x240xbf16> to vector<28x240xbf16>
    %c0_10 = arith.constant 0 : index
    %c0_11 = arith.constant 0 : index
    %c0_12 = arith.constant 0 : index
    %10 = vector.load %arg3[%c0_10, %c0_11, %c0_12] : memref<5x120x160xbf16, #tpu.memory_space<vmem>>, vector<1x120x160xbf16>
    %11 = vector.shape_cast %10 : vector<1x120x160xbf16> to vector<120x160xbf16>
    %c1_13 = arith.constant 1 : index
    %c0_14 = arith.constant 0 : index
    %c0_15 = arith.constant 0 : index
    %12 = vector.load %arg3[%c1_13, %c0_14, %c0_15] : memref<5x120x160xbf16, #tpu.memory_space<vmem>>, vector<1x120x160xbf16>
    %13 = vector.shape_cast %12 : vector<1x120x160xbf16> to vector<120x160xbf16>
    %c2_16 = arith.constant 2 : index
    %c0_17 = arith.constant 0 : index
    %c0_18 = arith.constant 0 : index
    %14 = vector.load %arg3[%c2_16, %c0_17, %c0_18] : memref<5x120x160xbf16, #tpu.memory_space<vmem>>, vector<1x120x160xbf16>
    %15 = vector.shape_cast %14 : vector<1x120x160xbf16> to vector<120x160xbf16>
    %c3_19 = arith.constant 3 : index
    %c0_20 = arith.constant 0 : index
    %c0_21 = arith.constant 0 : index
    %16 = vector.load %arg3[%c3_19, %c0_20, %c0_21] : memref<5x120x160xbf16, #tpu.memory_space<vmem>>, vector<1x120x160xbf16>
    %17 = vector.shape_cast %16 : vector<1x120x160xbf16> to vector<120x160xbf16>
    %c4_22 = arith.constant 4 : index
    %c0_23 = arith.constant 0 : index
    %c0_24 = arith.constant 0 : index
    %18 = vector.load %arg3[%c4_22, %c0_23, %c0_24] : memref<5x120x160xbf16, #tpu.memory_space<vmem>>, vector<1x120x160xbf16>
    %19 = vector.shape_cast %18 : vector<1x120x160xbf16> to vector<120x160xbf16>
    %c0_25 = arith.constant 0 : index
    %c0_26 = arith.constant 0 : index
    %c0_27 = arith.constant 0 : index
    %c0_28 = arith.constant 0 : index
    %20 = vector.load %arg1[%c0_25, %c0_26, %c0_27, %c0_28] : memref<1x4x7x28xbf16, #tpu.memory_space<vmem>>, vector<1x1x6x28xbf16>
    %21 = vector.shape_cast %20 : vector<1x1x6x28xbf16> to vector<6x28xbf16>
    %cst = arith.constant dense<0.000000e+00> : vector<6x240xf32>
    %22 = tpu.matmul %21, %1, %cst {dimension_numbers = #tpu.dot_dimension_numbers<[1], [0], [0], [1], [0, 0, 1, 1], [], []>} : vector<6x28xbf16>, vector<28x240xbf16>, vector<6x240xf32> -> vector<6x240xf32>
    %c0_29 = arith.constant 0 : index
    %c1_30 = arith.constant 1 : index
    %c0_31 = arith.constant 0 : index
    %c0_32 = arith.constant 0 : index
    %23 = vector.load %arg1[%c0_29, %c1_30, %c0_31, %c0_32] : memref<1x4x7x28xbf16, #tpu.memory_space<vmem>>, vector<1x1x6x28xbf16>
    %24 = vector.shape_cast %23 : vector<1x1x6x28xbf16> to vector<6x28xbf16>
    %cst_33 = arith.constant dense<0.000000e+00> : vector<6x240xf32>
    %25 = tpu.matmul %24, %3, %cst_33 {dimension_numbers = #tpu.dot_dimension_numbers<[1], [0], [0], [1], [0, 0, 1, 1], [], []>} : vector<6x28xbf16>, vector<28x240xbf16>, vector<6x240xf32> -> vector<6x240xf32>
    %26 = arith.addf %22, %25 : vector<6x240xf32>
    %c0_34 = arith.constant 0 : index
    %c2_35 = arith.constant 2 : index
    %c0_36 = arith.constant 0 : index
    %c0_37 = arith.constant 0 : index
    %27 = vector.load %arg1[%c0_34, %c2_35, %c0_36, %c0_37] : memref<1x4x7x28xbf16, #tpu.memory_space<vmem>>, vector<1x1x6x28xbf16>
    %28 = vector.shape_cast %27 : vector<1x1x6x28xbf16> to vector<6x28xbf16>
    %cst_38 = arith.constant dense<0.000000e+00> : vector<6x240xf32>
    %29 = tpu.matmul %28, %5, %cst_38 {dimension_numbers = #tpu.dot_dimension_numbers<[1], [0], [0], [1], [0, 0, 1, 1], [], []>} : vector<6x28xbf16>, vector<28x240xbf16>, vector<6x240xf32> -> vector<6x240xf32>
    %30 = arith.addf %26, %29 : vector<6x240xf32>
    %c0_39 = arith.constant 0 : index
    %c3_40 = arith.constant 3 : index
    %c0_41 = arith.constant 0 : index
    %c0_42 = arith.constant 0 : index
    %31 = vector.load %arg1[%c0_39, %c3_40, %c0_41, %c0_42] : memref<1x4x7x28xbf16, #tpu.memory_space<vmem>>, vector<1x1x6x28xbf16>
    %32 = vector.shape_cast %31 : vector<1x1x6x28xbf16> to vector<6x28xbf16>
    %cst_43 = arith.constant dense<0.000000e+00> : vector<6x240xf32>
    %33 = tpu.matmul %32, %7, %cst_43 {dimension_numbers = #tpu.dot_dimension_numbers<[1], [0], [0], [1], [0, 0, 1, 1], [], []>} : vector<6x28xbf16>, vector<28x240xbf16>, vector<6x240xf32> -> vector<6x240xf32>
    %34 = arith.addf %30, %33 : vector<6x240xf32>
    %c0_44 = arith.constant 0 : index
    %c0_45 = arith.constant 0 : index
    %c1_46 = arith.constant 1 : index
    %c0_47 = arith.constant 0 : index
    %35 = vector.load %arg1[%c0_44, %c0_45, %c1_46, %c0_47] : memref<1x4x7x28xbf16, #tpu.memory_space<vmem>>, vector<1x1x6x28xbf16>
    %36 = vector.shape_cast %35 : vector<1x1x6x28xbf16> to vector<6x28xbf16>
    %cst_48 = arith.constant dense<0.000000e+00> : vector<6x240xf32>
    %37 = tpu.matmul %36, %9, %cst_48 {dimension_numbers = #tpu.dot_dimension_numbers<[1], [0], [0], [1], [0, 0, 1, 1], [], []>} : vector<6x28xbf16>, vector<28x240xbf16>, vector<6x240xf32> -> vector<6x240xf32>
    %38 = arith.addf %34, %37 : vector<6x240xf32>
    %39 = vector.extract_strided_slice %38 {offsets = [0, 0], sizes = [6, 120], strides = [1, 1]} : vector<6x240xf32> to vector<6x120xf32>
    %40 = vector.extract_strided_slice %38 {offsets = [0, 120], sizes = [6, 120], strides = [1, 1]} : vector<6x240xf32> to vector<6x120xf32>
    %41 = arith.maximumf %39, %40 : vector<6x120xf32>
    %c0_49 = arith.constant 0 : index
    %c2_50 = arith.constant 2 : index
    %c0_51 = arith.constant 0 : index
    %c0_52 = arith.constant 0 : index
    %42 = vector.load %arg1[%c0_49, %c2_50, %c0_51, %c0_52] : memref<1x4x7x28xbf16, #tpu.memory_space<vmem>>, vector<1x1x6x28xbf16>
    %43 = vector.shape_cast %42 : vector<1x1x6x28xbf16> to vector<6x28xbf16>
    %cst_53 = arith.constant dense<0.000000e+00> : vector<6x240xf32>
    %44 = tpu.matmul %43, %1, %cst_53 {dimension_numbers = #tpu.dot_dimension_numbers<[1], [0], [0], [1], [0, 0, 1, 1], [], []>} : vector<6x28xbf16>, vector<28x240xbf16>, vector<6x240xf32> -> vector<6x240xf32>
    %c0_54 = arith.constant 0 : index
    %c3_55 = arith.constant 3 : index
    %c0_56 = arith.constant 0 : index
    %c0_57 = arith.constant 0 : index
    %45 = vector.load %arg1[%c0_54, %c3_55, %c0_56, %c0_57] : memref<1x4x7x28xbf16, #tpu.memory_space<vmem>>, vector<1x1x6x28xbf16>
    %46 = vector.shape_cast %45 : vector<1x1x6x28xbf16> to vector<6x28xbf16>
    %cst_58 = arith.constant dense<0.000000e+00> : vector<6x240xf32>
    %47 = tpu.matmul %46, %3, %cst_58 {dimension_numbers = #tpu.dot_dimension_numbers<[1], [0], [0], [1], [0, 0, 1, 1], [], []>} : vector<6x28xbf16>, vector<28x240xbf16>, vector<6x240xf32> -> vector<6x240xf32>
    %48 = arith.addf %44, %47 : vector<6x240xf32>
    %c0_59 = arith.constant 0 : index
    %c0_60 = arith.constant 0 : index
    %c1_61 = arith.constant 1 : index
    %c0_62 = arith.constant 0 : index
    %49 = vector.load %arg1[%c0_59, %c0_60, %c1_61, %c0_62] : memref<1x4x7x28xbf16, #tpu.memory_space<vmem>>, vector<1x1x6x28xbf16>
    %50 = vector.shape_cast %49 : vector<1x1x6x28xbf16> to vector<6x28xbf16>
    %cst_63 = arith.constant dense<0.000000e+00> : vector<6x240xf32>
    %51 = tpu.matmul %50, %5, %cst_63 {dimension_numbers = #tpu.dot_dimension_numbers<[1], [0], [0], [1], [0, 0, 1, 1], [], []>} : vector<6x28xbf16>, vector<28x240xbf16>, vector<6x240xf32> -> vector<6x240xf32>
    %52 = arith.addf %48, %51 : vector<6x240xf32>
    %c0_64 = arith.constant 0 : index
    %c1_65 = arith.constant 1 : index
    %c1_66 = arith.constant 1 : index
    %c0_67 = arith.constant 0 : index
    %53 = vector.load %arg1[%c0_64, %c1_65, %c1_66, %c0_67] : memref<1x4x7x28xbf16, #tpu.memory_space<vmem>>, vector<1x1x6x28xbf16>
    %54 = vector.shape_cast %53 : vector<1x1x6x28xbf16> to vector<6x28xbf16>
    %cst_68 = arith.constant dense<0.000000e+00> : vector<6x240xf32>
    %55 = tpu.matmul %54, %7, %cst_68 {dimension_numbers = #tpu.dot_dimension_numbers<[1], [0], [0], [1], [0, 0, 1, 1], [], []>} : vector<6x28xbf16>, vector<28x240xbf16>, vector<6x240xf32> -> vector<6x240xf32>
    %56 = arith.addf %52, %55 : vector<6x240xf32>
    %c0_69 = arith.constant 0 : index
    %c2_70 = arith.constant 2 : index
    %c1_71 = arith.constant 1 : index
    %c0_72 = arith.constant 0 : index
    %57 = vector.load %arg1[%c0_69, %c2_70, %c1_71, %c0_72] : memref<1x4x7x28xbf16, #tpu.memory_space<vmem>>, vector<1x1x6x28xbf16>
    %58 = vector.shape_cast %57 : vector<1x1x6x28xbf16> to vector<6x28xbf16>
    %cst_73 = arith.constant dense<0.000000e+00> : vector<6x240xf32>
    %59 = tpu.matmul %58, %9, %cst_73 {dimension_numbers = #tpu.dot_dimension_numbers<[1], [0], [0], [1], [0, 0, 1, 1], [], []>} : vector<6x28xbf16>, vector<28x240xbf16>, vector<6x240xf32> -> vector<6x240xf32>
    %60 = arith.addf %56, %59 : vector<6x240xf32>
    %61 = vector.extract_strided_slice %60 {offsets = [0, 0], sizes = [6, 120], strides = [1, 1]} : vector<6x240xf32> to vector<6x120xf32>
    %62 = vector.extract_strided_slice %60 {offsets = [0, 120], sizes = [6, 120], strides = [1, 1]} : vector<6x240xf32> to vector<6x120xf32>
    %63 = arith.maximumf %61, %62 : vector<6x120xf32>
    %c0_74 = arith.constant 0 : index
    %c1_75 = arith.constant 1 : index
    %c0_76 = arith.constant 0 : index
    %c0_77 = arith.constant 0 : index
    %64 = vector.load %arg1[%c0_74, %c1_75, %c0_76, %c0_77] : memref<1x4x7x28xbf16, #tpu.memory_space<vmem>>, vector<1x1x6x28xbf16>
    %65 = vector.shape_cast %64 : vector<1x1x6x28xbf16> to vector<6x28xbf16>
    %cst_78 = arith.constant dense<0.000000e+00> : vector<6x240xf32>
    %66 = tpu.matmul %65, %1, %cst_78 {dimension_numbers = #tpu.dot_dimension_numbers<[1], [0], [0], [1], [0, 0, 1, 1], [], []>} : vector<6x28xbf16>, vector<28x240xbf16>, vector<6x240xf32> -> vector<6x240xf32>
    %c0_79 = arith.constant 0 : index
    %c2_80 = arith.constant 2 : index
    %c0_81 = arith.constant 0 : index
    %c0_82 = arith.constant 0 : index
    %67 = vector.load %arg1[%c0_79, %c2_80, %c0_81, %c0_82] : memref<1x4x7x28xbf16, #tpu.memory_space<vmem>>, vector<1x1x6x28xbf16>
    %68 = vector.shape_cast %67 : vector<1x1x6x28xbf16> to vector<6x28xbf16>
    %cst_83 = arith.constant dense<0.000000e+00> : vector<6x240xf32>
    %69 = tpu.matmul %68, %3, %cst_83 {dimension_numbers = #tpu.dot_dimension_numbers<[1], [0], [0], [1], [0, 0, 1, 1], [], []>} : vector<6x28xbf16>, vector<28x240xbf16>, vector<6x240xf32> -> vector<6x240xf32>
    %70 = arith.addf %66, %69 : vector<6x240xf32>
    %c0_84 = arith.constant 0 : index
    %c3_85 = arith.constant 3 : index
    %c0_86 = arith.constant 0 : index
    %c0_87 = arith.constant 0 : index
    %71 = vector.load %arg1[%c0_84, %c3_85, %c0_86, %c0_87] : memref<1x4x7x28xbf16, #tpu.memory_space<vmem>>, vector<1x1x6x28xbf16>
    %72 = vector.shape_cast %71 : vector<1x1x6x28xbf16> to vector<6x28xbf16>
    %cst_88 = arith.constant dense<0.000000e+00> : vector<6x240xf32>
    %73 = tpu.matmul %72, %5, %cst_88 {dimension_numbers = #tpu.dot_dimension_numbers<[1], [0], [0], [1], [0, 0, 1, 1], [], []>} : vector<6x28xbf16>, vector<28x240xbf16>, vector<6x240xf32> -> vector<6x240xf32>
    %74 = arith.addf %70, %73 : vector<6x240xf32>
    %c0_89 = arith.constant 0 : index
    %c0_90 = arith.constant 0 : index
    %c1_91 = arith.constant 1 : index
    %c0_92 = arith.constant 0 : index
    %75 = vector.load %arg1[%c0_89, %c0_90, %c1_91, %c0_92] : memref<1x4x7x28xbf16, #tpu.memory_space<vmem>>, vector<1x1x6x28xbf16>
    %76 = vector.shape_cast %75 : vector<1x1x6x28xbf16> to vector<6x28xbf16>
    %cst_93 = arith.constant dense<0.000000e+00> : vector<6x240xf32>
    %77 = tpu.matmul %76, %7, %cst_93 {dimension_numbers = #tpu.dot_dimension_numbers<[1], [0], [0], [1], [0, 0, 1, 1], [], []>} : vector<6x28xbf16>, vector<28x240xbf16>, vector<6x240xf32> -> vector<6x240xf32>
    %78 = arith.addf %74, %77 : vector<6x240xf32>
    %c0_94 = arith.constant 0 : index
    %c1_95 = arith.constant 1 : index
    %c1_96 = arith.constant 1 : index
    %c0_97 = arith.constant 0 : index
    %79 = vector.load %arg1[%c0_94, %c1_95, %c1_96, %c0_97] : memref<1x4x7x28xbf16, #tpu.memory_space<vmem>>, vector<1x1x6x28xbf16>
    %80 = vector.shape_cast %79 : vector<1x1x6x28xbf16> to vector<6x28xbf16>
    %cst_98 = arith.constant dense<0.000000e+00> : vector<6x240xf32>
    %81 = tpu.matmul %80, %9, %cst_98 {dimension_numbers = #tpu.dot_dimension_numbers<[1], [0], [0], [1], [0, 0, 1, 1], [], []>} : vector<6x28xbf16>, vector<28x240xbf16>, vector<6x240xf32> -> vector<6x240xf32>
    %82 = arith.addf %78, %81 : vector<6x240xf32>
    %83 = vector.extract_strided_slice %82 {offsets = [0, 0], sizes = [6, 120], strides = [1, 1]} : vector<6x240xf32> to vector<6x120xf32>
    %84 = vector.extract_strided_slice %82 {offsets = [0, 120], sizes = [6, 120], strides = [1, 1]} : vector<6x240xf32> to vector<6x120xf32>
    %85 = arith.maximumf %83, %84 : vector<6x120xf32>
    %86 = arith.maximumf %41, %85 : vector<6x120xf32>
    %c0_99 = arith.constant 0 : index
    %c3_100 = arith.constant 3 : index
    %c0_101 = arith.constant 0 : index
    %c0_102 = arith.constant 0 : index
    %87 = vector.load %arg1[%c0_99, %c3_100, %c0_101, %c0_102] : memref<1x4x7x28xbf16, #tpu.memory_space<vmem>>, vector<1x1x6x28xbf16>
    %88 = vector.shape_cast %87 : vector<1x1x6x28xbf16> to vector<6x28xbf16>
    %cst_103 = arith.constant dense<0.000000e+00> : vector<6x240xf32>
    %89 = tpu.matmul %88, %1, %cst_103 {dimension_numbers = #tpu.dot_dimension_numbers<[1], [0], [0], [1], [0, 0, 1, 1], [], []>} : vector<6x28xbf16>, vector<28x240xbf16>, vector<6x240xf32> -> vector<6x240xf32>
    %c0_104 = arith.constant 0 : index
    %c0_105 = arith.constant 0 : index
    %c1_106 = arith.constant 1 : index
    %c0_107 = arith.constant 0 : index
    %90 = vector.load %arg1[%c0_104, %c0_105, %c1_106, %c0_107] : memref<1x4x7x28xbf16, #tpu.memory_space<vmem>>, vector<1x1x6x28xbf16>
    %91 = vector.shape_cast %90 : vector<1x1x6x28xbf16> to vector<6x28xbf16>
    %cst_108 = arith.constant dense<0.000000e+00> : vector<6x240xf32>
    %92 = tpu.matmul %91, %3, %cst_108 {dimension_numbers = #tpu.dot_dimension_numbers<[1], [0], [0], [1], [0, 0, 1, 1], [], []>} : vector<6x28xbf16>, vector<28x240xbf16>, vector<6x240xf32> -> vector<6x240xf32>
    %93 = arith.addf %89, %92 : vector<6x240xf32>
    %c0_109 = arith.constant 0 : index
    %c1_110 = arith.constant 1 : index
    %c1_111 = arith.constant 1 : index
    %c0_112 = arith.constant 0 : index
    %94 = vector.load %arg1[%c0_109, %c1_110, %c1_111, %c0_112] : memref<1x4x7x28xbf16, #tpu.memory_space<vmem>>, vector<1x1x6x28xbf16>
    %95 = vector.shape_cast %94 : vector<1x1x6x28xbf16> to vector<6x28xbf16>
    %cst_113 = arith.constant dense<0.000000e+00> : vector<6x240xf32>
    %96 = tpu.matmul %95, %5, %cst_113 {dimension_numbers = #tpu.dot_dimension_numbers<[1], [0], [0], [1], [0, 0, 1, 1], [], []>} : vector<6x28xbf16>, vector<28x240xbf16>, vector<6x240xf32> -> vector<6x240xf32>
    %97 = arith.addf %93, %96 : vector<6x240xf32>
    %c0_114 = arith.constant 0 : index
    %c2_115 = arith.constant 2 : index
    %c1_116 = arith.constant 1 : index
    %c0_117 = arith.constant 0 : index
    %98 = vector.load %arg1[%c0_114, %c2_115, %c1_116, %c0_117] : memref<1x4x7x28xbf16, #tpu.memory_space<vmem>>, vector<1x1x6x28xbf16>
    %99 = vector.shape_cast %98 : vector<1x1x6x28xbf16> to vector<6x28xbf16>
    %cst_118 = arith.constant dense<0.000000e+00> : vector<6x240xf32>
    %100 = tpu.matmul %99, %7, %cst_118 {dimension_numbers = #tpu.dot_dimension_numbers<[1], [0], [0], [1], [0, 0, 1, 1], [], []>} : vector<6x28xbf16>, vector<28x240xbf16>, vector<6x240xf32> -> vector<6x240xf32>
    %101 = arith.addf %97, %100 : vector<6x240xf32>
    %c0_119 = arith.constant 0 : index
    %c3_120 = arith.constant 3 : index
    %c1_121 = arith.constant 1 : index
    %c0_122 = arith.constant 0 : index
    %102 = vector.load %arg1[%c0_119, %c3_120, %c1_121, %c0_122] : memref<1x4x7x28xbf16, #tpu.memory_space<vmem>>, vector<1x1x6x28xbf16>
    %103 = vector.shape_cast %102 : vector<1x1x6x28xbf16> to vector<6x28xbf16>
    %cst_123 = arith.constant dense<0.000000e+00> : vector<6x240xf32>
    %104 = tpu.matmul %103, %9, %cst_123 {dimension_numbers = #tpu.dot_dimension_numbers<[1], [0], [0], [1], [0, 0, 1, 1], [], []>} : vector<6x28xbf16>, vector<28x240xbf16>, vector<6x240xf32> -> vector<6x240xf32>
    %105 = arith.addf %101, %104 : vector<6x240xf32>
    %106 = vector.extract_strided_slice %105 {offsets = [0, 0], sizes = [6, 120], strides = [1, 1]} : vector<6x240xf32> to vector<6x120xf32>
    %107 = vector.extract_strided_slice %105 {offsets = [0, 120], sizes = [6, 120], strides = [1, 1]} : vector<6x240xf32> to vector<6x120xf32>
    %108 = arith.maximumf %106, %107 : vector<6x120xf32>
    %109 = arith.maximumf %63, %108 : vector<6x120xf32>
    %c0_124 = arith.constant 0 : index
    %c0_125 = arith.constant 0 : index
    %110 = vector.load %arg6[%c0_124, %c0_125] : memref<1x120xf32, #tpu.memory_space<vmem>>, vector<1x120xf32>
    %111 = vector.broadcast %110 : vector<1x120xf32> to vector<6x120xf32>
    %112 = arith.addf %86, %111 : vector<6x120xf32>
    %cst_126 = arith.constant 0.000000e+00 : f32
    %113 = vector.broadcast %cst_126 : f32 to vector<6x120xf32>
    %114 = arith.maximumf %112, %113 : vector<6x120xf32>
    %c0_127 = arith.constant 0 : index
    %c0_128 = arith.constant 0 : index
    %115 = vector.load %arg6[%c0_127, %c0_128] : memref<1x120xf32, #tpu.memory_space<vmem>>, vector<1x120xf32>
    %116 = vector.broadcast %115 : vector<1x120xf32> to vector<6x120xf32>
    %117 = arith.addf %109, %116 : vector<6x120xf32>
    %cst_129 = arith.constant 0.000000e+00 : f32
    %118 = vector.broadcast %cst_129 : f32 to vector<6x120xf32>
    %119 = arith.maximumf %117, %118 : vector<6x120xf32>
    %120 = vector.extract_strided_slice %114 {offsets = [0, 0], sizes = [4, 120], strides = [1, 1]} : vector<6x120xf32> to vector<4x120xf32>
    %121 = arith.truncf %120 : vector<4x120xf32> to vector<4x120xbf16>
    %cst_130 = arith.constant dense<0.000000e+00> : vector<4x160xf32>
    %122 = tpu.matmul %121, %11, %cst_130 {dimension_numbers = #tpu.dot_dimension_numbers<[1], [0], [0], [1], [0, 0, 1, 1], [], []>} : vector<4x120xbf16>, vector<120x160xbf16>, vector<4x160xf32> -> vector<4x160xf32>
    %123 = vector.extract_strided_slice %119 {offsets = [0, 0], sizes = [4, 120], strides = [1, 1]} : vector<6x120xf32> to vector<4x120xf32>
    %124 = arith.truncf %123 : vector<4x120xf32> to vector<4x120xbf16>
    %cst_131 = arith.constant dense<0.000000e+00> : vector<4x160xf32>
    %125 = tpu.matmul %124, %13, %cst_131 {dimension_numbers = #tpu.dot_dimension_numbers<[1], [0], [0], [1], [0, 0, 1, 1], [], []>} : vector<4x120xbf16>, vector<120x160xbf16>, vector<4x160xf32> -> vector<4x160xf32>
    %126 = arith.addf %122, %125 : vector<4x160xf32>
    %127 = vector.extract_strided_slice %114 {offsets = [1, 0], sizes = [4, 120], strides = [1, 1]} : vector<6x120xf32> to vector<4x120xf32>
    %128 = arith.truncf %127 : vector<4x120xf32> to vector<4x120xbf16>
    %cst_132 = arith.constant dense<0.000000e+00> : vector<4x160xf32>
    %129 = tpu.matmul %128, %15, %cst_132 {dimension_numbers = #tpu.dot_dimension_numbers<[1], [0], [0], [1], [0, 0, 1, 1], [], []>} : vector<4x120xbf16>, vector<120x160xbf16>, vector<4x160xf32> -> vector<4x160xf32>
    %130 = arith.addf %126, %129 : vector<4x160xf32>
    %131 = vector.extract_strided_slice %119 {offsets = [1, 0], sizes = [4, 120], strides = [1, 1]} : vector<6x120xf32> to vector<4x120xf32>
    %132 = arith.truncf %131 : vector<4x120xf32> to vector<4x120xbf16>
    %cst_133 = arith.constant dense<0.000000e+00> : vector<4x160xf32>
    %133 = tpu.matmul %132, %17, %cst_133 {dimension_numbers = #tpu.dot_dimension_numbers<[1], [0], [0], [1], [0, 0, 1, 1], [], []>} : vector<4x120xbf16>, vector<120x160xbf16>, vector<4x160xf32> -> vector<4x160xf32>
    %134 = arith.addf %130, %133 : vector<4x160xf32>
    %135 = vector.extract_strided_slice %114 {offsets = [2, 0], sizes = [4, 120], strides = [1, 1]} : vector<6x120xf32> to vector<4x120xf32>
    %136 = arith.truncf %135 : vector<4x120xf32> to vector<4x120xbf16>
    %cst_134 = arith.constant dense<0.000000e+00> : vector<4x160xf32>
    %137 = tpu.matmul %136, %19, %cst_134 {dimension_numbers = #tpu.dot_dimension_numbers<[1], [0], [0], [1], [0, 0, 1, 1], [], []>} : vector<4x120xbf16>, vector<120x160xbf16>, vector<4x160xf32> -> vector<4x160xf32>
    %138 = arith.addf %134, %137 : vector<4x160xf32>
    %139 = vector.extract_strided_slice %138 {offsets = [0, 0], sizes = [4, 80], strides = [1, 1]} : vector<4x160xf32> to vector<4x80xf32>
    %140 = vector.extract_strided_slice %138 {offsets = [0, 80], sizes = [4, 80], strides = [1, 1]} : vector<4x160xf32> to vector<4x80xf32>
    %141 = arith.maximumf %139, %140 : vector<4x80xf32>
    %142 = vector.extract_strided_slice %119 {offsets = [0, 0], sizes = [4, 120], strides = [1, 1]} : vector<6x120xf32> to vector<4x120xf32>
    %143 = arith.truncf %142 : vector<4x120xf32> to vector<4x120xbf16>
    %cst_135 = arith.constant dense<0.000000e+00> : vector<4x160xf32>
    %144 = tpu.matmul %143, %11, %cst_135 {dimension_numbers = #tpu.dot_dimension_numbers<[1], [0], [0], [1], [0, 0, 1, 1], [], []>} : vector<4x120xbf16>, vector<120x160xbf16>, vector<4x160xf32> -> vector<4x160xf32>
    %145 = vector.extract_strided_slice %114 {offsets = [1, 0], sizes = [4, 120], strides = [1, 1]} : vector<6x120xf32> to vector<4x120xf32>
    %146 = arith.truncf %145 : vector<4x120xf32> to vector<4x120xbf16>
    %cst_136 = arith.constant dense<0.000000e+00> : vector<4x160xf32>
    %147 = tpu.matmul %146, %13, %cst_136 {dimension_numbers = #tpu.dot_dimension_numbers<[1], [0], [0], [1], [0, 0, 1, 1], [], []>} : vector<4x120xbf16>, vector<120x160xbf16>, vector<4x160xf32> -> vector<4x160xf32>
    %148 = arith.addf %144, %147 : vector<4x160xf32>
    %149 = vector.extract_strided_slice %119 {offsets = [1, 0], sizes = [4, 120], strides = [1, 1]} : vector<6x120xf32> to vector<4x120xf32>
    %150 = arith.truncf %149 : vector<4x120xf32> to vector<4x120xbf16>
    %cst_137 = arith.constant dense<0.000000e+00> : vector<4x160xf32>
    %151 = tpu.matmul %150, %15, %cst_137 {dimension_numbers = #tpu.dot_dimension_numbers<[1], [0], [0], [1], [0, 0, 1, 1], [], []>} : vector<4x120xbf16>, vector<120x160xbf16>, vector<4x160xf32> -> vector<4x160xf32>
    %152 = arith.addf %148, %151 : vector<4x160xf32>
    %153 = vector.extract_strided_slice %114 {offsets = [2, 0], sizes = [4, 120], strides = [1, 1]} : vector<6x120xf32> to vector<4x120xf32>
    %154 = arith.truncf %153 : vector<4x120xf32> to vector<4x120xbf16>
    %cst_138 = arith.constant dense<0.000000e+00> : vector<4x160xf32>
    %155 = tpu.matmul %154, %17, %cst_138 {dimension_numbers = #tpu.dot_dimension_numbers<[1], [0], [0], [1], [0, 0, 1, 1], [], []>} : vector<4x120xbf16>, vector<120x160xbf16>, vector<4x160xf32> -> vector<4x160xf32>
    %156 = arith.addf %152, %155 : vector<4x160xf32>
    %157 = vector.extract_strided_slice %119 {offsets = [2, 0], sizes = [4, 120], strides = [1, 1]} : vector<6x120xf32> to vector<4x120xf32>
    %158 = arith.truncf %157 : vector<4x120xf32> to vector<4x120xbf16>
    %cst_139 = arith.constant dense<0.000000e+00> : vector<4x160xf32>
    %159 = tpu.matmul %158, %19, %cst_139 {dimension_numbers = #tpu.dot_dimension_numbers<[1], [0], [0], [1], [0, 0, 1, 1], [], []>} : vector<4x120xbf16>, vector<120x160xbf16>, vector<4x160xf32> -> vector<4x160xf32>
    %160 = arith.addf %156, %159 : vector<4x160xf32>
    %161 = vector.extract_strided_slice %160 {offsets = [0, 0], sizes = [4, 80], strides = [1, 1]} : vector<4x160xf32> to vector<4x80xf32>
    %162 = vector.extract_strided_slice %160 {offsets = [0, 80], sizes = [4, 80], strides = [1, 1]} : vector<4x160xf32> to vector<4x80xf32>
    %163 = arith.maximumf %161, %162 : vector<4x80xf32>
    %164 = arith.maximumf %141, %163 : vector<4x80xf32>
    %c0_140 = arith.constant 0 : index
    %c0_141 = arith.constant 0 : index
    %165 = vector.load %arg7[%c0_140, %c0_141] : memref<1x80xf32, #tpu.memory_space<vmem>>, vector<1x80xf32>
    %166 = vector.broadcast %165 : vector<1x80xf32> to vector<4x80xf32>
    %167 = arith.addf %164, %166 : vector<4x80xf32>
    %cst_142 = arith.constant 0.000000e+00 : f32
    %168 = vector.broadcast %cst_142 : f32 to vector<4x80xf32>
    %169 = arith.maximumf %167, %168 : vector<4x80xf32>
    %c0_143 = arith.constant 0 : index
    %c0_144 = arith.constant 0 : index
    %170 = vector.load %arg8[%c0_143, %c0_144] : memref<1x50xf32, #tpu.memory_space<vmem>>, vector<1x50xf32>
    %171 = vector.extract_strided_slice %169 {offsets = [0, 0], sizes = [1, 80], strides = [1, 1]} : vector<4x80xf32> to vector<1x80xf32>
    %172 = arith.truncf %171 : vector<1x80xf32> to vector<1x80xbf16>
    %c0_145 = arith.constant 0 : index
    %c0_146 = arith.constant 0 : index
    %c0_147 = arith.constant 0 : index
    %173 = vector.load %arg4[%c0_145, %c0_146, %c0_147] : memref<4x80x50xbf16, #tpu.memory_space<vmem>>, vector<1x80x50xbf16>
    %174 = vector.shape_cast %173 : vector<1x80x50xbf16> to vector<80x50xbf16>
    %cst_148 = arith.constant dense<0.000000e+00> : vector<1x50xf32>
    %175 = tpu.matmul %172, %174, %cst_148 {dimension_numbers = #tpu.dot_dimension_numbers<[1], [0], [0], [1], [0, 0, 1, 1], [], []>} : vector<1x80xbf16>, vector<80x50xbf16>, vector<1x50xf32> -> vector<1x50xf32>
    %176 = arith.addf %170, %175 : vector<1x50xf32>
    %177 = vector.extract_strided_slice %169 {offsets = [1, 0], sizes = [1, 80], strides = [1, 1]} : vector<4x80xf32> to vector<1x80xf32>
    %178 = arith.truncf %177 : vector<1x80xf32> to vector<1x80xbf16>
    %c1_149 = arith.constant 1 : index
    %c0_150 = arith.constant 0 : index
    %c0_151 = arith.constant 0 : index
    %179 = vector.load %arg4[%c1_149, %c0_150, %c0_151] : memref<4x80x50xbf16, #tpu.memory_space<vmem>>, vector<1x80x50xbf16>
    %180 = vector.shape_cast %179 : vector<1x80x50xbf16> to vector<80x50xbf16>
    %cst_152 = arith.constant dense<0.000000e+00> : vector<1x50xf32>
    %181 = tpu.matmul %178, %180, %cst_152 {dimension_numbers = #tpu.dot_dimension_numbers<[1], [0], [0], [1], [0, 0, 1, 1], [], []>} : vector<1x80xbf16>, vector<80x50xbf16>, vector<1x50xf32> -> vector<1x50xf32>
    %182 = arith.addf %176, %181 : vector<1x50xf32>
    %183 = vector.extract_strided_slice %169 {offsets = [2, 0], sizes = [1, 80], strides = [1, 1]} : vector<4x80xf32> to vector<1x80xf32>
    %184 = arith.truncf %183 : vector<1x80xf32> to vector<1x80xbf16>
    %c2_153 = arith.constant 2 : index
    %c0_154 = arith.constant 0 : index
    %c0_155 = arith.constant 0 : index
    %185 = vector.load %arg4[%c2_153, %c0_154, %c0_155] : memref<4x80x50xbf16, #tpu.memory_space<vmem>>, vector<1x80x50xbf16>
    %186 = vector.shape_cast %185 : vector<1x80x50xbf16> to vector<80x50xbf16>
    %cst_156 = arith.constant dense<0.000000e+00> : vector<1x50xf32>
    %187 = tpu.matmul %184, %186, %cst_156 {dimension_numbers = #tpu.dot_dimension_numbers<[1], [0], [0], [1], [0, 0, 1, 1], [], []>} : vector<1x80xbf16>, vector<80x50xbf16>, vector<1x50xf32> -> vector<1x50xf32>
    %188 = arith.addf %182, %187 : vector<1x50xf32>
    %189 = vector.extract_strided_slice %169 {offsets = [3, 0], sizes = [1, 80], strides = [1, 1]} : vector<4x80xf32> to vector<1x80xf32>
    %190 = arith.truncf %189 : vector<1x80xf32> to vector<1x80xbf16>
    %c3_157 = arith.constant 3 : index
    %c0_158 = arith.constant 0 : index
    %c0_159 = arith.constant 0 : index
    %191 = vector.load %arg4[%c3_157, %c0_158, %c0_159] : memref<4x80x50xbf16, #tpu.memory_space<vmem>>, vector<1x80x50xbf16>
    %192 = vector.shape_cast %191 : vector<1x80x50xbf16> to vector<80x50xbf16>
    %cst_160 = arith.constant dense<0.000000e+00> : vector<1x50xf32>
    %193 = tpu.matmul %190, %192, %cst_160 {dimension_numbers = #tpu.dot_dimension_numbers<[1], [0], [0], [1], [0, 0, 1, 1], [], []>} : vector<1x80xbf16>, vector<80x50xbf16>, vector<1x50xf32> -> vector<1x50xf32>
    %194 = arith.addf %188, %193 : vector<1x50xf32>
    %195 = arith.truncf %194 : vector<1x50xf32> to vector<1x50xbf16>
    %c0_161 = arith.constant 0 : index
    %c0_162 = arith.constant 0 : index
    %196 = vector.load %arg5[%c0_161, %c0_162] : memref<50x10xbf16, #tpu.memory_space<vmem>>, vector<50x10xbf16>
    %cst_163 = arith.constant dense<0.000000e+00> : vector<1x10xf32>
    %197 = tpu.matmul %195, %196, %cst_163 {dimension_numbers = #tpu.dot_dimension_numbers<[1], [0], [0], [1], [0, 0, 1, 1], [], []>} : vector<1x50xbf16>, vector<50x10xbf16>, vector<1x10xf32> -> vector<1x10xf32>
    %c0_164 = arith.constant 0 : index
    %c0_165 = arith.constant 0 : index
    %198 = vector.load %arg9[%c0_164, %c0_165] : memref<1x10xf32, #tpu.memory_space<vmem>>, vector<1x10xf32>
    %199 = arith.addf %197, %198 : vector<1x10xf32>
    %cst_166 = arith.constant dense<0xFF800000> : vector<1xf32>
    %200 = vector.multi_reduction <maximumf>, %199, %cst_166 [1] : vector<1x10xf32> to vector<1xf32>
    %201 = vector.shape_cast %200 : vector<1xf32> to vector<1x1xf32>
    %202 = vector.broadcast %201 : vector<1x1xf32> to vector<1x10xf32>
    %203 = arith.subf %199, %202 : vector<1x10xf32>
    %204 = math.exp %203 : vector<1x10xf32>
    %cst_167 = arith.constant dense<0.000000e+00> : vector<1xf32>
    %205 = vector.multi_reduction <add>, %204, %cst_167 [1] : vector<1x10xf32> to vector<1xf32>
    %206 = vector.shape_cast %205 : vector<1xf32> to vector<1x1xf32>
    %207 = math.log %206 : vector<1x1xf32>
    %208 = vector.broadcast %207 : vector<1x1xf32> to vector<1x10xf32>
    %209 = arith.subf %203, %208 : vector<1x10xf32>
    %c0_168 = arith.constant 0 : index
    %c0_169 = arith.constant 0 : index
    %c0_170 = arith.constant 0 : index
    %210 = vector.load %arg10[%c0_168, %c0_169, %c0_170] : memref<1x1x10xf32, #tpu.memory_space<vmem>>, vector<1x1x10xf32>
    %211 = vector.shape_cast %210 : vector<1x1x10xf32> to vector<1x10xf32>
    %212 = vector.shape_cast %209 : vector<1x10xf32> to vector<1x1x10xf32>
    tpu.vector_store %arg10[%c0_168, %c0_169, %c0_170], %212 {strides = array<i32>} : memref<1x1x10xf32, #tpu.memory_space<vmem>>, vector<1x1x10xf32>,
    return
  }
  func.func @transform_0(%arg0: i32) -> (i32, i32, i32, i32) {
    %c0_i32 = arith.constant 0 : i32
    %c0_i32_0 = arith.constant 0 : i32
    %c0_i32_1 = arith.constant 0 : i32
    %c0_i32_2 = arith.constant 0 : i32
    return %arg0, %c0_i32, %c0_i32_0, %c0_i32_1 : i32, i32, i32, i32
  }
  func.func @transform_1(%arg0: i32) -> (i32, i32, i32) {
    %c0_i32 = arith.constant 0 : i32
    %c0_i32_0 = arith.constant 0 : i32
    %c0_i32_1 = arith.constant 0 : i32
    %c0_i32_2 = arith.constant 0 : i32
    return %c0_i32, %c0_i32_0, %c0_i32_1 : i32, i32, i32
  }
  func.func @transform_2(%arg0: i32) -> (i32, i32, i32) {
    %c0_i32 = arith.constant 0 : i32
    %c0_i32_0 = arith.constant 0 : i32
    %c0_i32_1 = arith.constant 0 : i32
    %c0_i32_2 = arith.constant 0 : i32
    return %c0_i32, %c0_i32_0, %c0_i32_1 : i32, i32, i32
  }
  func.func @transform_3(%arg0: i32) -> (i32, i32, i32) {
    %c0_i32 = arith.constant 0 : i32
    %c0_i32_0 = arith.constant 0 : i32
    %c0_i32_1 = arith.constant 0 : i32
    %c0_i32_2 = arith.constant 0 : i32
    return %c0_i32, %c0_i32_0, %c0_i32_1 : i32, i32, i32
  }
  func.func @transform_4(%arg0: i32) -> (i32, i32) {
    %c0_i32 = arith.constant 0 : i32
    %c0_i32_0 = arith.constant 0 : i32
    %c0_i32_1 = arith.constant 0 : i32
    return %c0_i32, %c0_i32_0 : i32, i32
  }
  func.func @transform_5(%arg0: i32) -> (i32, i32) {
    %c0_i32 = arith.constant 0 : i32
    %c0_i32_0 = arith.constant 0 : i32
    %c0_i32_1 = arith.constant 0 : i32
    return %c0_i32, %c0_i32_0 : i32, i32
  }
  func.func @transform_6(%arg0: i32) -> (i32, i32) {
    %c0_i32 = arith.constant 0 : i32
    %c0_i32_0 = arith.constant 0 : i32
    %c0_i32_1 = arith.constant 0 : i32
    return %c0_i32, %c0_i32_0 : i32, i32
  }
  func.func @transform_7(%arg0: i32) -> (i32, i32) {
    %c0_i32 = arith.constant 0 : i32
    %c0_i32_0 = arith.constant 0 : i32
    %c0_i32_1 = arith.constant 0 : i32
    return %c0_i32, %c0_i32_0 : i32, i32
  }
  func.func @transform_8(%arg0: i32) -> (i32, i32) {
    %c0_i32 = arith.constant 0 : i32
    %c0_i32_0 = arith.constant 0 : i32
    %c0_i32_1 = arith.constant 0 : i32
    return %c0_i32, %c0_i32_0 : i32, i32
  }
  func.func @transform_9(%arg0: i32) -> (i32, i32, i32) {
    %c0_i32 = arith.constant 0 : i32
    %c0_i32_0 = arith.constant 0 : i32
    %c0_i32_1 = arith.constant 0 : i32
    return %arg0, %c0_i32, %c0_i32_0 : i32, i32, i32
  }
}

</mosaic_0001>

<llo_original>
// kernel: my_network_forward.1
$region0: #{my_network_forward.1}
  #allocation0 [shape = 'u32[]', space=smem, size = 0x4, offset = 0x4, fixed_abs, tag = 'smem constant byte address 0x4 - core index']
  #allocation1 [shape = 'u32[144,128]{1,0:T(1,128)}', space=vmem, size = 0x12000, scoped, tag = 'internal scratch']
  %s0 = inlined_call_operand.vmem [shape: bf16[2,4,7,28], index: 0, kind: input, shape index: {}]
  %s1 = inlined_call_operand.vmem [shape: bf16[5,28,240], index: 1, kind: input, shape index: {}]
  %s2 = inlined_call_operand.vmem [shape: bf16[5,120,160], index: 2, kind: input, shape index: {}]
  %s3 = inlined_call_operand.vmem [shape: bf16[4,80,50], index: 3, kind: input, shape index: {}]
  %s4 = inlined_call_operand.vmem [shape: bf16[50,10], index: 4, kind: input, shape index: {}]
  %s5 = inlined_call_operand.vmem [shape: f32[1,120], index: 5, kind: input, shape index: {}]
  %s6 = inlined_call_operand.vmem [shape: f32[1,80], index: 6, kind: input, shape index: {}]
  %s7 = inlined_call_operand.vmem [shape: f32[1,50], index: 7, kind: input, shape index: {}]
  %s8 = inlined_call_operand.vmem [shape: f32[1,10], index: 8, kind: input, shape index: {}]
  %s9 = inlined_call_operand.hbm [shape: f32[2,1,10], index: 9, kind: output, shape index: {}]
  %s10 = sld [smem:[#allocation0]]
  $region69: #{my_network_forward.1} parent=0
    _
  %s12 = ssub.s32 1, %s10
  %s13 = scalar_select 0, %s12, %s10
  $region1: #{my_network_forward.1} parent=0
    #allocation2 [shape = 'u8[1024]{0}', space=vmem, size = 0x400, scoped, tag = 'output window, operand 0']
    #allocation3 [shape = 's32[2]{0}', space=sflag, size = 0x8, scoped, tag = 'scoped memory for my_network_forward.1']
    %14 = vsyncpa [#allocation3], 0
    %s15 = scalar_lea.sflag [#allocation3], 1
    %16 = vsyncpa %s15, 0
    loop: start=0, step=1, limit=4
    $region2: #{my_network_forward.1} parent=1 // loop_pre_header
      _
    $region3: #{my_network_forward.1} parent=1 // loop_header
      %s18 = sphi 0, %s22
      %p19 = scmp.ge.s32.totalorder %s18, 4
      %s28 = sphi 0, %s30
      %s31 = sphi 0, %s28
      %s32 = sphi 0, %s31
      %s48 = sphi 0, %s32
      %s52 = sphi 0, %s52
      %s54 = sphi 0, %s52
      %s55 = sphi 0, %s54
      %s69 = sphi 0, %s55
      %s73 = sphi 0, %s73
      %s75 = sphi 0, %s73
      %s76 = sphi 0, %s75
      %s90 = sphi 0, %s76
      %s94 = sphi 0, %s94
      %s96 = sphi 0, %s94
      %s97 = sphi 0, %s96
      %s111 = sphi 0, %s97
      %s115 = sphi 0, %s115
      %s117 = sphi 0, %s115
      %s118 = sphi 0, %s117
      %s132 = sphi 0, %s118
      %s136 = sphi 0, %s136
      %s138 = sphi 0, %s136
      %s139 = sphi 0, %s138
      %s153 = sphi 0, %s139
      %s157 = sphi 0, %s157
      %s159 = sphi 0, %s157
      %s160 = sphi 0, %s159
      %s174 = sphi 0, %s160
      %s178 = sphi 0, %s178
      %s180 = sphi 0, %s178
      %s181 = sphi 0, %s180
      %s195 = sphi 0, %s181
      %s199 = sphi 0, %s199
      %s201 = sphi 0, %s199
      %s202 = sphi 0, %s201
      %s216 = sphi 0, %s202
      %s222 = sphi 0, %s224
      %s225 = sphi 0, %s222
      %s226 = sphi 0, %s225
      %s242 = sphi 0, %s226
    $region4: #{my_network_forward.1} parent=1 // loop_header_branch
      %21 = sbr.rel (%p19) target = $region8
    $region5: #{my_network_forward.1} parent=1 // loop_body
      %s23 = ssub.s32 %s18, 1
      %s24 = ssub.s32 %s18, 2
      %s25 = sadd.s32 %s18, 1
      %s26 = ssub.s32 %s18, %s25
      %p27 = scmp.eq.s32.totalorder %s26, 0
      %s29 = sadd.s32 %s28, 1
      %s30 = scalar_select %p27, %s28, %s29
      %p33 = pneg %p27
      %p34 = scmp.eq.s32.totalorder %s18, 1
      %p35 = por %p33, %p34
      %p36 = scmp.ne.s32.totalorder %s28, %s31
      %p37 = scmp.eq.s32.totalorder %s18, 0
      %p38 = por %p36, %p37
      %p39 = scmp.ne.s32.totalorder %s28, %s31
      %p40 = scmp.eq.s32.totalorder %s23, 1
      %p41 = por %p39, %p40
      %p42 = scmp.ne.s32.totalorder %s31, %s32
      %p43 = scmp.eq.s32.totalorder %s23, 0
      %p44 = por %p42, %p43
      %p45 = scmp.ne.s32.totalorder %s31, %s32
      %p46 = scmp.eq.s32.totalorder %s24, 1
      %p47 = por %p45, %p46
      %p49 = scmp.ne.s32.totalorder %s32, %s48
      %p50 = scmp.eq.s32.totalorder %s24, 0
      %p51 = por %p49, %p50
      %s53 = sadd.s32 %s52, 1
      %p56 = scmp.eq.s32.totalorder %s18, 1
      %p57 = scmp.ne.s32.totalorder %s52, %s54
      %p58 = scmp.eq.s32.totalorder %s18, 0
      %p59 = por %p57, %p58
      %p60 = scmp.ne.s32.totalorder %s52, %s54
      %p61 = scmp.eq.s32.totalorder %s23, 1
      %p62 = por %p60, %p61
      %p63 = scmp.ne.s32.totalorder %s54, %s55
      %p64 = scmp.eq.s32.totalorder %s23, 0
      %p65 = por %p63, %p64
      %p66 = scmp.ne.s32.totalorder %s54, %s55
      %p67 = scmp.eq.s32.totalorder %s24, 1
      %p68 = por %p66, %p67
      %p70 = scmp.ne.s32.totalorder %s55, %s69
      %p71 = scmp.eq.s32.totalorder %s24, 0
      %p72 = por %p70, %p71
      %s74 = sadd.s32 %s73, 1
      %p77 = scmp.eq.s32.totalorder %s18, 1
      %p78 = scmp.ne.s32.totalorder %s73, %s75
      %p79 = scmp.eq.s32.totalorder %s18, 0
      %p80 = por %p78, %p79
      %p81 = scmp.ne.s32.totalorder %s73, %s75
      %p82 = scmp.eq.s32.totalorder %s23, 1
      %p83 = por %p81, %p82
      %p84 = scmp.ne.s32.totalorder %s75, %s76
      %p85 = scmp.eq.s32.totalorder %s23, 0
      %p86 = por %p84, %p85
      %p87 = scmp.ne.s32.totalorder %s75, %s76
      %p88 = scmp.eq.s32.totalorder %s24, 1
      %p89 = por %p87, %p88
      %p91 = scmp.ne.s32.totalorder %s76, %s90
      %p92 = scmp.eq.s32.totalorder %s24, 0
      %p93 = por %p91, %p92
      %s95 = sadd.s32 %s94, 1
      %p98 = scmp.eq.s32.totalorder %s18, 1
      %p99 = scmp.ne.s32.totalorder %s94, %s96
      %p100 = scmp.eq.s32.totalorder %s18, 0
      %p101 = por %p99, %p100
      %p102 = scmp.ne.s32.totalorder %s94, %s96
      %p103 = scmp.eq.s32.totalorder %s23, 1
      %p104 = por %p102, %p103
      %p105 = scmp.ne.s32.totalorder %s96, %s97
      %p106 = scmp.eq.s32.totalorder %s23, 0
      %p107 = por %p105, %p106
      %p108 = scmp.ne.s32.totalorder %s96, %s97
      %p109 = scmp.eq.s32.totalorder %s24, 1
      %p110 = por %p108, %p109
      %p112 = scmp.ne.s32.totalorder %s97, %s111
      %p113 = scmp.eq.s32.totalorder %s24, 0
      %p114 = por %p112, %p113
      %s116 = sadd.s32 %s115, 1
      %p119 = scmp.eq.s32.totalorder %s18, 1
      %p120 = scmp.ne.s32.totalorder %s115, %s117
      %p121 = scmp.eq.s32.totalorder %s18, 0
      %p122 = por %p120, %p121
      %p123 = scmp.ne.s32.totalorder %s115, %s117
      %p124 = scmp.eq.s32.totalorder %s23, 1
      %p125 = por %p123, %p124
      %p126 = scmp.ne.s32.totalorder %s117, %s118
      %p127 = scmp.eq.s32.totalorder %s23, 0
      %p128 = por %p126, %p127
      %p129 = scmp.ne.s32.totalorder %s117, %s118
      %p130 = scmp.eq.s32.totalorder %s24, 1
      %p131 = por %p129, %p130
      %p133 = scmp.ne.s32.totalorder %s118, %s132
      %p134 = scmp.eq.s32.totalorder %s24, 0
      %p135 = por %p133, %p134
      %s137 = sadd.s32 %s136, 1
      %p140 = scmp.eq.s32.totalorder %s18, 1
      %p141 = scmp.ne.s32.totalorder %s136, %s138
      %p142 = scmp.eq.s32.totalorder %s18, 0
      %p143 = por %p141, %p142
      %p144 = scmp.ne.s32.totalorder %s136, %s138
      %p145 = scmp.eq.s32.totalorder %s23, 1
      %p146 = por %p144, %p145
      %p147 = scmp.ne.s32.totalorder %s138, %s139
      %p148 = scmp.eq.s32.totalorder %s23, 0
      %p149 = por %p147, %p148
      %p150 = scmp.ne.s32.totalorder %s138, %s139
      %p151 = scmp.eq.s32.totalorder %s24, 1
      %p152 = por %p150, %p151
      %p154 = scmp.ne.s32.totalorder %s139, %s153
      %p155 = scmp.eq.s32.totalorder %s24, 0
      %p156 = por %p154, %p155
      %s158 = sadd.s32 %s157, 1
      %p161 = scmp.eq.s32.totalorder %s18, 1
      %p162 = scmp.ne.s32.totalorder %s157, %s159
      %p163 = scmp.eq.s32.totalorder %s18, 0
      %p164 = por %p162, %p163
      %p165 = scmp.ne.s32.totalorder %s157, %s159
      %p166 = scmp.eq.s32.totalorder %s23, 1
      %p167 = por %p165, %p166
      %p168 = scmp.ne.s32.totalorder %s159, %s160
      %p169 = scmp.eq.s32.totalorder %s23, 0
      %p170 = por %p168, %p169
      %p171 = scmp.ne.s32.totalorder %s159, %s160
      %p172 = scmp.eq.s32.totalorder %s24, 1
      %p173 = por %p171, %p172
      %p175 = scmp.ne.s32.totalorder %s160, %s174
      %p176 = scmp.eq.s32.totalorder %s24, 0
      %p177 = por %p175, %p176
      %s179 = sadd.s32 %s178, 1
      %p182 = scmp.eq.s32.totalorder %s18, 1
      %p183 = scmp.ne.s32.totalorder %s178, %s180
      %p184 = scmp.eq.s32.totalorder %s18, 0
      %p185 = por %p183, %p184
      %p186 = scmp.ne.s32.totalorder %s178, %s180
      %p187 = scmp.eq.s32.totalorder %s23, 1
      %p188 = por %p186, %p187
      %p189 = scmp.ne.s32.totalorder %s180, %s181
      %p190 = scmp.eq.s32.totalorder %s23, 0
      %p191 = por %p189, %p190
      %p192 = scmp.ne.s32.totalorder %s180, %s181
      %p193 = scmp.eq.s32.totalorder %s24, 1
      %p194 = por %p192, %p193
      %p196 = scmp.ne.s32.totalorder %s181, %s195
      %p197 = scmp.eq.s32.totalorder %s24, 0
      %p198 = por %p196, %p197
      %s200 = sadd.s32 %s199, 1
      %p203 = scmp.eq.s32.totalorder %s18, 1
      %p204 = scmp.ne.s32.totalorder %s199, %s201
      %p205 = scmp.eq.s32.totalorder %s18, 0
      %p206 = por %p204, %p205
      %p207 = scmp.ne.s32.totalorder %s199, %s201
      %p208 = scmp.eq.s32.totalorder %s23, 1
      %p209 = por %p207, %p208
      %p210 = scmp.ne.s32.totalorder %s201, %s202
      %p211 = scmp.eq.s32.totalorder %s23, 0
      %p212 = por %p210, %p211
      %p213 = scmp.ne.s32.totalorder %s201, %s202
      %p214 = scmp.eq.s32.totalorder %s24, 1
      %p215 = por %p213, %p214
      %p217 = scmp.ne.s32.totalorder %s202, %s216
      %p218 = scmp.eq.s32.totalorder %s24, 0
      %p219 = por %p217, %p218
      %s220 = ssub.s32 %s18, %s25
      %p221 = scmp.eq.s32.totalorder %s220, 0
      %s223 = sadd.s32 %s222, 1
      %s224 = scalar_select %p221, %s222, %s223
      %p227 = pneg %p221
      %p228 = scmp.eq.s32.totalorder %s18, 1
      %p229 = por %p227, %p228
      %p230 = scmp.ne.s32.totalorder %s222, %s225
      %p231 = scmp.eq.s32.totalorder %s18, 0
      %p232 = por %p230, %p231
      %p233 = scmp.ne.s32.totalorder %s222, %s225
      %p234 = scmp.eq.s32.totalorder %s23, 1
      %p235 = por %p233, %p234
      %p236 = scmp.ne.s32.totalorder %s225, %s226
      %p237 = scmp.eq.s32.totalorder %s23, 0
      %p238 = por %p236, %p237
      %p239 = scmp.ne.s32.totalorder %s225, %s226
      %p240 = scmp.eq.s32.totalorder %s24, 1
      %p241 = por %p239, %p240
      %p243 = scmp.ne.s32.totalorder %s226, %s242
      %p244 = scmp.eq.s32.totalorder %s24, 0
      %p245 = por %p243, %p244
      %p246 = scmp.le.s32.totalorder 1, %s18
      %p247 = scmp.lt.s32.totalorder %s18, 3
      %p248 = pnand %p246, %p247
      %p249 = pneg %p248
      // Predicated region
      $region9: #{my_network_forward.1} parent=5 // pred_check
        _
      $region10: #{my_network_forward.1} parent=5 // pred_check_branch
        %251 = sbr.rel (%p248) target = $region12
      $region11: #{my_network_forward.1} parent=5 // pred_region
        %s252 = ssub.s32 %s18, 1
        // Predicated region
        $region13: #{my_network_forward.1} parent=11 // pred_check
          %p253 = pneg %p65
        $region14: #{my_network_forward.1} parent=11 // pred_check_branch
          %255 = sbr.rel (%p253) target = $region16
        $region15: #{my_network_forward.1} parent=11 // pred_region
          _
        $region16: #{my_network_forward.1} parent=11 // pred_fallthru
          _
        // Predicated region
        $region17: #{my_network_forward.1} parent=11 // pred_check
          %p256 = pneg %p86
        $region18: #{my_network_forward.1} parent=11 // pred_check_branch
          %258 = sbr.rel (%p256) target = $region20
        $region19: #{my_network_forward.1} parent=11 // pred_region
          _
        $region20: #{my_network_forward.1} parent=11 // pred_fallthru
          _
        // Predicated region
        $region21: #{my_network_forward.1} parent=11 // pred_check
          %p259 = pneg %p107
        $region22: #{my_network_forward.1} parent=11 // pred_check_branch
          %261 = sbr.rel (%p259) target = $region24
        $region23: #{my_network_forward.1} parent=11 // pred_region
          _
        $region24: #{my_network_forward.1} parent=11 // pred_fallthru
          _
        // Predicated region
        $region25: #{my_network_forward.1} parent=11 // pred_check
          %p262 = pneg %p128
        $region26: #{my_network_forward.1} parent=11 // pred_check_branch
          %264 = sbr.rel (%p262) target = $region28
        $region27: #{my_network_forward.1} parent=11 // pred_region
          _
        $region28: #{my_network_forward.1} parent=11 // pred_fallthru
          _
        // Predicated region
        $region29: #{my_network_forward.1} parent=11 // pred_check
          %p265 = pneg %p149
        $region30: #{my_network_forward.1} parent=11 // pred_check_branch
          %267 = sbr.rel (%p265) target = $region32
        $region31: #{my_network_forward.1} parent=11 // pred_region
          _
        $region32: #{my_network_forward.1} parent=11 // pred_fallthru
          _
        // Predicated region
        $region33: #{my_network_forward.1} parent=11 // pred_check
          %p268 = pneg %p170
        $region34: #{my_network_forward.1} parent=11 // pred_check_branch
          %270 = sbr.rel (%p268) target = $region36
        $region35: #{my_network_forward.1} parent=11 // pred_region
          _
        $region36: #{my_network_forward.1} parent=11 // pred_fallthru
          _
        // Predicated region
        $region37: #{my_network_forward.1} parent=11 // pred_check
          %p271 = pneg %p191
        $region38: #{my_network_forward.1} parent=11 // pred_check_branch
          %273 = sbr.rel (%p271) target = $region40
        $region39: #{my_network_forward.1} parent=11 // pred_region
          _
        $region40: #{my_network_forward.1} parent=11 // pred_fallthru
          _
        // Predicated region
        $region41: #{my_network_forward.1} parent=11 // pred_check
          %p274 = pneg %p212
        $region42: #{my_network_forward.1} parent=11 // pred_check_branch
          %276 = sbr.rel (%p274) target = $region44
        $region43: #{my_network_forward.1} parent=11 // pred_region
          _
        $region44: #{my_network_forward.1} parent=11 // pred_fallthru
          _
      $region12: #{my_network_forward.1} parent=5 // pred_fallthru
        _
      %p277 = scmp.lt.s32.totalorder %s18, 2
      // Predicated region
      $region45: #{my_network_forward.1} parent=5 // pred_check
        %p278 = pneg %p277
      $region46: #{my_network_forward.1} parent=5 // pred_check_branch
        %280 = sbr.rel (%p278) target = $region48
      $region47: #{my_network_forward.1} parent=5 // pred_region
        // Predicated region
        $region49: #{my_network_forward.1} parent=47 // pred_check
          %p281 = pneg %p38
        $region50: #{my_network_forward.1} parent=47 // pred_check_branch
          %283 = sbr.rel (%p281) target = $region52
        $region51: #{my_network_forward.1} parent=47 // pred_region
          %p284 = scmp.lt.s32.totalorder %s18, 1
          %s285 = scalar_select %p284, %s18, 1
          %s286 = smul.addr %s285, 4
          %s287 = smul.addr %s286, 4
          %s288 = scalar_lea.vmem %s0, %s287
        $region52: #{my_network_forward.1} parent=47 // pred_fallthru
          _
      $region48: #{my_network_forward.1} parent=5 // pred_fallthru
        _
      %p289 = scmp.le.s32.totalorder 1, %s18
      %p290 = scmp.lt.s32.totalorder %s18, 3
      %p291 = pnand %p289, %p290
      %p292 = pneg %p291
      // Predicated region
      $region53: #{my_network_forward.1} parent=5 // pred_check
        _
      $region54: #{my_network_forward.1} parent=5 // pred_check_branch
        %294 = sbr.rel (%p291) target = $region56
      $region55: #{my_network_forward.1} parent=5 // pred_region
        %s295 = ssub.s32 %s18, 1
        %p296 = scmp.lt.s32.totalorder %s23, 1
        %s297 = scalar_select %p296, %s23, 1
        %s298 = smul.addr %s297, 4
        %s299 = smul.addr %s298, 4
        %s300 = scalar_lea.vmem %s0, %s299
        %p301 = pneg %p44
        %p302 = pneg %p41
        %p303 = pneg %p65
        %p304 = pneg %p62
        %p305 = pneg %p86
        %p306 = pneg %p83
        %p307 = pneg %p107
        %p308 = pneg %p104
        %p309 = pneg %p128
        %p310 = pneg %p125
        %p311 = pneg %p149
        %p312 = pneg %p146
        %p313 = pneg %p170
        %p314 = pneg %p167
        %p315 = pneg %p191
        %p316 = pneg %p188
        %p317 = pneg %p212
        %p318 = pneg %p209
        %p319 = pneg %p238
        %p320 = pneg %p235
        %s321 = sand.u32 %s225, 1
        %s322 = scalar_lea.sflag [#allocation3], %s321
        %s323 = sand.u32 %s225, 1
        %s324 = scalar_lea.vmem [#allocation2], %s323
        %p325 = scmp.lt.s32.totalorder %s23, 1
        %s326 = scalar_select %p325, %s23, 1
        %s327 = smul.addr %s326, 4
        %s328 = smul.addr %s327, 4
        %s329 = scalar_lea.vmem %s0, %s328
        %v331 = vld [vmem:[%s1] sm:$0xff]
        %v332 = vld [vmem:[%s1 + $0x8] sm:$0xff]
        %v333 = vld [vmem:[%s1 + $0x10] sm:$0xff]
        %v334 = vld [vmem:[%s1 + $0x18] sm:$0x33]
        %s335 = scalar_lea.vmem %s1, 32
        %v336 = vld [vmem:[%s335] sm:$0xff]
        %v337 = vld [vmem:[%s335 + $0x8] sm:$0xff]
        %v338 = vld [vmem:[%s335 + $0x10] sm:$0xff]
        %v339 = vld [vmem:[%s335 + $0x18] sm:$0x33]
        %s340 = scalar_lea.vmem %s1, 64
        %v341 = vld [vmem:[%s340] sm:$0xff]
        %v342 = vld [vmem:[%s340 + $0x8] sm:$0xff]
        %v343 = vld [vmem:[%s340 + $0x10] sm:$0xff]
        %v344 = vld [vmem:[%s340 + $0x18] sm:$0x33]
        %s345 = scalar_lea.vmem %s1, 96
        %v346 = vld [vmem:[%s345] sm:$0xff]
        %v347 = vld [vmem:[%s345 + $0x8] sm:$0xff]
        %v348 = vld [vmem:[%s345 + $0x10] sm:$0xff]
        %v349 = vld [vmem:[%s345 + $0x18] sm:$0x33]
        %s350 = scalar_lea.vmem %s1, 128
        %v351 = vld [vmem:[%s350] sm:$0xff]
        %v352 = vld [vmem:[%s350 + $0x8] sm:$0xff]
        %v353 = vld [vmem:[%s350 + $0x10] sm:$0xff]
        %v354 = vld [vmem:[%s350 + $0x18] sm:$0x33]
        %v355 = vld [vmem:[%s2] sm:$0xff]
        %v356 = vld [vmem:[%s2 + $0x8] sm:$0xff]
        %v357 = vld [vmem:[%s2 + $0x10] sm:$0xff]
        %v358 = vld [vmem:[%s2 + $0x18] sm:$0xff]
        %v359 = vld [vmem:[%s2 + $0x20] sm:$0xff]
        %v360 = vld [vmem:[%s2 + $0x28] sm:$0xff]
        %v361 = vld [vmem:[%s2 + $0x30] sm:$0xff]
        %v362 = vld [vmem:[%s2 + $0x38] sm:$0xff]
        %v363 = vld [vmem:[%s2 + $0x40] sm:$0xff]
        %v364 = vld [vmem:[%s2 + $0x48] sm:$0xff]
        %v365 = vld [vmem:[%s2 + $0x50] sm:$0xff]
        %v366 = vld [vmem:[%s2 + $0x58] sm:$0xff]
        %v367 = vld [vmem:[%s2 + $0x60] sm:$0xff]
        %v368 = vld [vmem:[%s2 + $0x68] sm:$0xff]
        %v369 = vld [vmem:[%s2 + $0x70] sm:$0xff]
        %s370 = scalar_lea.vmem %s2, 120
        %v371 = vld [vmem:[%s370] sm:$0xff]
        %v372 = vld [vmem:[%s370 + $0x8] sm:$0xff]
        %v373 = vld [vmem:[%s370 + $0x10] sm:$0xff]
        %v374 = vld [vmem:[%s370 + $0x18] sm:$0xff]
        %v375 = vld [vmem:[%s370 + $0x20] sm:$0xff]
        %v376 = vld [vmem:[%s370 + $0x28] sm:$0xff]
        %v377 = vld [vmem:[%s370 + $0x30] sm:$0xff]
        %v378 = vld [vmem:[%s370 + $0x38] sm:$0xff]
        %v379 = vld [vmem:[%s370 + $0x40] sm:$0xff]
        %v380 = vld [vmem:[%s370 + $0x48] sm:$0xff]
        %v381 = vld [vmem:[%s370 + $0x50] sm:$0xff]
        %v382 = vld [vmem:[%s370 + $0x58] sm:$0xff]
        %v383 = vld [vmem:[%s370 + $0x60] sm:$0xff]
        %v384 = vld [vmem:[%s370 + $0x68] sm:$0xff]
        %v385 = vld [vmem:[%s370 + $0x70] sm:$0xff]
        %s386 = scalar_lea.vmem %s2, 240
        %v387 = vld [vmem:[%s386] sm:$0xff]
        %v388 = vld [vmem:[%s386 + $0x8] sm:$0xff]
        %v389 = vld [vmem:[%s386 + $0x10] sm:$0xff]
        %v390 = vld [vmem:[%s386 + $0x18] sm:$0xff]
        %v391 = vld [vmem:[%s386 + $0x20] sm:$0xff]
        %v392 = vld [vmem:[%s386 + $0x28] sm:$0xff]
        %v393 = vld [vmem:[%s386 + $0x30] sm:$0xff]
        %v394 = vld [vmem:[%s386 + $0x38] sm:$0xff]
        %v395 = vld [vmem:[%s386 + $0x40] sm:$0xff]
        %v396 = vld [vmem:[%s386 + $0x48] sm:$0xff]
        %v397 = vld [vmem:[%s386 + $0x50] sm:$0xff]
        %v398 = vld [vmem:[%s386 + $0x58] sm:$0xff]
        %v399 = vld [vmem:[%s386 + $0x60] sm:$0xff]
        %v400 = vld [vmem:[%s386 + $0x68] sm:$0xff]
        %v401 = vld [vmem:[%s386 + $0x70] sm:$0xff]
        %s402 = scalar_lea.vmem %s2, 360
        %v403 = vld [vmem:[%s402] sm:$0xff]
        %v404 = vld [vmem:[%s402 + $0x8] sm:$0xff]
        %v405 = vld [vmem:[%s402 + $0x10] sm:$0xff]
        %v406 = vld [vmem:[%s402 + $0x18] sm:$0xff]
        %v407 = vld [vmem:[%s402 + $0x20] sm:$0xff]
        %v408 = vld [vmem:[%s402 + $0x28] sm:$0xff]
        %v409 = vld [vmem:[%s402 + $0x30] sm:$0xff]
        %v410 = vld [vmem:[%s402 + $0x38] sm:$0xff]
        %v411 = vld [vmem:[%s402 + $0x40] sm:$0xff]
        %v412 = vld [vmem:[%s402 + $0x48] sm:$0xff]
        %v413 = vld [vmem:[%s402 + $0x50] sm:$0xff]
        %v414 = vld [vmem:[%s402 + $0x58] sm:$0xff]
        %v415 = vld [vmem:[%s402 + $0x60] sm:$0xff]
        %v416 = vld [vmem:[%s402 + $0x68] sm:$0xff]
        %v417 = vld [vmem:[%s402 + $0x70] sm:$0xff]
        %s418 = scalar_lea.vmem %s2, 480
        %v419 = vld [vmem:[%s418] sm:$0xff]
        %v420 = vld [vmem:[%s418 + $0x8] sm:$0xff]
        %v421 = vld [vmem:[%s418 + $0x10] sm:$0xff]
        %v422 = vld [vmem:[%s418 + $0x18] sm:$0xff]
        %v423 = vld [vmem:[%s418 + $0x20] sm:$0xff]
        %v424 = vld [vmem:[%s418 + $0x28] sm:$0xff]
        %v425 = vld [vmem:[%s418 + $0x30] sm:$0xff]
        %v426 = vld [vmem:[%s418 + $0x38] sm:$0xff]
        %v427 = vld [vmem:[%s418 + $0x40] sm:$0xff]
        %v428 = vld [vmem:[%s418 + $0x48] sm:$0xff]
        %v429 = vld [vmem:[%s418 + $0x50] sm:$0xff]
        %v430 = vld [vmem:[%s418 + $0x58] sm:$0xff]
        %v431 = vld [vmem:[%s418 + $0x60] sm:$0xff]
        %v432 = vld [vmem:[%s418 + $0x68] sm:$0xff]
        %v433 = vld [vmem:[%s418 + $0x70] sm:$0xff]
        %v434 = vld [vmem:[%s329] sm:$0x7]
        %s435 = scalar_lea.vmem %s329, 4
        %v436 = vld [vmem:[%s435] sm:$0x7]
        %v441 = vunpack.c.l.b16 %v336
        %v442 = vunpack.c.h.b16 %v336
        %v443 = vunpack.c.l.b16 %v337
        %v444 = vunpack.c.h.b16 %v337
        %v445 = vunpack.c.l.b16 %v338
        %v446 = vunpack.c.h.b16 %v338
        %v447 = vunpack.c.l.b16 %v339
        %v448 = vunpack.c.h.b16 %v339
        %v449 = vpack.c.b16 %v443, %v441
        %v450 = vpack.c.b16 %v444, %v442
        %v451 = vpack.c.b16 %v447, %v445
        %v452 = vpack.c.b16 %v448, %v446
        %vm455 = vcmask 228352
        %v457 = vsel %vm455, %v436, 0
        %vm459 = vcmask 1045504
        %v461 = vsel %vm459, %v451, 0
        %v464 = vsel %vm459, %v452, 0
        %466 = vmatprep.subr.bf16.mxu0 %v450
        %467 = vmatpush1.bf16.msra.mxu0 %v449
        %468 = vmatprep.subr.bf16.mxu0 %v464
        %469 = vmatpush1.bf16.msra.mxu0 %v461
        %470 = vmatprep.subr.bf16.mxu0 0
        %471 = vmatpush1.bf16.msra.mxu0 0
        %472 = vmatprep.subr.bf16.mxu0 0
        %473 = vmatpush1.bf16.msra.mxu0 0
        %474 = vmatprep.subr.bf16.mxu0 0
        %475 = vmatpush1.bf16.msra.mxu0 0
        %476 = vmatprep.subr.bf16.mxu0 0
        %477 = vmatpush1.bf16.msra.mxu0 0
        %478 = vmatprep.subr.bf16.mxu0 0
        %479 = vmatpush1.bf16.msra.mxu0 0
        %480 = vmatprep.subr.bf16.mxu0 0
        %481 = vmatpush1.bf16.msra.mxu0 0
        %482 = vmatprep.subr.bf16.mxu0 0
        %483 = vmatpush1.bf16.msra.mxu0 0
        %484 = vmatprep.subr.bf16.mxu0 0
        %485 = vmatpush1.bf16.msra.mxu0 0
        %486 = vmatprep.subr.bf16.mxu0 0
        %487 = vmatpush1.bf16.msra.mxu0 0
        %488 = vmatprep.subr.bf16.mxu0 0
        %489 = vmatpush1.bf16.msra.mxu0 0
        %490 = vmatprep.subr.bf16.mxu0 0
        %491 = vmatpush1.bf16.msra.mxu0 0
        %492 = vmatprep.subr.bf16.mxu0 0
        %493 = vmatpush1.bf16.msra.mxu0 0
        %494 = vmatprep.subr.bf16.mxu0 0
        %495 = vmatpush1.bf16.msra.mxu0 0
        %496 = vmatprep.subr.bf16.mxu0 0
        %497 = vmatpush1.bf16.msra.mxu0 0
        %498 = vmatprep.mubr.bf16.mxu0 0
        %499 = vmatmul.mubr.bf16.gmra.mrb[0].mxu0 %v457
        %v500 = vpop.f32.mrb[0].mxu0
        %v501 = vadd.f32 0.0, %v500
        %v502 = vpop.f32.mrb[0].mxu0
        %v503 = vadd.f32 0.0, %v502
        %v504 = vpop.f32.mrb[0].mxu0
        %v505 = vpop.f32.mrb[0].mxu0
        %506 = vdwg.mxu0
        %v511 = vunpack.c.l.b16 %v331
        %v512 = vunpack.c.h.b16 %v331
        %v513 = vunpack.c.l.b16 %v332
        %v514 = vunpack.c.h.b16 %v332
        %v515 = vunpack.c.l.b16 %v333
        %v516 = vunpack.c.h.b16 %v333
        %v517 = vunpack.c.l.b16 %v334
        %v518 = vunpack.c.h.b16 %v334
        %v519 = vpack.c.b16 %v513, %v511
        %v520 = vpack.c.b16 %v514, %v512
        %v521 = vpack.c.b16 %v517, %v515
        %v522 = vpack.c.b16 %v518, %v516
        %v526 = vsel %vm455, %v434, 0
        %v529 = vsel %vm459, %v521, 0
        %v532 = vsel %vm459, %v522, 0
        %534 = vmatprep.subr.bf16.mxu0 %v520
        %535 = vmatpush1.bf16.msra.mxu0 %v519
        %536 = vmatprep.subr.bf16.mxu0 %v532
        %537 = vmatpush1.bf16.msra.mxu0 %v529
        %538 = vmatprep.subr.bf16.mxu0 0
        %539 = vmatpush1.bf16.msra.mxu0 0
        %540 = vmatprep.subr.bf16.mxu0 0
        %541 = vmatpush1.bf16.msra.mxu0 0
        %542 = vmatprep.subr.bf16.mxu0 0
        %543 = vmatpush1.bf16.msra.mxu0 0
        %544 = vmatprep.subr.bf16.mxu0 0
        %545 = vmatpush1.bf16.msra.mxu0 0
        %546 = vmatprep.subr.bf16.mxu0 0
        %547 = vmatpush1.bf16.msra.mxu0 0
        %548 = vmatprep.subr.bf16.mxu0 0
        %549 = vmatpush1.bf16.msra.mxu0 0
        %550 = vmatprep.subr.bf16.mxu0 0
        %551 = vmatpush1.bf16.msra.mxu0 0
        %552 = vmatprep.subr.bf16.mxu0 0
        %553 = vmatpush1.bf16.msra.mxu0 0
        %554 = vmatprep.subr.bf16.mxu0 0
        %555 = vmatpush1.bf16.msra.mxu0 0
        %556 = vmatprep.subr.bf16.mxu0 0
        %557 = vmatpush1.bf16.msra.mxu0 0
        %558 = vmatprep.subr.bf16.mxu0 0
        %559 = vmatpush1.bf16.msra.mxu0 0
        %560 = vmatprep.subr.bf16.mxu0 0
        %561 = vmatpush1.bf16.msra.mxu0 0
        %562 = vmatprep.subr.bf16.mxu0 0
        %563 = vmatpush1.bf16.msra.mxu0 0
        %564 = vmatprep.subr.bf16.mxu0 0
        %565 = vmatpush1.bf16.msra.mxu0 0
        %566 = vmatprep.mubr.bf16.mxu0 0
        %567 = vmatmul.mubr.bf16.gmra.mrb[0].mxu0 %v526
        %v568 = vpop.f32.mrb[0].mxu0
        %v569 = vadd.f32 %v501, %v568
        %v570 = vpop.f32.mrb[0].mxu0
        %v571 = vadd.f32 %v503, %v570
        %v572 = vpop.f32.mrb[0].mxu0
        %v573 = vpop.f32.mrb[0].mxu0
        %574 = vdwg.mxu0
        %s575 = scalar_lea.vmem %s329, 8
        %v576 = vld [vmem:[%s575] sm:$0x7]
        %v581 = vunpack.c.l.b16 %v341
        %v582 = vunpack.c.h.b16 %v341
        %v583 = vunpack.c.l.b16 %v342
        %v584 = vunpack.c.h.b16 %v342
        %v585 = vunpack.c.l.b16 %v343
        %v586 = vunpack.c.h.b16 %v343
        %v587 = vunpack.c.l.b16 %v344
        %v588 = vunpack.c.h.b16 %v344
        %v589 = vpack.c.b16 %v583, %v581
        %v590 = vpack.c.b16 %v584, %v582
        %v591 = vpack.c.b16 %v587, %v585
        %v592 = vpack.c.b16 %v588, %v586
        %v596 = vsel %vm455, %v576, 0
        %v599 = vsel %vm459, %v591, 0
        %v602 = vsel %vm459, %v592, 0
        %604 = vmatprep.subr.bf16.mxu0 %v590
        %605 = vmatpush1.bf16.msra.mxu0 %v589
        %606 = vmatprep.subr.bf16.mxu0 %v602
        %607 = vmatpush1.bf16.msra.mxu0 %v599
        %608 = vmatprep.subr.bf16.mxu0 0
        %609 = vmatpush1.bf16.msra.mxu0 0
        %610 = vmatprep.subr.bf16.mxu0 0
        %611 = vmatpush1.bf16.msra.mxu0 0
        %612 = vmatprep.subr.bf16.mxu0 0
        %613 = vmatpush1.bf16.msra.mxu0 0
        %614 = vmatprep.subr.bf16.mxu0 0
        %615 = vmatpush1.bf16.msra.mxu0 0
        %616 = vmatprep.subr.bf16.mxu0 0
        %617 = vmatpush1.bf16.msra.mxu0 0
        %618 = vmatprep.subr.bf16.mxu0 0
        %619 = vmatpush1.bf16.msra.mxu0 0
        %620 = vmatprep.subr.bf16.mxu0 0
        %621 = vmatpush1.bf16.msra.mxu0 0
        %622 = vmatprep.subr.bf16.mxu0 0
        %623 = vmatpush1.bf16.msra.mxu0 0
        %624 = vmatprep.subr.bf16.mxu0 0
        %625 = vmatpush1.bf16.msra.mxu0 0
        %626 = vmatprep.subr.bf16.mxu0 0
        %627 = vmatpush1.bf16.msra.mxu0 0
        %628 = vmatprep.subr.bf16.mxu0 0
        %629 = vmatpush1.bf16.msra.mxu0 0
        %630 = vmatprep.subr.bf16.mxu0 0
        %631 = vmatpush1.bf16.msra.mxu0 0
        %632 = vmatprep.subr.bf16.mxu0 0
        %633 = vmatpush1.bf16.msra.mxu0 0
        %634 = vmatprep.subr.bf16.mxu0 0
        %635 = vmatpush1.bf16.msra.mxu0 0
        %636 = vmatprep.mubr.bf16.mxu0 0
        %637 = vmatmul.mubr.bf16.gmra.mrb[0].mxu0 %v596
        %v638 = vpop.f32.mrb[0].mxu0
        %v639 = vadd.f32 0.0, %v638
        %v640 = vpop.f32.mrb[0].mxu0
        %v641 = vadd.f32 0.0, %v640
        %v642 = vpop.f32.mrb[0].mxu0
        %v643 = vpop.f32.mrb[0].mxu0
        %644 = vdwg.mxu0
        %v645 = vadd.f32 %v569, %v639
        %v646 = vadd.f32 %v571, %v641
        %s647 = scalar_lea.vmem %s329, 12
        %v648 = vld [vmem:[%s647] sm:$0x7]
        %v653 = vunpack.c.l.b16 %v346
        %v654 = vunpack.c.h.b16 %v346
        %v655 = vunpack.c.l.b16 %v347
        %v656 = vunpack.c.h.b16 %v347
        %v657 = vunpack.c.l.b16 %v348
        %v658 = vunpack.c.h.b16 %v348
        %v659 = vunpack.c.l.b16 %v349
        %v660 = vunpack.c.h.b16 %v349
        %v661 = vpack.c.b16 %v655, %v653
        %v662 = vpack.c.b16 %v656, %v654
        %v663 = vpack.c.b16 %v659, %v657
        %v664 = vpack.c.b16 %v660, %v658
        %v668 = vsel %vm455, %v648, 0
        %v671 = vsel %vm459, %v663, 0
        %v674 = vsel %vm459, %v664, 0
        %676 = vmatprep.subr.bf16.mxu0 %v662
        %677 = vmatpush1.bf16.msra.mxu0 %v661
        %678 = vmatprep.subr.bf16.mxu0 %v674
        %679 = vmatpush1.bf16.msra.mxu0 %v671
        %680 = vmatprep.subr.bf16.mxu0 0
        %681 = vmatpush1.bf16.msra.mxu0 0
        %682 = vmatprep.subr.bf16.mxu0 0
        %683 = vmatpush1.bf16.msra.mxu0 0
        %684 = vmatprep.subr.bf16.mxu0 0
        %685 = vmatpush1.bf16.msra.mxu0 0
        %686 = vmatprep.subr.bf16.mxu0 0
        %687 = vmatpush1.bf16.msra.mxu0 0
        %688 = vmatprep.subr.bf16.mxu0 0
        %689 = vmatpush1.bf16.msra.mxu0 0
        %690 = vmatprep.subr.bf16.mxu0 0
        %691 = vmatpush1.bf16.msra.mxu0 0
        %692 = vmatprep.subr.bf16.mxu0 0
        %693 = vmatpush1.bf16.msra.mxu0 0
        %694 = vmatprep.subr.bf16.mxu0 0
        %695 = vmatpush1.bf16.msra.mxu0 0
        %696 = vmatprep.subr.bf16.mxu0 0
        %697 = vmatpush1.bf16.msra.mxu0 0
        %698 = vmatprep.subr.bf16.mxu0 0
        %699 = vmatpush1.bf16.msra.mxu0 0
        %700 = vmatprep.subr.bf16.mxu0 0
        %701 = vmatpush1.bf16.msra.mxu0 0
        %702 = vmatprep.subr.bf16.mxu0 0
        %703 = vmatpush1.bf16.msra.mxu0 0
        %704 = vmatprep.subr.bf16.mxu0 0
        %705 = vmatpush1.bf16.msra.mxu0 0
        %706 = vmatprep.subr.bf16.mxu0 0
        %707 = vmatpush1.bf16.msra.mxu0 0
        %708 = vmatprep.mubr.bf16.mxu0 0
        %709 = vmatmul.mubr.bf16.gmra.mrb[0].mxu0 %v668
        %v710 = vpop.f32.mrb[0].mxu0
        %v711 = vadd.f32 0.0, %v710
        %v712 = vpop.f32.mrb[0].mxu0
        %v713 = vadd.f32 0.0, %v712
        %v714 = vpop.f32.mrb[0].mxu0
        %v715 = vpop.f32.mrb[0].mxu0
        %716 = vdwg.mxu0
        %v717 = vadd.f32 %v645, %v711
        %v718 = vadd.f32 %v646, %v713
        %v719 = vld [vmem:[%s329] sm:$0xf]
        %v721 = vunpack.c.l.b16 %v719
        %v722 = vpack.c.b16 %v721, %v721
        %v724 = vshrl.u32 %v722, 16
        %v726 = vshll.u32 %v722, 16
        %v728 = vrot.slane %v726, 1
        %v729 = vor.u32 %v724, %v728
        %v734 = vunpack.c.l.b16 %v351
        %v735 = vunpack.c.h.b16 %v351
        %v736 = vunpack.c.l.b16 %v352
        %v737 = vunpack.c.h.b16 %v352
        %v738 = vunpack.c.l.b16 %v353
        %v739 = vunpack.c.h.b16 %v353
        %v740 = vunpack.c.l.b16 %v354
        %v741 = vunpack.c.h.b16 %v354
        %v742 = vpack.c.b16 %v736, %v734
        %v743 = vpack.c.b16 %v737, %v735
        %v744 = vpack.c.b16 %v740, %v738
        %v745 = vpack.c.b16 %v741, %v739
        %v749 = vsel %vm455, %v729, 0
        %v752 = vsel %vm459, %v744, 0
        %v755 = vsel %vm459, %v745, 0
        %757 = vmatprep.subr.bf16.mxu0 %v743
        %758 = vmatpush1.bf16.msra.mxu0 %v742
        %759 = vmatprep.subr.bf16.mxu0 %v755
        %760 = vmatpush1.bf16.msra.mxu0 %v752
        %761 = vmatprep.subr.bf16.mxu0 0
        %762 = vmatpush1.bf16.msra.mxu0 0
        %763 = vmatprep.subr.bf16.mxu0 0
        %764 = vmatpush1.bf16.msra.mxu0 0
        %765 = vmatprep.subr.bf16.mxu0 0
        %766 = vmatpush1.bf16.msra.mxu0 0
        %767 = vmatprep.subr.bf16.mxu0 0
        %768 = vmatpush1.bf16.msra.mxu0 0
        %769 = vmatprep.subr.bf16.mxu0 0
        %770 = vmatpush1.bf16.msra.mxu0 0
        %771 = vmatprep.subr.bf16.mxu0 0
        %772 = vmatpush1.bf16.msra.mxu0 0
        %773 = vmatprep.subr.bf16.mxu0 0
        %774 = vmatpush1.bf16.msra.mxu0 0
        %775 = vmatprep.subr.bf16.mxu0 0
        %776 = vmatpush1.bf16.msra.mxu0 0
        %777 = vmatprep.subr.bf16.mxu0 0
        %778 = vmatpush1.bf16.msra.mxu0 0
        %779 = vmatprep.subr.bf16.mxu0 0
        %780 = vmatpush1.bf16.msra.mxu0 0
        %781 = vmatprep.subr.bf16.mxu0 0
        %782 = vmatpush1.bf16.msra.mxu0 0
        %783 = vmatprep.subr.bf16.mxu0 0
        %784 = vmatpush1.bf16.msra.mxu0 0
        %785 = vmatprep.subr.bf16.mxu0 0
        %786 = vmatpush1.bf16.msra.mxu0 0
        %787 = vmatprep.subr.bf16.mxu0 0
        %788 = vmatpush1.bf16.msra.mxu0 0
        %789 = vmatprep.mubr.bf16.mxu0 0
        %790 = vmatmul.mubr.bf16.gmra.mrb[0].mxu0 %v749
        %v791 = vpop.f32.mrb[0].mxu0
        %v792 = vadd.f32 0.0, %v791
        %v793 = vpop.f32.mrb[0].mxu0
        %v794 = vadd.f32 0.0, %v793
        %v795 = vpop.f32.mrb[0].mxu0
        %v796 = vpop.f32.mrb[0].mxu0
        %797 = vdwg.mxu0
        %v798 = vadd.f32 %v717, %v792
        %v799 = vadd.f32 %v718, %v794
        %802 = vrot.lane.b32.xlu0 %v798, 8
        %v803 = vpop.permute.xlu0 %802
        %804 = vrot.lane.b32.xlu0 %v799, 8
        %v805 = vpop.permute.xlu0 %804
        %vm806 = vcmask 64512
        %v807 = vsel %vm806, %v803, %v805
        %v809 = vmax.f32 %v798, %v807
        %810 = vmatprep.subr.bf16.mxu0 %v450
        %811 = vmatpush1.bf16.msra.mxu0 %v449
        %812 = vmatprep.subr.bf16.mxu0 %v464
        %813 = vmatpush1.bf16.msra.mxu0 %v461
        %814 = vmatprep.subr.bf16.mxu0 0
        %815 = vmatpush1.bf16.msra.mxu0 0
        %816 = vmatprep.subr.bf16.mxu0 0
        %817 = vmatpush1.bf16.msra.mxu0 0
        %818 = vmatprep.subr.bf16.mxu0 0
        %819 = vmatpush1.bf16.msra.mxu0 0
        %820 = vmatprep.subr.bf16.mxu0 0
        %821 = vmatpush1.bf16.msra.mxu0 0
        %822 = vmatprep.subr.bf16.mxu0 0
        %823 = vmatpush1.bf16.msra.mxu0 0
        %824 = vmatprep.subr.bf16.mxu0 0
        %825 = vmatpush1.bf16.msra.mxu0 0
        %826 = vmatprep.subr.bf16.mxu0 0
        %827 = vmatpush1.bf16.msra.mxu0 0
        %828 = vmatprep.subr.bf16.mxu0 0
        %829 = vmatpush1.bf16.msra.mxu0 0
        %830 = vmatprep.subr.bf16.mxu0 0
        %831 = vmatpush1.bf16.msra.mxu0 0
        %832 = vmatprep.subr.bf16.mxu0 0
        %833 = vmatpush1.bf16.msra.mxu0 0
        %834 = vmatprep.subr.bf16.mxu0 0
        %835 = vmatpush1.bf16.msra.mxu0 0
        %836 = vmatprep.subr.bf16.mxu0 0
        %837 = vmatpush1.bf16.msra.mxu0 0
        %838 = vmatprep.subr.bf16.mxu0 0
        %839 = vmatpush1.bf16.msra.mxu0 0
        %840 = vmatprep.subr.bf16.mxu0 0
        %841 = vmatpush1.bf16.msra.mxu0 0
        %842 = vmatprep.mubr.bf16.mxu0 0
        %843 = vmatmul.mubr.bf16.gmra.mrb[0].mxu0 %v668
        %v844 = vpop.f32.mrb[0].mxu0
        %v845 = vadd.f32 0.0, %v844
        %v846 = vpop.f32.mrb[0].mxu0
        %v847 = vadd.f32 0.0, %v846
        %v848 = vpop.f32.mrb[0].mxu0
        %v849 = vpop.f32.mrb[0].mxu0
        %850 = vdwg.mxu0
        %851 = vmatprep.subr.bf16.mxu0 %v520
        %852 = vmatpush1.bf16.msra.mxu0 %v519
        %853 = vmatprep.subr.bf16.mxu0 %v532
        %854 = vmatpush1.bf16.msra.mxu0 %v529
        %855 = vmatprep.subr.bf16.mxu0 0
        %856 = vmatpush1.bf16.msra.mxu0 0
        %857 = vmatprep.subr.bf16.mxu0 0
        %858 = vmatpush1.bf16.msra.mxu0 0
        %859 = vmatprep.subr.bf16.mxu0 0
        %860 = vmatpush1.bf16.msra.mxu0 0
        %861 = vmatprep.subr.bf16.mxu0 0
        %862 = vmatpush1.bf16.msra.mxu0 0
        %863 = vmatprep.subr.bf16.mxu0 0
        %864 = vmatpush1.bf16.msra.mxu0 0
        %865 = vmatprep.subr.bf16.mxu0 0
        %866 = vmatpush1.bf16.msra.mxu0 0
        %867 = vmatprep.subr.bf16.mxu0 0
        %868 = vmatpush1.bf16.msra.mxu0 0
        %869 = vmatprep.subr.bf16.mxu0 0
        %870 = vmatpush1.bf16.msra.mxu0 0
        %871 = vmatprep.subr.bf16.mxu0 0
        %872 = vmatpush1.bf16.msra.mxu0 0
        %873 = vmatprep.subr.bf16.mxu0 0
        %874 = vmatpush1.bf16.msra.mxu0 0
        %875 = vmatprep.subr.bf16.mxu0 0
        %876 = vmatpush1.bf16.msra.mxu0 0
        %877 = vmatprep.subr.bf16.mxu0 0
        %878 = vmatpush1.bf16.msra.mxu0 0
        %879 = vmatprep.subr.bf16.mxu0 0
        %880 = vmatpush1.bf16.msra.mxu0 0
        %881 = vmatprep.subr.bf16.mxu0 0
        %882 = vmatpush1.bf16.msra.mxu0 0
        %883 = vmatprep.mubr.bf16.mxu0 0
        %884 = vmatmul.mubr.bf16.gmra.mrb[0].mxu0 %v596
        %v885 = vpop.f32.mrb[0].mxu0
        %v886 = vadd.f32 %v845, %v885
        %v887 = vpop.f32.mrb[0].mxu0
        %v888 = vadd.f32 %v847, %v887
        %v889 = vpop.f32.mrb[0].mxu0
        %v890 = vpop.f32.mrb[0].mxu0
        %891 = vdwg.mxu0
        %892 = vmatprep.subr.bf16.mxu0 %v590
        %893 = vmatpush1.bf16.msra.mxu0 %v589
        %894 = vmatprep.subr.bf16.mxu0 %v602
        %895 = vmatpush1.bf16.msra.mxu0 %v599
        %896 = vmatprep.subr.bf16.mxu0 0
        %897 = vmatpush1.bf16.msra.mxu0 0
        %898 = vmatprep.subr.bf16.mxu0 0
        %899 = vmatpush1.bf16.msra.mxu0 0
        %900 = vmatprep.subr.bf16.mxu0 0
        %901 = vmatpush1.bf16.msra.mxu0 0
        %902 = vmatprep.subr.bf16.mxu0 0
        %903 = vmatpush1.bf16.msra.mxu0 0
        %904 = vmatprep.subr.bf16.mxu0 0
        %905 = vmatpush1.bf16.msra.mxu0 0
        %906 = vmatprep.subr.bf16.mxu0 0
        %907 = vmatpush1.bf16.msra.mxu0 0
        %908 = vmatprep.subr.bf16.mxu0 0
        %909 = vmatpush1.bf16.msra.mxu0 0
        %910 = vmatprep.subr.bf16.mxu0 0
        %911 = vmatpush1.bf16.msra.mxu0 0
        %912 = vmatprep.subr.bf16.mxu0 0
        %913 = vmatpush1.bf16.msra.mxu0 0
        %914 = vmatprep.subr.bf16.mxu0 0
        %915 = vmatpush1.bf16.msra.mxu0 0
        %916 = vmatprep.subr.bf16.mxu0 0
        %917 = vmatpush1.bf16.msra.mxu0 0
        %918 = vmatprep.subr.bf16.mxu0 0
        %919 = vmatpush1.bf16.msra.mxu0 0
        %920 = vmatprep.subr.bf16.mxu0 0
        %921 = vmatpush1.bf16.msra.mxu0 0
        %922 = vmatprep.subr.bf16.mxu0 0
        %923 = vmatpush1.bf16.msra.mxu0 0
        %924 = vmatprep.mubr.bf16.mxu0 0
        %925 = vmatmul.mubr.bf16.gmra.mrb[0].mxu0 %v749
        %v926 = vpop.f32.mrb[0].mxu0
        %v927 = vadd.f32 0.0, %v926
        %v928 = vpop.f32.mrb[0].mxu0
        %v929 = vadd.f32 0.0, %v928
        %v930 = vpop.f32.mrb[0].mxu0
        %v931 = vpop.f32.mrb[0].mxu0
        %932 = vdwg.mxu0
        %v933 = vadd.f32 %v886, %v927
        %v934 = vadd.f32 %v888, %v929
        %v935 = vld [vmem:[%s435] sm:$0xf]
        %v937 = vunpack.c.l.b16 %v935
        %v938 = vpack.c.b16 %v937, %v937
        %v940 = vshrl.u32 %v938, 16
        %v942 = vshll.u32 %v938, 16
        %v944 = vrot.slane %v942, 1
        %v945 = vor.u32 %v940, %v944
        %v947 = vsel %vm455, %v945, 0
        %949 = vmatprep.subr.bf16.mxu0 %v662
        %950 = vmatpush1.bf16.msra.mxu0 %v661
        %951 = vmatprep.subr.bf16.mxu0 %v674
        %952 = vmatpush1.bf16.msra.mxu0 %v671
        %953 = vmatprep.subr.bf16.mxu0 0
        %954 = vmatpush1.bf16.msra.mxu0 0
        %955 = vmatprep.subr.bf16.mxu0 0
        %956 = vmatpush1.bf16.msra.mxu0 0
        %957 = vmatprep.subr.bf16.mxu0 0
        %958 = vmatpush1.bf16.msra.mxu0 0
        %959 = vmatprep.subr.bf16.mxu0 0
        %960 = vmatpush1.bf16.msra.mxu0 0
        %961 = vmatprep.subr.bf16.mxu0 0
        %962 = vmatpush1.bf16.msra.mxu0 0
        %963 = vmatprep.subr.bf16.mxu0 0
        %964 = vmatpush1.bf16.msra.mxu0 0
        %965 = vmatprep.subr.bf16.mxu0 0
        %966 = vmatpush1.bf16.msra.mxu0 0
        %967 = vmatprep.subr.bf16.mxu0 0
        %968 = vmatpush1.bf16.msra.mxu0 0
        %969 = vmatprep.subr.bf16.mxu0 0
        %970 = vmatpush1.bf16.msra.mxu0 0
        %971 = vmatprep.subr.bf16.mxu0 0
        %972 = vmatpush1.bf16.msra.mxu0 0
        %973 = vmatprep.subr.bf16.mxu0 0
        %974 = vmatpush1.bf16.msra.mxu0 0
        %975 = vmatprep.subr.bf16.mxu0 0
        %976 = vmatpush1.bf16.msra.mxu0 0
        %977 = vmatprep.subr.bf16.mxu0 0
        %978 = vmatpush1.bf16.msra.mxu0 0
        %979 = vmatprep.subr.bf16.mxu0 0
        %980 = vmatpush1.bf16.msra.mxu0 0
        %981 = vmatprep.mubr.bf16.mxu0 0
        %982 = vmatmul.mubr.bf16.gmra.mrb[0].mxu0 %v947
        %v983 = vpop.f32.mrb[0].mxu0
        %v984 = vadd.f32 0.0, %v983
        %v985 = vpop.f32.mrb[0].mxu0
        %v986 = vadd.f32 0.0, %v985
        %v987 = vpop.f32.mrb[0].mxu0
        %v988 = vpop.f32.mrb[0].mxu0
        %989 = vdwg.mxu0
        %v990 = vadd.f32 %v933, %v984
        %v991 = vadd.f32 %v934, %v986
        %v992 = vld [vmem:[%s575] sm:$0xf]
        %v994 = vunpack.c.l.b16 %v992
        %v995 = vpack.c.b16 %v994, %v994
        %v997 = vshrl.u32 %v995, 16
        %v999 = vshll.u32 %v995, 16
        %v1001 = vrot.slane %v999, 1
        %v1002 = vor.u32 %v997, %v1001
        %v1004 = vsel %vm455, %v1002, 0
        %1006 = vmatprep.subr.bf16.mxu0 %v743
        %1007 = vmatpush1.bf16.msra.mxu0 %v742
        %1008 = vmatprep.subr.bf16.mxu0 %v755
        %1009 = vmatpush1.bf16.msra.mxu0 %v752
        %1010 = vmatprep.subr.bf16.mxu0 0
        %1011 = vmatpush1.bf16.msra.mxu0 0
        %1012 = vmatprep.subr.bf16.mxu0 0
        %1013 = vmatpush1.bf16.msra.mxu0 0
        %1014 = vmatprep.subr.bf16.mxu0 0
        %1015 = vmatpush1.bf16.msra.mxu0 0
        %1016 = vmatprep.subr.bf16.mxu0 0
        %1017 = vmatpush1.bf16.msra.mxu0 0
        %1018 = vmatprep.subr.bf16.mxu0 0
        %1019 = vmatpush1.bf16.msra.mxu0 0
        %1020 = vmatprep.subr.bf16.mxu0 0
        %1021 = vmatpush1.bf16.msra.mxu0 0
        %1022 = vmatprep.subr.bf16.mxu0 0
        %1023 = vmatpush1.bf16.msra.mxu0 0
        %1024 = vmatprep.subr.bf16.mxu0 0
        %1025 = vmatpush1.bf16.msra.mxu0 0
        %1026 = vmatprep.subr.bf16.mxu0 0
        %1027 = vmatpush1.bf16.msra.mxu0 0
        %1028 = vmatprep.subr.bf16.mxu0 0
        %1029 = vmatpush1.bf16.msra.mxu0 0
        %1030 = vmatprep.subr.bf16.mxu0 0
        %1031 = vmatpush1.bf16.msra.mxu0 0
        %1032 = vmatprep.subr.bf16.mxu0 0
        %1033 = vmatpush1.bf16.msra.mxu0 0
        %1034 = vmatprep.subr.bf16.mxu0 0
        %1035 = vmatpush1.bf16.msra.mxu0 0
        %1036 = vmatprep.subr.bf16.mxu0 0
        %1037 = vmatpush1.bf16.msra.mxu0 0
        %1038 = vmatprep.mubr.bf16.mxu0 0
        %1039 = vmatmul.mubr.bf16.gmra.mrb[0].mxu0 %v1004
        %v1040 = vpop.f32.mrb[0].mxu0
        %v1041 = vadd.f32 0.0, %v1040
        %v1042 = vpop.f32.mrb[0].mxu0
        %v1043 = vadd.f32 0.0, %v1042
        %v1044 = vpop.f32.mrb[0].mxu0
        %v1045 = vpop.f32.mrb[0].mxu0
        %1046 = vdwg.mxu0
        %v1047 = vadd.f32 %v990, %v1041
        %v1048 = vadd.f32 %v991, %v1043
        %1051 = vrot.lane.b32.xlu0 %v1047, 8
        %v1052 = vpop.permute.xlu0 %1051
        %1053 = vrot.lane.b32.xlu0 %v1048, 8
        %v1054 = vpop.permute.xlu0 %1053
        %v1055 = vsel %vm806, %v1052, %v1054
        %v1057 = vmax.f32 %v1047, %v1055
        %1058 = vmatprep.subr.bf16.mxu0 %v450
        %1059 = vmatpush1.bf16.msra.mxu0 %v449
        %1060 = vmatprep.subr.bf16.mxu0 %v464
        %1061 = vmatpush1.bf16.msra.mxu0 %v461
        %1062 = vmatprep.subr.bf16.mxu0 0
        %1063 = vmatpush1.bf16.msra.mxu0 0
        %1064 = vmatprep.subr.bf16.mxu0 0
        %1065 = vmatpush1.bf16.msra.mxu0 0
        %1066 = vmatprep.subr.bf16.mxu0 0
        %1067 = vmatpush1.bf16.msra.mxu0 0
        %1068 = vmatprep.subr.bf16.mxu0 0
        %1069 = vmatpush1.bf16.msra.mxu0 0
        %1070 = vmatprep.subr.bf16.mxu0 0
        %1071 = vmatpush1.bf16.msra.mxu0 0
        %1072 = vmatprep.subr.bf16.mxu0 0
        %1073 = vmatpush1.bf16.msra.mxu0 0
        %1074 = vmatprep.subr.bf16.mxu0 0
        %1075 = vmatpush1.bf16.msra.mxu0 0
        %1076 = vmatprep.subr.bf16.mxu0 0
        %1077 = vmatpush1.bf16.msra.mxu0 0
        %1078 = vmatprep.subr.bf16.mxu0 0
        %1079 = vmatpush1.bf16.msra.mxu0 0
        %1080 = vmatprep.subr.bf16.mxu0 0
        %1081 = vmatpush1.bf16.msra.mxu0 0
        %1082 = vmatprep.subr.bf16.mxu0 0
        %1083 = vmatpush1.bf16.msra.mxu0 0
        %1084 = vmatprep.subr.bf16.mxu0 0
        %1085 = vmatpush1.bf16.msra.mxu0 0
        %1086 = vmatprep.subr.bf16.mxu0 0
        %1087 = vmatpush1.bf16.msra.mxu0 0
        %1088 = vmatprep.subr.bf16.mxu0 0
        %1089 = vmatpush1.bf16.msra.mxu0 0
        %1090 = vmatprep.mubr.bf16.mxu0 0
        %1091 = vmatmul.mubr.bf16.gmra.mrb[0].mxu0 %v596
        %v1092 = vpop.f32.mrb[0].mxu0
        %v1093 = vadd.f32 0.0, %v1092
        %v1094 = vpop.f32.mrb[0].mxu0
        %v1095 = vadd.f32 0.0, %v1094
        %v1096 = vpop.f32.mrb[0].mxu0
        %v1097 = vpop.f32.mrb[0].mxu0
        %1098 = vdwg.mxu0
        %1099 = vmatprep.subr.bf16.mxu0 %v520
        %1100 = vmatpush1.bf16.msra.mxu0 %v519
        %1101 = vmatprep.subr.bf16.mxu0 %v532
        %1102 = vmatpush1.bf16.msra.mxu0 %v529
        %1103 = vmatprep.subr.bf16.mxu0 0
        %1104 = vmatpush1.bf16.msra.mxu0 0
        %1105 = vmatprep.subr.bf16.mxu0 0
        %1106 = vmatpush1.bf16.msra.mxu0 0
        %1107 = vmatprep.subr.bf16.mxu0 0
        %1108 = vmatpush1.bf16.msra.mxu0 0
        %1109 = vmatprep.subr.bf16.mxu0 0
        %1110 = vmatpush1.bf16.msra.mxu0 0
        %1111 = vmatprep.subr.bf16.mxu0 0
        %1112 = vmatpush1.bf16.msra.mxu0 0
        %1113 = vmatprep.subr.bf16.mxu0 0
        %1114 = vmatpush1.bf16.msra.mxu0 0
        %1115 = vmatprep.subr.bf16.mxu0 0
        %1116 = vmatpush1.bf16.msra.mxu0 0
        %1117 = vmatprep.subr.bf16.mxu0 0
        %1118 = vmatpush1.bf16.msra.mxu0 0
        %1119 = vmatprep.subr.bf16.mxu0 0
        %1120 = vmatpush1.bf16.msra.mxu0 0
        %1121 = vmatprep.subr.bf16.mxu0 0
        %1122 = vmatpush1.bf16.msra.mxu0 0
        %1123 = vmatprep.subr.bf16.mxu0 0
        %1124 = vmatpush1.bf16.msra.mxu0 0
        %1125 = vmatprep.subr.bf16.mxu0 0
        %1126 = vmatpush1.bf16.msra.mxu0 0
        %1127 = vmatprep.subr.bf16.mxu0 0
        %1128 = vmatpush1.bf16.msra.mxu0 0
        %1129 = vmatprep.subr.bf16.mxu0 0
        %1130 = vmatpush1.bf16.msra.mxu0 0
        %1131 = vmatprep.mubr.bf16.mxu0 0
        %1132 = vmatmul.mubr.bf16.gmra.mrb[0].mxu0 %v457
        %v1133 = vpop.f32.mrb[0].mxu0
        %v1134 = vadd.f32 %v1093, %v1133
        %v1135 = vpop.f32.mrb[0].mxu0
        %v1136 = vadd.f32 %v1095, %v1135
        %v1137 = vpop.f32.mrb[0].mxu0
        %v1138 = vpop.f32.mrb[0].mxu0
        %1139 = vdwg.mxu0
        %1140 = vmatprep.subr.bf16.mxu0 %v590
        %1141 = vmatpush1.bf16.msra.mxu0 %v589
        %1142 = vmatprep.subr.bf16.mxu0 %v602
        %1143 = vmatpush1.bf16.msra.mxu0 %v599
        %1144 = vmatprep.subr.bf16.mxu0 0
        %1145 = vmatpush1.bf16.msra.mxu0 0
        %1146 = vmatprep.subr.bf16.mxu0 0
        %1147 = vmatpush1.bf16.msra.mxu0 0
        %1148 = vmatprep.subr.bf16.mxu0 0
        %1149 = vmatpush1.bf16.msra.mxu0 0
        %1150 = vmatprep.subr.bf16.mxu0 0
        %1151 = vmatpush1.bf16.msra.mxu0 0
        %1152 = vmatprep.subr.bf16.mxu0 0
        %1153 = vmatpush1.bf16.msra.mxu0 0
        %1154 = vmatprep.subr.bf16.mxu0 0
        %1155 = vmatpush1.bf16.msra.mxu0 0
        %1156 = vmatprep.subr.bf16.mxu0 0
        %1157 = vmatpush1.bf16.msra.mxu0 0
        %1158 = vmatprep.subr.bf16.mxu0 0
        %1159 = vmatpush1.bf16.msra.mxu0 0
        %1160 = vmatprep.subr.bf16.mxu0 0
        %1161 = vmatpush1.bf16.msra.mxu0 0
        %1162 = vmatprep.subr.bf16.mxu0 0
        %1163 = vmatpush1.bf16.msra.mxu0 0
        %1164 = vmatprep.subr.bf16.mxu0 0
        %1165 = vmatpush1.bf16.msra.mxu0 0
        %1166 = vmatprep.subr.bf16.mxu0 0
        %1167 = vmatpush1.bf16.msra.mxu0 0
        %1168 = vmatprep.subr.bf16.mxu0 0
        %1169 = vmatpush1.bf16.msra.mxu0 0
        %1170 = vmatprep.subr.bf16.mxu0 0
        %1171 = vmatpush1.bf16.msra.mxu0 0
        %1172 = vmatprep.mubr.bf16.mxu0 0
        %1173 = vmatmul.mubr.bf16.gmra.mrb[0].mxu0 %v668
        %v1174 = vpop.f32.mrb[0].mxu0
        %v1175 = vadd.f32 0.0, %v1174
        %v1176 = vpop.f32.mrb[0].mxu0
        %v1177 = vadd.f32 0.0, %v1176
        %v1178 = vpop.f32.mrb[0].mxu0
        %v1179 = vpop.f32.mrb[0].mxu0
        %1180 = vdwg.mxu0
        %v1181 = vadd.f32 %v1134, %v1175
        %v1182 = vadd.f32 %v1136, %v1177
        %1183 = vmatprep.subr.bf16.mxu0 %v662
        %1184 = vmatpush1.bf16.msra.mxu0 %v661
        %1185 = vmatprep.subr.bf16.mxu0 %v674
        %1186 = vmatpush1.bf16.msra.mxu0 %v671
        %1187 = vmatprep.subr.bf16.mxu0 0
        %1188 = vmatpush1.bf16.msra.mxu0 0
        %1189 = vmatprep.subr.bf16.mxu0 0
        %1190 = vmatpush1.bf16.msra.mxu0 0
        %1191 = vmatprep.subr.bf16.mxu0 0
        %1192 = vmatpush1.bf16.msra.mxu0 0
        %1193 = vmatprep.subr.bf16.mxu0 0
        %1194 = vmatpush1.bf16.msra.mxu0 0
        %1195 = vmatprep.subr.bf16.mxu0 0
        %1196 = vmatpush1.bf16.msra.mxu0 0
        %1197 = vmatprep.subr.bf16.mxu0 0
        %1198 = vmatpush1.bf16.msra.mxu0 0
        %1199 = vmatprep.subr.bf16.mxu0 0
        %1200 = vmatpush1.bf16.msra.mxu0 0
        %1201 = vmatprep.subr.bf16.mxu0 0
        %1202 = vmatpush1.bf16.msra.mxu0 0
        %1203 = vmatprep.subr.bf16.mxu0 0
        %1204 = vmatpush1.bf16.msra.mxu0 0
        %1205 = vmatprep.subr.bf16.mxu0 0
        %1206 = vmatpush1.bf16.msra.mxu0 0
        %1207 = vmatprep.subr.bf16.mxu0 0
        %1208 = vmatpush1.bf16.msra.mxu0 0
        %1209 = vmatprep.subr.bf16.mxu0 0
        %1210 = vmatpush1.bf16.msra.mxu0 0
        %1211 = vmatprep.subr.bf16.mxu0 0
        %1212 = vmatpush1.bf16.msra.mxu0 0
        %1213 = vmatprep.subr.bf16.mxu0 0
        %1214 = vmatpush1.bf16.msra.mxu0 0
        %1215 = vmatprep.mubr.bf16.mxu0 0
        %1216 = vmatmul.mubr.bf16.gmra.mrb[0].mxu0 %v749
        %v1217 = vpop.f32.mrb[0].mxu0
        %v1218 = vadd.f32 0.0, %v1217
        %v1219 = vpop.f32.mrb[0].mxu0
        %v1220 = vadd.f32 0.0, %v1219
        %v1221 = vpop.f32.mrb[0].mxu0
        %v1222 = vpop.f32.mrb[0].mxu0
        %1223 = vdwg.mxu0
        %v1224 = vadd.f32 %v1181, %v1218
        %v1225 = vadd.f32 %v1182, %v1220
        %1226 = vmatprep.subr.bf16.mxu0 %v743
        %1227 = vmatpush1.bf16.msra.mxu0 %v742
        %1228 = vmatprep.subr.bf16.mxu0 %v755
        %1229 = vmatpush1.bf16.msra.mxu0 %v752
        %1230 = vmatprep.subr.bf16.mxu0 0
        %1231 = vmatpush1.bf16.msra.mxu0 0
        %1232 = vmatprep.subr.bf16.mxu0 0
        %1233 = vmatpush1.bf16.msra.mxu0 0
        %1234 = vmatprep.subr.bf16.mxu0 0
        %1235 = vmatpush1.bf16.msra.mxu0 0
        %1236 = vmatprep.subr.bf16.mxu0 0
        %1237 = vmatpush1.bf16.msra.mxu0 0
        %1238 = vmatprep.subr.bf16.mxu0 0
        %1239 = vmatpush1.bf16.msra.mxu0 0
        %1240 = vmatprep.subr.bf16.mxu0 0
        %1241 = vmatpush1.bf16.msra.mxu0 0
        %1242 = vmatprep.subr.bf16.mxu0 0
        %1243 = vmatpush1.bf16.msra.mxu0 0
        %1244 = vmatprep.subr.bf16.mxu0 0
        %1245 = vmatpush1.bf16.msra.mxu0 0
        %1246 = vmatprep.subr.bf16.mxu0 0
        %1247 = vmatpush1.bf16.msra.mxu0 0
        %1248 = vmatprep.subr.bf16.mxu0 0
        %1249 = vmatpush1.bf16.msra.mxu0 0
        %1250 = vmatprep.subr.bf16.mxu0 0
        %1251 = vmatpush1.bf16.msra.mxu0 0
        %1252 = vmatprep.subr.bf16.mxu0 0
        %1253 = vmatpush1.bf16.msra.mxu0 0
        %1254 = vmatprep.subr.bf16.mxu0 0
        %1255 = vmatpush1.bf16.msra.mxu0 0
        %1256 = vmatprep.subr.bf16.mxu0 0
        %1257 = vmatpush1.bf16.msra.mxu0 0
        %1258 = vmatprep.mubr.bf16.mxu0 0
        %1259 = vmatmul.mubr.bf16.gmra.mrb[0].mxu0 %v947
        %v1260 = vpop.f32.mrb[0].mxu0
        %v1261 = vadd.f32 0.0, %v1260
        %v1262 = vpop.f32.mrb[0].mxu0
        %v1263 = vadd.f32 0.0, %v1262
        %v1264 = vpop.f32.mrb[0].mxu0
        %v1265 = vpop.f32.mrb[0].mxu0
        %1266 = vdwg.mxu0
        %v1267 = vadd.f32 %v1224, %v1261
        %v1268 = vadd.f32 %v1225, %v1263
        %1271 = vrot.lane.b32.xlu0 %v1267, 8
        %v1272 = vpop.permute.xlu0 %1271
        %1273 = vrot.lane.b32.xlu0 %v1268, 8
        %v1274 = vpop.permute.xlu0 %1273
        %v1275 = vsel %vm806, %v1272, %v1274
        %v1277 = vmax.f32 %v1267, %v1275
        %v1278 = vmax.f32 %v809, %v1277
        %1279 = vmatprep.subr.bf16.mxu0 %v450
        %1280 = vmatpush1.bf16.msra.mxu0 %v449
        %1281 = vmatprep.subr.bf16.mxu0 %v464
        %1282 = vmatpush1.bf16.msra.mxu0 %v461
        %1283 = vmatprep.subr.bf16.mxu0 0
        %1284 = vmatpush1.bf16.msra.mxu0 0
        %1285 = vmatprep.subr.bf16.mxu0 0
        %1286 = vmatpush1.bf16.msra.mxu0 0
        %1287 = vmatprep.subr.bf16.mxu0 0
        %1288 = vmatpush1.bf16.msra.mxu0 0
        %1289 = vmatprep.subr.bf16.mxu0 0
        %1290 = vmatpush1.bf16.msra.mxu0 0
        %1291 = vmatprep.subr.bf16.mxu0 0
        %1292 = vmatpush1.bf16.msra.mxu0 0
        %1293 = vmatprep.subr.bf16.mxu0 0
        %1294 = vmatpush1.bf16.msra.mxu0 0
        %1295 = vmatprep.subr.bf16.mxu0 0
        %1296 = vmatpush1.bf16.msra.mxu0 0
        %1297 = vmatprep.subr.bf16.mxu0 0
        %1298 = vmatpush1.bf16.msra.mxu0 0
        %1299 = vmatprep.subr.bf16.mxu0 0
        %1300 = vmatpush1.bf16.msra.mxu0 0
        %1301 = vmatprep.subr.bf16.mxu0 0
        %1302 = vmatpush1.bf16.msra.mxu0 0
        %1303 = vmatprep.subr.bf16.mxu0 0
        %1304 = vmatpush1.bf16.msra.mxu0 0
        %1305 = vmatprep.subr.bf16.mxu0 0
        %1306 = vmatpush1.bf16.msra.mxu0 0
        %1307 = vmatprep.subr.bf16.mxu0 0
        %1308 = vmatpush1.bf16.msra.mxu0 0
        %1309 = vmatprep.subr.bf16.mxu0 0
        %1310 = vmatpush1.bf16.msra.mxu0 0
        %1311 = vmatprep.mubr.bf16.mxu0 0
        %1312 = vmatmul.mubr.bf16.gmra.mrb[0].mxu0 %v749
        %v1313 = vpop.f32.mrb[0].mxu0
        %v1314 = vadd.f32 0.0, %v1313
        %v1315 = vpop.f32.mrb[0].mxu0
        %v1316 = vadd.f32 0.0, %v1315
        %v1317 = vpop.f32.mrb[0].mxu0
        %v1318 = vpop.f32.mrb[0].mxu0
        %1319 = vdwg.mxu0
        %1320 = vmatprep.subr.bf16.mxu0 %v520
        %1321 = vmatpush1.bf16.msra.mxu0 %v519
        %1322 = vmatprep.subr.bf16.mxu0 %v532
        %1323 = vmatpush1.bf16.msra.mxu0 %v529
        %1324 = vmatprep.subr.bf16.mxu0 0
        %1325 = vmatpush1.bf16.msra.mxu0 0
        %1326 = vmatprep.subr.bf16.mxu0 0
        %1327 = vmatpush1.bf16.msra.mxu0 0
        %1328 = vmatprep.subr.bf16.mxu0 0
        %1329 = vmatpush1.bf16.msra.mxu0 0
        %1330 = vmatprep.subr.bf16.mxu0 0
        %1331 = vmatpush1.bf16.msra.mxu0 0
        %1332 = vmatprep.subr.bf16.mxu0 0
        %1333 = vmatpush1.bf16.msra.mxu0 0
        %1334 = vmatprep.subr.bf16.mxu0 0
        %1335 = vmatpush1.bf16.msra.mxu0 0
        %1336 = vmatprep.subr.bf16.mxu0 0
        %1337 = vmatpush1.bf16.msra.mxu0 0
        %1338 = vmatprep.subr.bf16.mxu0 0
        %1339 = vmatpush1.bf16.msra.mxu0 0
        %1340 = vmatprep.subr.bf16.mxu0 0
        %1341 = vmatpush1.bf16.msra.mxu0 0
        %1342 = vmatprep.subr.bf16.mxu0 0
        %1343 = vmatpush1.bf16.msra.mxu0 0
        %1344 = vmatprep.subr.bf16.mxu0 0
        %1345 = vmatpush1.bf16.msra.mxu0 0
        %1346 = vmatprep.subr.bf16.mxu0 0
        %1347 = vmatpush1.bf16.msra.mxu0 0
        %1348 = vmatprep.subr.bf16.mxu0 0
        %1349 = vmatpush1.bf16.msra.mxu0 0
        %1350 = vmatprep.subr.bf16.mxu0 0
        %1351 = vmatpush1.bf16.msra.mxu0 0
        %1352 = vmatprep.mubr.bf16.mxu0 0
        %1353 = vmatmul.mubr.bf16.gmra.mrb[0].mxu0 %v668
        %v1354 = vpop.f32.mrb[0].mxu0
        %v1355 = vadd.f32 %v1314, %v1354
        %v1356 = vpop.f32.mrb[0].mxu0
        %v1357 = vadd.f32 %v1316, %v1356
        %v1358 = vpop.f32.mrb[0].mxu0
        %v1359 = vpop.f32.mrb[0].mxu0
        %1360 = vdwg.mxu0
        %1361 = vmatprep.subr.bf16.mxu0 %v590
        %1362 = vmatpush1.bf16.msra.mxu0 %v589
        %1363 = vmatprep.subr.bf16.mxu0 %v602
        %1364 = vmatpush1.bf16.msra.mxu0 %v599
        %1365 = vmatprep.subr.bf16.mxu0 0
        %1366 = vmatpush1.bf16.msra.mxu0 0
        %1367 = vmatprep.subr.bf16.mxu0 0
        %1368 = vmatpush1.bf16.msra.mxu0 0
        %1369 = vmatprep.subr.bf16.mxu0 0
        %1370 = vmatpush1.bf16.msra.mxu0 0
        %1371 = vmatprep.subr.bf16.mxu0 0
        %1372 = vmatpush1.bf16.msra.mxu0 0
        %1373 = vmatprep.subr.bf16.mxu0 0
        %1374 = vmatpush1.bf16.msra.mxu0 0
        %1375 = vmatprep.subr.bf16.mxu0 0
        %1376 = vmatpush1.bf16.msra.mxu0 0
        %1377 = vmatprep.subr.bf16.mxu0 0
        %1378 = vmatpush1.bf16.msra.mxu0 0
        %1379 = vmatprep.subr.bf16.mxu0 0
        %1380 = vmatpush1.bf16.msra.mxu0 0
        %1381 = vmatprep.subr.bf16.mxu0 0
        %1382 = vmatpush1.bf16.msra.mxu0 0
        %1383 = vmatprep.subr.bf16.mxu0 0
        %1384 = vmatpush1.bf16.msra.mxu0 0
        %1385 = vmatprep.subr.bf16.mxu0 0
        %1386 = vmatpush1.bf16.msra.mxu0 0
        %1387 = vmatprep.subr.bf16.mxu0 0
        %1388 = vmatpush1.bf16.msra.mxu0 0
        %1389 = vmatprep.subr.bf16.mxu0 0
        %1390 = vmatpush1.bf16.msra.mxu0 0
        %1391 = vmatprep.subr.bf16.mxu0 0
        %1392 = vmatpush1.bf16.msra.mxu0 0
        %1393 = vmatprep.mubr.bf16.mxu0 0
        %1394 = vmatmul.mubr.bf16.gmra.mrb[0].mxu0 %v947
        %v1395 = vpop.f32.mrb[0].mxu0
        %v1396 = vadd.f32 0.0, %v1395
        %v1397 = vpop.f32.mrb[0].mxu0
        %v1398 = vadd.f32 0.0, %v1397
        %v1399 = vpop.f32.mrb[0].mxu0
        %v1400 = vpop.f32.mrb[0].mxu0
        %1401 = vdwg.mxu0
        %v1402 = vadd.f32 %v1355, %v1396
        %v1403 = vadd.f32 %v1357, %v1398
        %1404 = vmatprep.subr.bf16.mxu0 %v662
        %1405 = vmatpush1.bf16.msra.mxu0 %v661
        %1406 = vmatprep.subr.bf16.mxu0 %v674
        %1407 = vmatpush1.bf16.msra.mxu0 %v671
        %1408 = vmatprep.subr.bf16.mxu0 0
        %1409 = vmatpush1.bf16.msra.mxu0 0
        %1410 = vmatprep.subr.bf16.mxu0 0
        %1411 = vmatpush1.bf16.msra.mxu0 0
        %1412 = vmatprep.subr.bf16.mxu0 0
        %1413 = vmatpush1.bf16.msra.mxu0 0
        %1414 = vmatprep.subr.bf16.mxu0 0
        %1415 = vmatpush1.bf16.msra.mxu0 0
        %1416 = vmatprep.subr.bf16.mxu0 0
        %1417 = vmatpush1.bf16.msra.mxu0 0
        %1418 = vmatprep.subr.bf16.mxu0 0
        %1419 = vmatpush1.bf16.msra.mxu0 0
        %1420 = vmatprep.subr.bf16.mxu0 0
        %1421 = vmatpush1.bf16.msra.mxu0 0
        %1422 = vmatprep.subr.bf16.mxu0 0
        %1423 = vmatpush1.bf16.msra.mxu0 0
        %1424 = vmatprep.subr.bf16.mxu0 0
        %1425 = vmatpush1.bf16.msra.mxu0 0
        %1426 = vmatprep.subr.bf16.mxu0 0
        %1427 = vmatpush1.bf16.msra.mxu0 0
        %1428 = vmatprep.subr.bf16.mxu0 0
        %1429 = vmatpush1.bf16.msra.mxu0 0
        %1430 = vmatprep.subr.bf16.mxu0 0
        %1431 = vmatpush1.bf16.msra.mxu0 0
        %1432 = vmatprep.subr.bf16.mxu0 0
        %1433 = vmatpush1.bf16.msra.mxu0 0
        %1434 = vmatprep.subr.bf16.mxu0 0
        %1435 = vmatpush1.bf16.msra.mxu0 0
        %1436 = vmatprep.mubr.bf16.mxu0 0
        %1437 = vmatmul.mubr.bf16.gmra.mrb[0].mxu0 %v1004
        %v1438 = vpop.f32.mrb[0].mxu0
        %v1439 = vadd.f32 0.0, %v1438
        %v1440 = vpop.f32.mrb[0].mxu0
        %v1441 = vadd.f32 0.0, %v1440
        %v1442 = vpop.f32.mrb[0].mxu0
        %v1443 = vpop.f32.mrb[0].mxu0
        %1444 = vdwg.mxu0
        %v1445 = vadd.f32 %v1402, %v1439
        %v1446 = vadd.f32 %v1403, %v1441
        %v1447 = vld [vmem:[%s647] sm:$0xf]
        %v1449 = vunpack.c.l.b16 %v1447
        %v1450 = vpack.c.b16 %v1449, %v1449
        %v1452 = vshrl.u32 %v1450, 16
        %v1454 = vshll.u32 %v1450, 16
        %v1456 = vrot.slane %v1454, 1
        %v1457 = vor.u32 %v1452, %v1456
        %v1459 = vsel %vm455, %v1457, 0
        %1461 = vmatprep.subr.bf16.mxu0 %v743
        %1462 = vmatpush1.bf16.msra.mxu0 %v742
        %1463 = vmatprep.subr.bf16.mxu0 %v755
        %1464 = vmatpush1.bf16.msra.mxu0 %v752
        %1465 = vmatprep.subr.bf16.mxu0 0
        %1466 = vmatpush1.bf16.msra.mxu0 0
        %1467 = vmatprep.subr.bf16.mxu0 0
        %1468 = vmatpush1.bf16.msra.mxu0 0
        %1469 = vmatprep.subr.bf16.mxu0 0
        %1470 = vmatpush1.bf16.msra.mxu0 0
        %1471 = vmatprep.subr.bf16.mxu0 0
        %1472 = vmatpush1.bf16.msra.mxu0 0
        %1473 = vmatprep.subr.bf16.mxu0 0
        %1474 = vmatpush1.bf16.msra.mxu0 0
        %1475 = vmatprep.subr.bf16.mxu0 0
        %1476 = vmatpush1.bf16.msra.mxu0 0
        %1477 = vmatprep.subr.bf16.mxu0 0
        %1478 = vmatpush1.bf16.msra.mxu0 0
        %1479 = vmatprep.subr.bf16.mxu0 0
        %1480 = vmatpush1.bf16.msra.mxu0 0
        %1481 = vmatprep.subr.bf16.mxu0 0
        %1482 = vmatpush1.bf16.msra.mxu0 0
        %1483 = vmatprep.subr.bf16.mxu0 0
        %1484 = vmatpush1.bf16.msra.mxu0 0
        %1485 = vmatprep.subr.bf16.mxu0 0
        %1486 = vmatpush1.bf16.msra.mxu0 0
        %1487 = vmatprep.subr.bf16.mxu0 0
        %1488 = vmatpush1.bf16.msra.mxu0 0
        %1489 = vmatprep.subr.bf16.mxu0 0
        %1490 = vmatpush1.bf16.msra.mxu0 0
        %1491 = vmatprep.subr.bf16.mxu0 0
        %1492 = vmatpush1.bf16.msra.mxu0 0
        %1493 = vmatprep.mubr.bf16.mxu0 0
        %1494 = vmatmul.mubr.bf16.gmra.mrb[0].mxu0 %v1459
        %v1495 = vpop.f32.mrb[0].mxu0
        %v1496 = vadd.f32 0.0, %v1495
        %v1497 = vpop.f32.mrb[0].mxu0
        %v1498 = vadd.f32 0.0, %v1497
        %v1499 = vpop.f32.mrb[0].mxu0
        %v1500 = vpop.f32.mrb[0].mxu0
        %1501 = vdwg.mxu0
        %v1502 = vadd.f32 %v1445, %v1496
        %v1503 = vadd.f32 %v1446, %v1498
        %1506 = vrot.lane.b32.xlu0 %v1502, 8
        %v1507 = vpop.permute.xlu0 %1506
        %1508 = vrot.lane.b32.xlu0 %v1503, 8
        %v1509 = vpop.permute.xlu0 %1508
        %v1510 = vsel %vm806, %v1507, %v1509
        %v1512 = vmax.f32 %v1502, %v1510
        %v1513 = vmax.f32 %v1057, %v1512
        %v1514 = vld [vmem:[%s5] sm:$0x1]
        %v1516 = vlaneseq
        %v1517 = vshrl.u32 %v1516, 7
        %v1518 = vsub.s32 0, %v1517
        %v1519 = vrot.slane %v1514, %v1518
        %v1521 = vadd.f32 %v1278, %v1519
        %v1522 = vmax.f32 %v1521, 0.0
        %v1523 = vadd.f32 %v1513, %v1519
        %v1524 = vmax.f32 %v1523, 0.0
        %v1525 = vpack.c.bf16 %v1522, %v1522
        %v1526 = vpack.c.bf16 %v1524, %v1524
        %v1542 = vunpack.c.l.b16 %v371
        %v1543 = vunpack.c.h.b16 %v371
        %v1544 = vunpack.c.l.b16 %v372
        %v1545 = vunpack.c.h.b16 %v372
        %v1546 = vunpack.c.l.b16 %v373
        %v1547 = vunpack.c.h.b16 %v373
        %v1548 = vunpack.c.l.b16 %v374
        %v1549 = vunpack.c.h.b16 %v374
        %v1550 = vunpack.c.l.b16 %v375
        %v1551 = vunpack.c.h.b16 %v375
        %v1552 = vunpack.c.l.b16 %v376
        %v1553 = vunpack.c.h.b16 %v376
        %v1554 = vunpack.c.l.b16 %v377
        %v1555 = vunpack.c.h.b16 %v377
        %v1556 = vunpack.c.l.b16 %v378
        %v1557 = vunpack.c.h.b16 %v378
        %v1558 = vunpack.c.l.b16 %v379
        %v1559 = vunpack.c.h.b16 %v379
        %v1560 = vunpack.c.l.b16 %v380
        %v1561 = vunpack.c.h.b16 %v380
        %v1562 = vunpack.c.l.b16 %v381
        %v1563 = vunpack.c.h.b16 %v381
        %v1564 = vunpack.c.l.b16 %v382
        %v1565 = vunpack.c.h.b16 %v382
        %v1566 = vunpack.c.l.b16 %v383
        %v1567 = vunpack.c.h.b16 %v383
        %v1568 = vunpack.c.l.b16 %v384
        %v1569 = vunpack.c.h.b16 %v384
        %v1570 = vunpack.c.l.b16 %v385
        %v1571 = vunpack.c.h.b16 %v385
        %v1572 = vpack.c.b16 %v1544, %v1542
        %v1573 = vpack.c.b16 %v1545, %v1543
        %v1574 = vpack.c.b16 %v1548, %v1546
        %v1575 = vpack.c.b16 %v1549, %v1547
        %v1576 = vpack.c.b16 %v1552, %v1550
        %v1577 = vpack.c.b16 %v1553, %v1551
        %v1578 = vpack.c.b16 %v1556, %v1554
        %v1579 = vpack.c.b16 %v1557, %v1555
        %v1580 = vpack.c.b16 %v1560, %v1558
        %v1581 = vpack.c.b16 %v1561, %v1559
        %v1582 = vpack.c.b16 %v1564, %v1562
        %v1583 = vpack.c.b16 %v1565, %v1563
        %v1584 = vpack.c.b16 %v1568, %v1566
        %v1585 = vpack.c.b16 %v1569, %v1567
        %v1586 = vpack.c.b16 %v1570, %v1570
        %v1587 = vpack.c.b16 %v1571, %v1571
        %vm1602 = vcmask 982016
        %v1604 = vsel %vm1602, %v1526, 0
        %vm1606 = vcmask 1043456
        %v1608 = vsel %vm1606, %v1586, 0
        %v1611 = vsel %vm1606, %v1587, 0
        %1613 = vmatprep.subr.bf16.mxu0 %v1573
        %1614 = vmatpush1.bf16.msra.mxu0 %v1572
        %1615 = vmatprep.subr.bf16.mxu0 %v1575
        %1616 = vmatpush1.bf16.msra.mxu0 %v1574
        %1617 = vmatprep.subr.bf16.mxu0 %v1577
        %1618 = vmatpush1.bf16.msra.mxu0 %v1576
        %1619 = vmatprep.subr.bf16.mxu0 %v1579
        %1620 = vmatpush1.bf16.msra.mxu0 %v1578
        %1621 = vmatprep.subr.bf16.mxu0 %v1581
        %1622 = vmatpush1.bf16.msra.mxu0 %v1580
        %1623 = vmatprep.subr.bf16.mxu0 %v1583
        %1624 = vmatpush1.bf16.msra.mxu0 %v1582
        %1625 = vmatprep.subr.bf16.mxu0 %v1585
        %1626 = vmatpush1.bf16.msra.mxu0 %v1584
        %1627 = vmatprep.subr.bf16.mxu0 %v1611
        %1628 = vmatpush1.bf16.msra.mxu0 %v1608
        %1629 = vmatprep.subr.bf16.mxu0 0
        %1630 = vmatpush1.bf16.msra.mxu0 0
        %1631 = vmatprep.subr.bf16.mxu0 0
        %1632 = vmatpush1.bf16.msra.mxu0 0
        %1633 = vmatprep.subr.bf16.mxu0 0
        %1634 = vmatpush1.bf16.msra.mxu0 0
        %1635 = vmatprep.subr.bf16.mxu0 0
        %1636 = vmatpush1.bf16.msra.mxu0 0
        %1637 = vmatprep.subr.bf16.mxu0 0
        %1638 = vmatpush1.bf16.msra.mxu0 0
        %1639 = vmatprep.subr.bf16.mxu0 0
        %1640 = vmatpush1.bf16.msra.mxu0 0
        %1641 = vmatprep.subr.bf16.mxu0 0
        %1642 = vmatpush1.bf16.msra.mxu0 0
        %1643 = vmatprep.subr.bf16.mxu0 0
        %1644 = vmatpush1.bf16.msra.mxu0 0
        %1645 = vmatprep.mubr.bf16.mxu0 0
        %1646 = vmatmul.mubr.bf16.gmra.mrb[0].mxu0 %v1604
        %v1647 = vpop.f32.mrb[0].mxu0
        %v1648 = vadd.f32 0.0, %v1647
        %v1649 = vpop.f32.mrb[0].mxu0
        %v1650 = vadd.f32 0.0, %v1649
        %v1651 = vpop.f32.mrb[0].mxu0
        %v1652 = vpop.f32.mrb[0].mxu0
        %1653 = vdwg.mxu0
        %v1669 = vunpack.c.l.b16 %v355
        %v1670 = vunpack.c.h.b16 %v355
        %v1671 = vunpack.c.l.b16 %v356
        %v1672 = vunpack.c.h.b16 %v356
        %v1673 = vunpack.c.l.b16 %v357
        %v1674 = vunpack.c.h.b16 %v357
        %v1675 = vunpack.c.l.b16 %v358
        %v1676 = vunpack.c.h.b16 %v358
        %v1677 = vunpack.c.l.b16 %v359
        %v1678 = vunpack.c.h.b16 %v359
        %v1679 = vunpack.c.l.b16 %v360
        %v1680 = vunpack.c.h.b16 %v360
        %v1681 = vunpack.c.l.b16 %v361
        %v1682 = vunpack.c.h.b16 %v361
        %v1683 = vunpack.c.l.b16 %v362
        %v1684 = vunpack.c.h.b16 %v362
        %v1685 = vunpack.c.l.b16 %v363
        %v1686 = vunpack.c.h.b16 %v363
        %v1687 = vunpack.c.l.b16 %v364
        %v1688 = vunpack.c.h.b16 %v364
        %v1689 = vunpack.c.l.b16 %v365
        %v1690 = vunpack.c.h.b16 %v365
        %v1691 = vunpack.c.l.b16 %v366
        %v1692 = vunpack.c.h.b16 %v366
        %v1693 = vunpack.c.l.b16 %v367
        %v1694 = vunpack.c.h.b16 %v367
        %v1695 = vunpack.c.l.b16 %v368
        %v1696 = vunpack.c.h.b16 %v368
        %v1697 = vunpack.c.l.b16 %v369
        %v1698 = vunpack.c.h.b16 %v369
        %v1699 = vpack.c.b16 %v1671, %v1669
        %v1700 = vpack.c.b16 %v1672, %v1670
        %v1701 = vpack.c.b16 %v1675, %v1673
        %v1702 = vpack.c.b16 %v1676, %v1674
        %v1703 = vpack.c.b16 %v1679, %v1677
        %v1704 = vpack.c.b16 %v1680, %v1678
        %v1705 = vpack.c.b16 %v1683, %v1681
        %v1706 = vpack.c.b16 %v1684, %v1682
        %v1707 = vpack.c.b16 %v1687, %v1685
        %v1708 = vpack.c.b16 %v1688, %v1686
        %v1709 = vpack.c.b16 %v1691, %v1689
        %v1710 = vpack.c.b16 %v1692, %v1690
        %v1711 = vpack.c.b16 %v1695, %v1693
        %v1712 = vpack.c.b16 %v1696, %v1694
        %v1713 = vpack.c.b16 %v1697, %v1697
        %v1714 = vpack.c.b16 %v1698, %v1698
        %v1730 = vsel %vm1602, %v1525, 0
        %v1733 = vsel %vm1606, %v1713, 0
        %v1736 = vsel %vm1606, %v1714, 0
        %1738 = vmatprep.subr.bf16.mxu0 %v1700
        %1739 = vmatpush1.bf16.msra.mxu0 %v1699
        %1740 = vmatprep.subr.bf16.mxu0 %v1702
        %1741 = vmatpush1.bf16.msra.mxu0 %v1701
        %1742 = vmatprep.subr.bf16.mxu0 %v1704
        %1743 = vmatpush1.bf16.msra.mxu0 %v1703
        %1744 = vmatprep.subr.bf16.mxu0 %v1706
        %1745 = vmatpush1.bf16.msra.mxu0 %v1705
        %1746 = vmatprep.subr.bf16.mxu0 %v1708
        %1747 = vmatpush1.bf16.msra.mxu0 %v1707
        %1748 = vmatprep.subr.bf16.mxu0 %v1710
        %1749 = vmatpush1.bf16.msra.mxu0 %v1709
        %1750 = vmatprep.subr.bf16.mxu0 %v1712
        %1751 = vmatpush1.bf16.msra.mxu0 %v1711
        %1752 = vmatprep.subr.bf16.mxu0 %v1736
        %1753 = vmatpush1.bf16.msra.mxu0 %v1733
        %1754 = vmatprep.subr.bf16.mxu0 0
        %1755 = vmatpush1.bf16.msra.mxu0 0
        %1756 = vmatprep.subr.bf16.mxu0 0
        %1757 = vmatpush1.bf16.msra.mxu0 0
        %1758 = vmatprep.subr.bf16.mxu0 0
        %1759 = vmatpush1.bf16.msra.mxu0 0
        %1760 = vmatprep.subr.bf16.mxu0 0
        %1761 = vmatpush1.bf16.msra.mxu0 0
        %1762 = vmatprep.subr.bf16.mxu0 0
        %1763 = vmatpush1.bf16.msra.mxu0 0
        %1764 = vmatprep.subr.bf16.mxu0 0
        %1765 = vmatpush1.bf16.msra.mxu0 0
        %1766 = vmatprep.subr.bf16.mxu0 0
        %1767 = vmatpush1.bf16.msra.mxu0 0
        %1768 = vmatprep.subr.bf16.mxu0 0
        %1769 = vmatpush1.bf16.msra.mxu0 0
        %1770 = vmatprep.mubr.bf16.mxu0 0
        %1771 = vmatmul.mubr.bf16.gmra.mrb[0].mxu0 %v1730
        %v1772 = vpop.f32.mrb[0].mxu0
        %v1773 = vadd.f32 %v1648, %v1772
        %v1774 = vpop.f32.mrb[0].mxu0
        %v1775 = vadd.f32 %v1650, %v1774
        %v1776 = vpop.f32.mrb[0].mxu0
        %v1777 = vpop.f32.mrb[0].mxu0
        %1778 = vdwg.mxu0
        %v1779 = vshrl.u32 %v1525, 16
        %v1781 = vshll.u32 %v1525, 16
        %v1783 = vrot.slane %v1781, 1
        %v1784 = vor.u32 %v1779, %v1783
        %v1800 = vunpack.c.l.b16 %v387
        %v1801 = vunpack.c.h.b16 %v387
        %v1802 = vunpack.c.l.b16 %v388
        %v1803 = vunpack.c.h.b16 %v388
        %v1804 = vunpack.c.l.b16 %v389
        %v1805 = vunpack.c.h.b16 %v389
        %v1806 = vunpack.c.l.b16 %v390
        %v1807 = vunpack.c.h.b16 %v390
        %v1808 = vunpack.c.l.b16 %v391
        %v1809 = vunpack.c.h.b16 %v391
        %v1810 = vunpack.c.l.b16 %v392
        %v1811 = vunpack.c.h.b16 %v392
        %v1812 = vunpack.c.l.b16 %v393
        %v1813 = vunpack.c.h.b16 %v393
        %v1814 = vunpack.c.l.b16 %v394
        %v1815 = vunpack.c.h.b16 %v394
        %v1816 = vunpack.c.l.b16 %v395
        %v1817 = vunpack.c.h.b16 %v395
        %v1818 = vunpack.c.l.b16 %v396
        %v1819 = vunpack.c.h.b16 %v396
        %v1820 = vunpack.c.l.b16 %v397
        %v1821 = vunpack.c.h.b16 %v397
        %v1822 = vunpack.c.l.b16 %v398
        %v1823 = vunpack.c.h.b16 %v398
        %v1824 = vunpack.c.l.b16 %v399
        %v1825 = vunpack.c.h.b16 %v399
        %v1826 = vunpack.c.l.b16 %v400
        %v1827 = vunpack.c.h.b16 %v400
        %v1828 = vunpack.c.l.b16 %v401
        %v1829 = vunpack.c.h.b16 %v401
        %v1830 = vpack.c.b16 %v1802, %v1800
        %v1831 = vpack.c.b16 %v1803, %v1801
        %v1832 = vpack.c.b16 %v1806, %v1804
        %v1833 = vpack.c.b16 %v1807, %v1805
        %v1834 = vpack.c.b16 %v1810, %v1808
        %v1835 = vpack.c.b16 %v1811, %v1809
        %v1836 = vpack.c.b16 %v1814, %v1812
        %v1837 = vpack.c.b16 %v1815, %v1813
        %v1838 = vpack.c.b16 %v1818, %v1816
        %v1839 = vpack.c.b16 %v1819, %v1817
        %v1840 = vpack.c.b16 %v1822, %v1820
        %v1841 = vpack.c.b16 %v1823, %v1821
        %v1842 = vpack.c.b16 %v1826, %v1824
        %v1843 = vpack.c.b16 %v1827, %v1825
        %v1844 = vpack.c.b16 %v1828, %v1828
        %v1845 = vpack.c.b16 %v1829, %v1829
        %v1861 = vsel %vm1602, %v1784, 0
        %v1864 = vsel %vm1606, %v1844, 0
        %v1867 = vsel %vm1606, %v1845, 0
        %1869 = vmatprep.subr.bf16.mxu0 %v1831
        %1870 = vmatpush1.bf16.msra.mxu0 %v1830
        %1871 = vmatprep.subr.bf16.mxu0 %v1833
        %1872 = vmatpush1.bf16.msra.mxu0 %v1832
        %1873 = vmatprep.subr.bf16.mxu0 %v1835
        %1874 = vmatpush1.bf16.msra.mxu0 %v1834
        %1875 = vmatprep.subr.bf16.mxu0 %v1837
        %1876 = vmatpush1.bf16.msra.mxu0 %v1836
        %1877 = vmatprep.subr.bf16.mxu0 %v1839
        %1878 = vmatpush1.bf16.msra.mxu0 %v1838
        %1879 = vmatprep.subr.bf16.mxu0 %v1841
        %1880 = vmatpush1.bf16.msra.mxu0 %v1840
        %1881 = vmatprep.subr.bf16.mxu0 %v1843
        %1882 = vmatpush1.bf16.msra.mxu0 %v1842
        %1883 = vmatprep.subr.bf16.mxu0 %v1867
        %1884 = vmatpush1.bf16.msra.mxu0 %v1864
        %1885 = vmatprep.subr.bf16.mxu0 0
        %1886 = vmatpush1.bf16.msra.mxu0 0
        %1887 = vmatprep.subr.bf16.mxu0 0
        %1888 = vmatpush1.bf16.msra.mxu0 0
        %1889 = vmatprep.subr.bf16.mxu0 0
        %1890 = vmatpush1.bf16.msra.mxu0 0
        %1891 = vmatprep.subr.bf16.mxu0 0
        %1892 = vmatpush1.bf16.msra.mxu0 0
        %1893 = vmatprep.subr.bf16.mxu0 0
        %1894 = vmatpush1.bf16.msra.mxu0 0
        %1895 = vmatprep.subr.bf16.mxu0 0
        %1896 = vmatpush1.bf16.msra.mxu0 0
        %1897 = vmatprep.subr.bf16.mxu0 0
        %1898 = vmatpush1.bf16.msra.mxu0 0
        %1899 = vmatprep.subr.bf16.mxu0 0
        %1900 = vmatpush1.bf16.msra.mxu0 0
        %1901 = vmatprep.mubr.bf16.mxu0 0
        %1902 = vmatmul.mubr.bf16.gmra.mrb[0].mxu0 %v1861
        %v1903 = vpop.f32.mrb[0].mxu0
        %v1904 = vadd.f32 0.0, %v1903
        %v1905 = vpop.f32.mrb[0].mxu0
        %v1906 = vadd.f32 0.0, %v1905
        %v1907 = vpop.f32.mrb[0].mxu0
        %v1908 = vpop.f32.mrb[0].mxu0
        %1909 = vdwg.mxu0
        %v1910 = vadd.f32 %v1773, %v1904
        %v1911 = vadd.f32 %v1775, %v1906
        %v1912 = vshrl.u32 %v1526, 16
        %v1914 = vshll.u32 %v1526, 16
        %v1916 = vrot.slane %v1914, 1
        %v1917 = vor.u32 %v1912, %v1916
        %v1933 = vunpack.c.l.b16 %v403
        %v1934 = vunpack.c.h.b16 %v403
        %v1935 = vunpack.c.l.b16 %v404
        %v1936 = vunpack.c.h.b16 %v404
        %v1937 = vunpack.c.l.b16 %v405
        %v1938 = vunpack.c.h.b16 %v405
        %v1939 = vunpack.c.l.b16 %v406
        %v1940 = vunpack.c.h.b16 %v406
        %v1941 = vunpack.c.l.b16 %v407
        %v1942 = vunpack.c.h.b16 %v407
        %v1943 = vunpack.c.l.b16 %v408
        %v1944 = vunpack.c.h.b16 %v408
        %v1945 = vunpack.c.l.b16 %v409
        %v1946 = vunpack.c.h.b16 %v409
        %v1947 = vunpack.c.l.b16 %v410
        %v1948 = vunpack.c.h.b16 %v410
        %v1949 = vunpack.c.l.b16 %v411
        %v1950 = vunpack.c.h.b16 %v411
        %v1951 = vunpack.c.l.b16 %v412
        %v1952 = vunpack.c.h.b16 %v412
        %v1953 = vunpack.c.l.b16 %v413
        %v1954 = vunpack.c.h.b16 %v413
        %v1955 = vunpack.c.l.b16 %v414
        %v1956 = vunpack.c.h.b16 %v414
        %v1957 = vunpack.c.l.b16 %v415
        %v1958 = vunpack.c.h.b16 %v415
        %v1959 = vunpack.c.l.b16 %v416
        %v1960 = vunpack.c.h.b16 %v416
        %v1961 = vunpack.c.l.b16 %v417
        %v1962 = vunpack.c.h.b16 %v417
        %v1963 = vpack.c.b16 %v1935, %v1933
        %v1964 = vpack.c.b16 %v1936, %v1934
        %v1965 = vpack.c.b16 %v1939, %v1937
        %v1966 = vpack.c.b16 %v1940, %v1938
        %v1967 = vpack.c.b16 %v1943, %v1941
        %v1968 = vpack.c.b16 %v1944, %v1942
        %v1969 = vpack.c.b16 %v1947, %v1945
        %v1970 = vpack.c.b16 %v1948, %v1946
        %v1971 = vpack.c.b16 %v1951, %v1949
        %v1972 = vpack.c.b16 %v1952, %v1950
        %v1973 = vpack.c.b16 %v1955, %v1953
        %v1974 = vpack.c.b16 %v1956, %v1954
        %v1975 = vpack.c.b16 %v1959, %v1957
        %v1976 = vpack.c.b16 %v1960, %v1958
        %v1977 = vpack.c.b16 %v1961, %v1961
        %v1978 = vpack.c.b16 %v1962, %v1962
        %v1994 = vsel %vm1602, %v1917, 0
        %v1997 = vsel %vm1606, %v1977, 0
        %v2000 = vsel %vm1606, %v1978, 0
        %2002 = vmatprep.subr.bf16.mxu0 %v1964
        %2003 = vmatpush1.bf16.msra.mxu0 %v1963
        %2004 = vmatprep.subr.bf16.mxu0 %v1966
        %2005 = vmatpush1.bf16.msra.mxu0 %v1965
        %2006 = vmatprep.subr.bf16.mxu0 %v1968
        %2007 = vmatpush1.bf16.msra.mxu0 %v1967
        %2008 = vmatprep.subr.bf16.mxu0 %v1970
        %2009 = vmatpush1.bf16.msra.mxu0 %v1969
        %2010 = vmatprep.subr.bf16.mxu0 %v1972
        %2011 = vmatpush1.bf16.msra.mxu0 %v1971
        %2012 = vmatprep.subr.bf16.mxu0 %v1974
        %2013 = vmatpush1.bf16.msra.mxu0 %v1973
        %2014 = vmatprep.subr.bf16.mxu0 %v1976
        %2015 = vmatpush1.bf16.msra.mxu0 %v1975
        %2016 = vmatprep.subr.bf16.mxu0 %v2000
        %2017 = vmatpush1.bf16.msra.mxu0 %v1997
        %2018 = vmatprep.subr.bf16.mxu0 0
        %2019 = vmatpush1.bf16.msra.mxu0 0
        %2020 = vmatprep.subr.bf16.mxu0 0
        %2021 = vmatpush1.bf16.msra.mxu0 0
        %2022 = vmatprep.subr.bf16.mxu0 0
        %2023 = vmatpush1.bf16.msra.mxu0 0
        %2024 = vmatprep.subr.bf16.mxu0 0
        %2025 = vmatpush1.bf16.msra.mxu0 0
        %2026 = vmatprep.subr.bf16.mxu0 0
        %2027 = vmatpush1.bf16.msra.mxu0 0
        %2028 = vmatprep.subr.bf16.mxu0 0
        %2029 = vmatpush1.bf16.msra.mxu0 0
        %2030 = vmatprep.subr.bf16.mxu0 0
        %2031 = vmatpush1.bf16.msra.mxu0 0
        %2032 = vmatprep.subr.bf16.mxu0 0
        %2033 = vmatpush1.bf16.msra.mxu0 0
        %2034 = vmatprep.mubr.bf16.mxu0 0
        %2035 = vmatmul.mubr.bf16.gmra.mrb[0].mxu0 %v1994
        %v2036 = vpop.f32.mrb[0].mxu0
        %v2037 = vadd.f32 0.0, %v2036
        %v2038 = vpop.f32.mrb[0].mxu0
        %v2039 = vadd.f32 0.0, %v2038
        %v2040 = vpop.f32.mrb[0].mxu0
        %v2041 = vpop.f32.mrb[0].mxu0
        %2042 = vdwg.mxu0
        %v2043 = vadd.f32 %v1910, %v2037
        %v2044 = vadd.f32 %v1911, %v2039
        %v2046 = vrot.slane %v1525, 1
        %v2062 = vunpack.c.l.b16 %v419
        %v2063 = vunpack.c.h.b16 %v419
        %v2064 = vunpack.c.l.b16 %v420
        %v2065 = vunpack.c.h.b16 %v420
        %v2066 = vunpack.c.l.b16 %v421
        %v2067 = vunpack.c.h.b16 %v421
        %v2068 = vunpack.c.l.b16 %v422
        %v2069 = vunpack.c.h.b16 %v422
        %v2070 = vunpack.c.l.b16 %v423
        %v2071 = vunpack.c.h.b16 %v423
        %v2072 = vunpack.c.l.b16 %v424
        %v2073 = vunpack.c.h.b16 %v424
        %v2074 = vunpack.c.l.b16 %v425
        %v2075 = vunpack.c.h.b16 %v425
        %v2076 = vunpack.c.l.b16 %v426
        %v2077 = vunpack.c.h.b16 %v426
        %v2078 = vunpack.c.l.b16 %v427
        %v2079 = vunpack.c.h.b16 %v427
        %v2080 = vunpack.c.l.b16 %v428
        %v2081 = vunpack.c.h.b16 %v428
        %v2082 = vunpack.c.l.b16 %v429
        %v2083 = vunpack.c.h.b16 %v429
        %v2084 = vunpack.c.l.b16 %v430
        %v2085 = vunpack.c.h.b16 %v430
        %v2086 = vunpack.c.l.b16 %v431
        %v2087 = vunpack.c.h.b16 %v431
        %v2088 = vunpack.c.l.b16 %v432
        %v2089 = vunpack.c.h.b16 %v432
        %v2090 = vunpack.c.l.b16 %v433
        %v2091 = vunpack.c.h.b16 %v433
        %v2092 = vpack.c.b16 %v2064, %v2062
        %v2093 = vpack.c.b16 %v2065, %v2063
        %v2094 = vpack.c.b16 %v2068, %v2066
        %v2095 = vpack.c.b16 %v2069, %v2067
        %v2096 = vpack.c.b16 %v2072, %v2070
        %v2097 = vpack.c.b16 %v2073, %v2071
        %v2098 = vpack.c.b16 %v2076, %v2074
        %v2099 = vpack.c.b16 %v2077, %v2075
        %v2100 = vpack.c.b16 %v2080, %v2078
        %v2101 = vpack.c.b16 %v2081, %v2079
        %v2102 = vpack.c.b16 %v2084, %v2082
        %v2103 = vpack.c.b16 %v2085, %v2083
        %v2104 = vpack.c.b16 %v2088, %v2086
        %v2105 = vpack.c.b16 %v2089, %v2087
        %v2106 = vpack.c.b16 %v2090, %v2090
        %v2107 = vpack.c.b16 %v2091, %v2091
        %v2123 = vsel %vm1602, %v2046, 0
        %v2126 = vsel %vm1606, %v2106, 0
        %v2129 = vsel %vm1606, %v2107, 0
        %2131 = vmatprep.subr.bf16.mxu0 %v2093
        %2132 = vmatpush1.bf16.msra.mxu0 %v2092
        %2133 = vmatprep.subr.bf16.mxu0 %v2095
        %2134 = vmatpush1.bf16.msra.mxu0 %v2094
        %2135 = vmatprep.subr.bf16.mxu0 %v2097
        %2136 = vmatpush1.bf16.msra.mxu0 %v2096
        %2137 = vmatprep.subr.bf16.mxu0 %v2099
        %2138 = vmatpush1.bf16.msra.mxu0 %v2098
        %2139 = vmatprep.subr.bf16.mxu0 %v2101
        %2140 = vmatpush1.bf16.msra.mxu0 %v2100
        %2141 = vmatprep.subr.bf16.mxu0 %v2103
        %2142 = vmatpush1.bf16.msra.mxu0 %v2102
        %2143 = vmatprep.subr.bf16.mxu0 %v2105
        %2144 = vmatpush1.bf16.msra.mxu0 %v2104
        %2145 = vmatprep.subr.bf16.mxu0 %v2129
        %2146 = vmatpush1.bf16.msra.mxu0 %v2126
        %2147 = vmatprep.subr.bf16.mxu0 0
        %2148 = vmatpush1.bf16.msra.mxu0 0
        %2149 = vmatprep.subr.bf16.mxu0 0
        %2150 = vmatpush1.bf16.msra.mxu0 0
        %2151 = vmatprep.subr.bf16.mxu0 0
        %2152 = vmatpush1.bf16.msra.mxu0 0
        %2153 = vmatprep.subr.bf16.mxu0 0
        %2154 = vmatpush1.bf16.msra.mxu0 0
        %2155 = vmatprep.subr.bf16.mxu0 0
        %2156 = vmatpush1.bf16.msra.mxu0 0
        %2157 = vmatprep.subr.bf16.mxu0 0
        %2158 = vmatpush1.bf16.msra.mxu0 0
        %2159 = vmatprep.subr.bf16.mxu0 0
        %2160 = vmatpush1.bf16.msra.mxu0 0
        %2161 = vmatprep.subr.bf16.mxu0 0
        %2162 = vmatpush1.bf16.msra.mxu0 0
        %2163 = vmatprep.mubr.bf16.mxu0 0
        %2164 = vmatmul.mubr.bf16.gmra.mrb[0].mxu0 %v2123
        %v2165 = vpop.f32.mrb[0].mxu0
        %v2166 = vadd.f32 0.0, %v2165
        %v2167 = vpop.f32.mrb[0].mxu0
        %v2168 = vadd.f32 0.0, %v2167
        %v2169 = vpop.f32.mrb[0].mxu0
        %v2170 = vpop.f32.mrb[0].mxu0
        %2171 = vdwg.mxu0
        %v2172 = vadd.f32 %v2043, %v2166
        %v2173 = vadd.f32 %v2044, %v2168
        %2176 = vrot.lane.b32.xlu0 %v2172, 48
        %v2177 = vpop.permute.xlu0 %2176
        %2178 = vrot.lane.b32.xlu0 %v2173, 48
        %v2179 = vpop.permute.xlu0 %2178
        %vm2180 = vcmask 392192
        %v2181 = vsel %vm2180, %v2177, %v2179
        %v2183 = vmax.f32 %v2172, %v2181
        %2184 = vmatprep.subr.bf16.mxu0 %v1573
        %2185 = vmatpush1.bf16.msra.mxu0 %v1572
        %2186 = vmatprep.subr.bf16.mxu0 %v1575
        %2187 = vmatpush1.bf16.msra.mxu0 %v1574
        %2188 = vmatprep.subr.bf16.mxu0 %v1577
        %2189 = vmatpush1.bf16.msra.mxu0 %v1576
        %2190 = vmatprep.subr.bf16.mxu0 %v1579
        %2191 = vmatpush1.bf16.msra.mxu0 %v1578
        %2192 = vmatprep.subr.bf16.mxu0 %v1581
        %2193 = vmatpush1.bf16.msra.mxu0 %v1580
        %2194 = vmatprep.subr.bf16.mxu0 %v1583
        %2195 = vmatpush1.bf16.msra.mxu0 %v1582
        %2196 = vmatprep.subr.bf16.mxu0 %v1585
        %2197 = vmatpush1.bf16.msra.mxu0 %v1584
        %2198 = vmatprep.subr.bf16.mxu0 %v1611
        %2199 = vmatpush1.bf16.msra.mxu0 %v1608
        %2200 = vmatprep.subr.bf16.mxu0 0
        %2201 = vmatpush1.bf16.msra.mxu0 0
        %2202 = vmatprep.subr.bf16.mxu0 0
        %2203 = vmatpush1.bf16.msra.mxu0 0
        %2204 = vmatprep.subr.bf16.mxu0 0
        %2205 = vmatpush1.bf16.msra.mxu0 0
        %2206 = vmatprep.subr.bf16.mxu0 0
        %2207 = vmatpush1.bf16.msra.mxu0 0
        %2208 = vmatprep.subr.bf16.mxu0 0
        %2209 = vmatpush1.bf16.msra.mxu0 0
        %2210 = vmatprep.subr.bf16.mxu0 0
        %2211 = vmatpush1.bf16.msra.mxu0 0
        %2212 = vmatprep.subr.bf16.mxu0 0
        %2213 = vmatpush1.bf16.msra.mxu0 0
        %2214 = vmatprep.subr.bf16.mxu0 0
        %2215 = vmatpush1.bf16.msra.mxu0 0
        %2216 = vmatprep.mubr.bf16.mxu0 0
        %2217 = vmatmul.mubr.bf16.gmra.mrb[0].mxu0 %v1861
        %v2218 = vpop.f32.mrb[0].mxu0
        %v2219 = vadd.f32 0.0, %v2218
        %v2220 = vpop.f32.mrb[0].mxu0
        %v2221 = vadd.f32 0.0, %v2220
        %v2222 = vpop.f32.mrb[0].mxu0
        %v2223 = vpop.f32.mrb[0].mxu0
        %2224 = vdwg.mxu0
        %2225 = vmatprep.subr.bf16.mxu0 %v1700
        %2226 = vmatpush1.bf16.msra.mxu0 %v1699
        %2227 = vmatprep.subr.bf16.mxu0 %v1702
        %2228 = vmatpush1.bf16.msra.mxu0 %v1701
        %2229 = vmatprep.subr.bf16.mxu0 %v1704
        %2230 = vmatpush1.bf16.msra.mxu0 %v1703
        %2231 = vmatprep.subr.bf16.mxu0 %v1706
        %2232 = vmatpush1.bf16.msra.mxu0 %v1705
        %2233 = vmatprep.subr.bf16.mxu0 %v1708
        %2234 = vmatpush1.bf16.msra.mxu0 %v1707
        %2235 = vmatprep.subr.bf16.mxu0 %v1710
        %2236 = vmatpush1.bf16.msra.mxu0 %v1709
        %2237 = vmatprep.subr.bf16.mxu0 %v1712
        %2238 = vmatpush1.bf16.msra.mxu0 %v1711
        %2239 = vmatprep.subr.bf16.mxu0 %v1736
        %2240 = vmatpush1.bf16.msra.mxu0 %v1733
        %2241 = vmatprep.subr.bf16.mxu0 0
        %2242 = vmatpush1.bf16.msra.mxu0 0
        %2243 = vmatprep.subr.bf16.mxu0 0
        %2244 = vmatpush1.bf16.msra.mxu0 0
        %2245 = vmatprep.subr.bf16.mxu0 0
        %2246 = vmatpush1.bf16.msra.mxu0 0
        %2247 = vmatprep.subr.bf16.mxu0 0
        %2248 = vmatpush1.bf16.msra.mxu0 0
        %2249 = vmatprep.subr.bf16.mxu0 0
        %2250 = vmatpush1.bf16.msra.mxu0 0
        %2251 = vmatprep.subr.bf16.mxu0 0
        %2252 = vmatpush1.bf16.msra.mxu0 0
        %2253 = vmatprep.subr.bf16.mxu0 0
        %2254 = vmatpush1.bf16.msra.mxu0 0
        %2255 = vmatprep.subr.bf16.mxu0 0
        %2256 = vmatpush1.bf16.msra.mxu0 0
        %2257 = vmatprep.mubr.bf16.mxu0 0
        %2258 = vmatmul.mubr.bf16.gmra.mrb[0].mxu0 %v1604
        %v2259 = vpop.f32.mrb[0].mxu0
        %v2260 = vadd.f32 %v2219, %v2259
        %v2261 = vpop.f32.mrb[0].mxu0
        %v2262 = vadd.f32 %v2221, %v2261
        %v2263 = vpop.f32.mrb[0].mxu0
        %v2264 = vpop.f32.mrb[0].mxu0
        %2265 = vdwg.mxu0
        %2266 = vmatprep.subr.bf16.mxu0 %v1831
        %2267 = vmatpush1.bf16.msra.mxu0 %v1830
        %2268 = vmatprep.subr.bf16.mxu0 %v1833
        %2269 = vmatpush1.bf16.msra.mxu0 %v1832
        %2270 = vmatprep.subr.bf16.mxu0 %v1835
        %2271 = vmatpush1.bf16.msra.mxu0 %v1834
        %2272 = vmatprep.subr.bf16.mxu0 %v1837
        %2273 = vmatpush1.bf16.msra.mxu0 %v1836
        %2274 = vmatprep.subr.bf16.mxu0 %v1839
        %2275 = vmatpush1.bf16.msra.mxu0 %v1838
        %2276 = vmatprep.subr.bf16.mxu0 %v1841
        %2277 = vmatpush1.bf16.msra.mxu0 %v1840
        %2278 = vmatprep.subr.bf16.mxu0 %v1843
        %2279 = vmatpush1.bf16.msra.mxu0 %v1842
        %2280 = vmatprep.subr.bf16.mxu0 %v1867
        %2281 = vmatpush1.bf16.msra.mxu0 %v1864
        %2282 = vmatprep.subr.bf16.mxu0 0
        %2283 = vmatpush1.bf16.msra.mxu0 0
        %2284 = vmatprep.subr.bf16.mxu0 0
        %2285 = vmatpush1.bf16.msra.mxu0 0
        %2286 = vmatprep.subr.bf16.mxu0 0
        %2287 = vmatpush1.bf16.msra.mxu0 0
        %2288 = vmatprep.subr.bf16.mxu0 0
        %2289 = vmatpush1.bf16.msra.mxu0 0
        %2290 = vmatprep.subr.bf16.mxu0 0
        %2291 = vmatpush1.bf16.msra.mxu0 0
        %2292 = vmatprep.subr.bf16.mxu0 0
        %2293 = vmatpush1.bf16.msra.mxu0 0
        %2294 = vmatprep.subr.bf16.mxu0 0
        %2295 = vmatpush1.bf16.msra.mxu0 0
        %2296 = vmatprep.subr.bf16.mxu0 0
        %2297 = vmatpush1.bf16.msra.mxu0 0
        %2298 = vmatprep.mubr.bf16.mxu0 0
        %2299 = vmatmul.mubr.bf16.gmra.mrb[0].mxu0 %v1994
        %v2300 = vpop.f32.mrb[0].mxu0
        %v2301 = vadd.f32 0.0, %v2300
        %v2302 = vpop.f32.mrb[0].mxu0
        %v2303 = vadd.f32 0.0, %v2302
        %v2304 = vpop.f32.mrb[0].mxu0
        %v2305 = vpop.f32.mrb[0].mxu0
        %2306 = vdwg.mxu0
        %v2307 = vadd.f32 %v2260, %v2301
        %v2308 = vadd.f32 %v2262, %v2303
        %2309 = vmatprep.subr.bf16.mxu0 %v1964
        %2310 = vmatpush1.bf16.msra.mxu0 %v1963
        %2311 = vmatprep.subr.bf16.mxu0 %v1966
        %2312 = vmatpush1.bf16.msra.mxu0 %v1965
        %2313 = vmatprep.subr.bf16.mxu0 %v1968
        %2314 = vmatpush1.bf16.msra.mxu0 %v1967
        %2315 = vmatprep.subr.bf16.mxu0 %v1970
        %2316 = vmatpush1.bf16.msra.mxu0 %v1969
        %2317 = vmatprep.subr.bf16.mxu0 %v1972
        %2318 = vmatpush1.bf16.msra.mxu0 %v1971
        %2319 = vmatprep.subr.bf16.mxu0 %v1974
        %2320 = vmatpush1.bf16.msra.mxu0 %v1973
        %2321 = vmatprep.subr.bf16.mxu0 %v1976
        %2322 = vmatpush1.bf16.msra.mxu0 %v1975
        %2323 = vmatprep.subr.bf16.mxu0 %v2000
        %2324 = vmatpush1.bf16.msra.mxu0 %v1997
        %2325 = vmatprep.subr.bf16.mxu0 0
        %2326 = vmatpush1.bf16.msra.mxu0 0
        %2327 = vmatprep.subr.bf16.mxu0 0
        %2328 = vmatpush1.bf16.msra.mxu0 0
        %2329 = vmatprep.subr.bf16.mxu0 0
        %2330 = vmatpush1.bf16.msra.mxu0 0
        %2331 = vmatprep.subr.bf16.mxu0 0
        %2332 = vmatpush1.bf16.msra.mxu0 0
        %2333 = vmatprep.subr.bf16.mxu0 0
        %2334 = vmatpush1.bf16.msra.mxu0 0
        %2335 = vmatprep.subr.bf16.mxu0 0
        %2336 = vmatpush1.bf16.msra.mxu0 0
        %2337 = vmatprep.subr.bf16.mxu0 0
        %2338 = vmatpush1.bf16.msra.mxu0 0
        %2339 = vmatprep.subr.bf16.mxu0 0
        %2340 = vmatpush1.bf16.msra.mxu0 0
        %2341 = vmatprep.mubr.bf16.mxu0 0
        %2342 = vmatmul.mubr.bf16.gmra.mrb[0].mxu0 %v2123
        %v2343 = vpop.f32.mrb[0].mxu0
        %v2344 = vadd.f32 0.0, %v2343
        %v2345 = vpop.f32.mrb[0].mxu0
        %v2346 = vadd.f32 0.0, %v2345
        %v2347 = vpop.f32.mrb[0].mxu0
        %v2348 = vpop.f32.mrb[0].mxu0
        %2349 = vdwg.mxu0
        %v2350 = vadd.f32 %v2307, %v2344
        %v2351 = vadd.f32 %v2308, %v2346
        %v2353 = vrot.slane %v1526, 1
        %v2355 = vsel %vm1602, %v2353, 0
        %2357 = vmatprep.subr.bf16.mxu0 %v2093
        %2358 = vmatpush1.bf16.msra.mxu0 %v2092
        %2359 = vmatprep.subr.bf16.mxu0 %v2095
        %2360 = vmatpush1.bf16.msra.mxu0 %v2094
        %2361 = vmatprep.subr.bf16.mxu0 %v2097
        %2362 = vmatpush1.bf16.msra.mxu0 %v2096
        %2363 = vmatprep.subr.bf16.mxu0 %v2099
        %2364 = vmatpush1.bf16.msra.mxu0 %v2098
        %2365 = vmatprep.subr.bf16.mxu0 %v2101
        %2366 = vmatpush1.bf16.msra.mxu0 %v2100
        %2367 = vmatprep.subr.bf16.mxu0 %v2103
        %2368 = vmatpush1.bf16.msra.mxu0 %v2102
        %2369 = vmatprep.subr.bf16.mxu0 %v2105
        %2370 = vmatpush1.bf16.msra.mxu0 %v2104
        %2371 = vmatprep.subr.bf16.mxu0 %v2129
        %2372 = vmatpush1.bf16.msra.mxu0 %v2126
        %2373 = vmatprep.subr.bf16.mxu0 0
        %2374 = vmatpush1.bf16.msra.mxu0 0
        %2375 = vmatprep.subr.bf16.mxu0 0
        %2376 = vmatpush1.bf16.msra.mxu0 0
        %2377 = vmatprep.subr.bf16.mxu0 0
        %2378 = vmatpush1.bf16.msra.mxu0 0
        %2379 = vmatprep.subr.bf16.mxu0 0
        %2380 = vmatpush1.bf16.msra.mxu0 0
        %2381 = vmatprep.subr.bf16.mxu0 0
        %2382 = vmatpush1.bf16.msra.mxu0 0
        %2383 = vmatprep.subr.bf16.mxu0 0
        %2384 = vmatpush1.bf16.msra.mxu0 0
        %2385 = vmatprep.subr.bf16.mxu0 0
        %2386 = vmatpush1.bf16.msra.mxu0 0
        %2387 = vmatprep.subr.bf16.mxu0 0
        %2388 = vmatpush1.bf16.msra.mxu0 0
        %2389 = vmatprep.mubr.bf16.mxu0 0
        %2390 = vmatmul.mubr.bf16.gmra.mrb[0].mxu0 %v2355
        %v2391 = vpop.f32.mrb[0].mxu0
        %v2392 = vadd.f32 0.0, %v2391
        %v2393 = vpop.f32.mrb[0].mxu0
        %v2394 = vadd.f32 0.0, %v2393
        %v2395 = vpop.f32.mrb[0].mxu0
        %v2396 = vpop.f32.mrb[0].mxu0
        %2397 = vdwg.mxu0
        %v2398 = vadd.f32 %v2350, %v2392
        %v2399 = vadd.f32 %v2351, %v2394
        %2402 = vrot.lane.b32.xlu0 %v2398, 48
        %v2403 = vpop.permute.xlu0 %2402
        %2404 = vrot.lane.b32.xlu0 %v2399, 48
        %v2405 = vpop.permute.xlu0 %2404
        %v2406 = vsel %vm2180, %v2403, %v2405
        %v2408 = vmax.f32 %v2398, %v2406
        %v2409 = vmax.f32 %v2183, %v2408
        %v2410 = vld [vmem:[%s6] sm:$0x1]
        %v2412 = vlaneseq
        %v2413 = vshrl.u32 %v2412, 7
        %v2414 = vsub.s32 0, %v2413
        %v2415 = vrot.slane %v2410, %v2414
        %v2417 = vadd.f32 %v2409, %v2415
        %v2418 = vmax.f32 %v2417, 0.0
        %v2419 = vld [vmem:[%s7] sm:$0x1]
        %v2420 = vpack.c.bf16 %v2418, %v2418
        %v2421 = vld [vmem:[%s3] sm:$0xf]
        %v2422 = vld [vmem:[%s3 + $0x4] sm:$0xf]
        %v2423 = vld [vmem:[%s3 + $0x8] sm:$0xf]
        %v2424 = vld [vmem:[%s3 + $0xc] sm:$0xf]
        %v2425 = vld [vmem:[%s3 + $0x10] sm:$0xf]
        %v2426 = vld [vmem:[%s3 + $0x14] sm:$0xf]
        %v2427 = vld [vmem:[%s3 + $0x18] sm:$0xf]
        %v2428 = vld [vmem:[%s3 + $0x1c] sm:$0xf]
        %v2429 = vld [vmem:[%s3 + $0x20] sm:$0xf]
        %v2430 = vld [vmem:[%s3 + $0x24] sm:$0xf]
        %v2441 = vunpack.c.l.b16 %v2421
        %v2442 = vunpack.c.l.b16 %v2422
        %v2443 = vunpack.c.l.b16 %v2423
        %v2444 = vunpack.c.l.b16 %v2424
        %v2445 = vunpack.c.l.b16 %v2425
        %v2446 = vunpack.c.l.b16 %v2426
        %v2447 = vunpack.c.l.b16 %v2427
        %v2448 = vunpack.c.l.b16 %v2428
        %v2449 = vunpack.c.l.b16 %v2429
        %v2450 = vunpack.c.l.b16 %v2430
        %v2451 = vpack.c.b16 %v2442, %v2441
        %v2452 = vpack.c.b16 %v2444, %v2443
        %v2453 = vpack.c.b16 %v2446, %v2445
        %v2454 = vpack.c.b16 %v2448, %v2447
        %v2455 = vpack.c.b16 %v2450, %v2449
        %vm2461 = vcmask 654336
        %v2463 = vsel %vm2461, %v2420, 0
        %2465 = vmatprep.subr.bf16.mxu0 0
        %2466 = vmatpush1.bf16.msra.mxu0 %v2451
        %2467 = vmatprep.subr.bf16.mxu0 0
        %2468 = vmatpush1.bf16.msra.mxu0 %v2452
        %2469 = vmatprep.subr.bf16.mxu0 0
        %2470 = vmatpush1.bf16.msra.mxu0 %v2453
        %2471 = vmatprep.subr.bf16.mxu0 0
        %2472 = vmatpush1.bf16.msra.mxu0 %v2454
        %2473 = vmatprep.subr.bf16.mxu0 0
        %2474 = vmatpush1.bf16.msra.mxu0 %v2455
        %2475 = vmatprep.subr.bf16.mxu0 0
        %2476 = vmatpush1.bf16.msra.mxu0 0
        %2477 = vmatprep.subr.bf16.mxu0 0
        %2478 = vmatpush1.bf16.msra.mxu0 0
        %2479 = vmatprep.subr.bf16.mxu0 0
        %2480 = vmatpush1.bf16.msra.mxu0 0
        %2481 = vmatprep.subr.bf16.mxu0 0
        %2482 = vmatpush1.bf16.msra.mxu0 0
        %2483 = vmatprep.subr.bf16.mxu0 0
        %2484 = vmatpush1.bf16.msra.mxu0 0
        %2485 = vmatprep.subr.bf16.mxu0 0
        %2486 = vmatpush1.bf16.msra.mxu0 0
        %2487 = vmatprep.subr.bf16.mxu0 0
        %2488 = vmatpush1.bf16.msra.mxu0 0
        %2489 = vmatprep.subr.bf16.mxu0 0
        %2490 = vmatpush1.bf16.msra.mxu0 0
        %2491 = vmatprep.subr.bf16.mxu0 0
        %2492 = vmatpush1.bf16.msra.mxu0 0
        %2493 = vmatprep.subr.bf16.mxu0 0
        %2494 = vmatpush1.bf16.msra.mxu0 0
        %2495 = vmatprep.subr.bf16.mxu0 0
        %2496 = vmatpush1.bf16.msra.mxu0 0
        %2497 = vmatprep.mubr.bf16.mxu0 0
        %2498 = vmatmul.mubr.bf16.gmra.mrb[0].mxu0 %v2463
        %v2499 = vpop.f32.mrb[0].mxu0
        %v2500 = vadd.f32 0.0, %v2499
        %v2501 = vpop.f32.mrb[0].mxu0
        %v2502 = vpop.f32.mrb[0].mxu0
        %v2503 = vpop.f32.mrb[0].mxu0
        %2504 = vdwg.mxu0
        %v2505 = vadd.f32 %v2419, %v2500
        %s2506 = scalar_lea.vmem %s3, 40
        %v2507 = vld [vmem:[%s2506] sm:$0xf]
        %v2508 = vld [vmem:[%s2506 + $0x4] sm:$0xf]
        %v2509 = vld [vmem:[%s2506 + $0x8] sm:$0xf]
        %v2510 = vld [vmem:[%s2506 + $0xc] sm:$0xf]
        %v2511 = vld [vmem:[%s2506 + $0x10] sm:$0xf]
        %v2512 = vld [vmem:[%s2506 + $0x14] sm:$0xf]
        %v2513 = vld [vmem:[%s2506 + $0x18] sm:$0xf]
        %v2514 = vld [vmem:[%s2506 + $0x1c] sm:$0xf]
        %v2515 = vld [vmem:[%s2506 + $0x20] sm:$0xf]
        %v2516 = vld [vmem:[%s2506 + $0x24] sm:$0xf]
        %v2517 = vshrl.u32 %v2420, 16
        %v2529 = vunpack.c.l.b16 %v2507
        %v2530 = vunpack.c.l.b16 %v2508
        %v2531 = vunpack.c.l.b16 %v2509
        %v2532 = vunpack.c.l.b16 %v2510
        %v2533 = vunpack.c.l.b16 %v2511
        %v2534 = vunpack.c.l.b16 %v2512
        %v2535 = vunpack.c.l.b16 %v2513
        %v2536 = vunpack.c.l.b16 %v2514
        %v2537 = vunpack.c.l.b16 %v2515
        %v2538 = vunpack.c.l.b16 %v2516
        %v2539 = vpack.c.b16 %v2530, %v2529
        %v2540 = vpack.c.b16 %v2532, %v2531
        %v2541 = vpack.c.b16 %v2534, %v2533
        %v2542 = vpack.c.b16 %v2536, %v2535
        %v2543 = vpack.c.b16 %v2538, %v2537
        %v2550 = vsel %vm2461, %v2517, 0
        %2552 = vmatprep.subr.bf16.mxu0 0
        %2553 = vmatpush1.bf16.msra.mxu0 %v2539
        %2554 = vmatprep.subr.bf16.mxu0 0
        %2555 = vmatpush1.bf16.msra.mxu0 %v2540
        %2556 = vmatprep.subr.bf16.mxu0 0
        %2557 = vmatpush1.bf16.msra.mxu0 %v2541
        %2558 = vmatprep.subr.bf16.mxu0 0
        %2559 = vmatpush1.bf16.msra.mxu0 %v2542
        %2560 = vmatprep.subr.bf16.mxu0 0
        %2561 = vmatpush1.bf16.msra.mxu0 %v2543
        %2562 = vmatprep.subr.bf16.mxu0 0
        %2563 = vmatpush1.bf16.msra.mxu0 0
        %2564 = vmatprep.subr.bf16.mxu0 0
        %2565 = vmatpush1.bf16.msra.mxu0 0
        %2566 = vmatprep.subr.bf16.mxu0 0
        %2567 = vmatpush1.bf16.msra.mxu0 0
        %2568 = vmatprep.subr.bf16.mxu0 0
        %2569 = vmatpush1.bf16.msra.mxu0 0
        %2570 = vmatprep.subr.bf16.mxu0 0
        %2571 = vmatpush1.bf16.msra.mxu0 0
        %2572 = vmatprep.subr.bf16.mxu0 0
        %2573 = vmatpush1.bf16.msra.mxu0 0
        %2574 = vmatprep.subr.bf16.mxu0 0
        %2575 = vmatpush1.bf16.msra.mxu0 0
        %2576 = vmatprep.subr.bf16.mxu0 0
        %2577 = vmatpush1.bf16.msra.mxu0 0
        %2578 = vmatprep.subr.bf16.mxu0 0
        %2579 = vmatpush1.bf16.msra.mxu0 0
        %2580 = vmatprep.subr.bf16.mxu0 0
        %2581 = vmatpush1.bf16.msra.mxu0 0
        %2582 = vmatprep.subr.bf16.mxu0 0
        %2583 = vmatpush1.bf16.msra.mxu0 0
        %2584 = vmatprep.mubr.bf16.mxu0 0
        %2585 = vmatmul.mubr.bf16.gmra.mrb[0].mxu0 %v2550
        %v2586 = vpop.f32.mrb[0].mxu0
        %v2587 = vadd.f32 0.0, %v2586
        %v2588 = vpop.f32.mrb[0].mxu0
        %v2589 = vpop.f32.mrb[0].mxu0
        %v2590 = vpop.f32.mrb[0].mxu0
        %2591 = vdwg.mxu0
        %v2592 = vadd.f32 %v2505, %v2587
        %s2593 = scalar_lea.vmem %s3, 80
        %v2594 = vld [vmem:[%s2593] sm:$0xf]
        %v2595 = vld [vmem:[%s2593 + $0x4] sm:$0xf]
        %v2596 = vld [vmem:[%s2593 + $0x8] sm:$0xf]
        %v2597 = vld [vmem:[%s2593 + $0xc] sm:$0xf]
        %v2598 = vld [vmem:[%s2593 + $0x10] sm:$0xf]
        %v2599 = vld [vmem:[%s2593 + $0x14] sm:$0xf]
        %v2600 = vld [vmem:[%s2593 + $0x18] sm:$0xf]
        %v2601 = vld [vmem:[%s2593 + $0x1c] sm:$0xf]
        %v2602 = vld [vmem:[%s2593 + $0x20] sm:$0xf]
        %v2603 = vld [vmem:[%s2593 + $0x24] sm:$0xf]
        %v2605 = vrot.slane %v2420, 1
        %v2616 = vunpack.c.l.b16 %v2594
        %v2617 = vunpack.c.l.b16 %v2595
        %v2618 = vunpack.c.l.b16 %v2596
        %v2619 = vunpack.c.l.b16 %v2597
        %v2620 = vunpack.c.l.b16 %v2598
        %v2621 = vunpack.c.l.b16 %v2599
        %v2622 = vunpack.c.l.b16 %v2600
        %v2623 = vunpack.c.l.b16 %v2601
        %v2624 = vunpack.c.l.b16 %v2602
        %v2625 = vunpack.c.l.b16 %v2603
        %v2626 = vpack.c.b16 %v2617, %v2616
        %v2627 = vpack.c.b16 %v2619, %v2618
        %v2628 = vpack.c.b16 %v2621, %v2620
        %v2629 = vpack.c.b16 %v2623, %v2622
        %v2630 = vpack.c.b16 %v2625, %v2624
        %v2637 = vsel %vm2461, %v2605, 0
        %2639 = vmatprep.subr.bf16.mxu0 0
        %2640 = vmatpush1.bf16.msra.mxu0 %v2626
        %2641 = vmatprep.subr.bf16.mxu0 0
        %2642 = vmatpush1.bf16.msra.mxu0 %v2627
        %2643 = vmatprep.subr.bf16.mxu0 0
        %2644 = vmatpush1.bf16.msra.mxu0 %v2628
        %2645 = vmatprep.subr.bf16.mxu0 0
        %2646 = vmatpush1.bf16.msra.mxu0 %v2629
        %2647 = vmatprep.subr.bf16.mxu0 0
        %2648 = vmatpush1.bf16.msra.mxu0 %v2630
        %2649 = vmatprep.subr.bf16.mxu0 0
        %2650 = vmatpush1.bf16.msra.mxu0 0
        %2651 = vmatprep.subr.bf16.mxu0 0
        %2652 = vmatpush1.bf16.msra.mxu0 0
        %2653 = vmatprep.subr.bf16.mxu0 0
        %2654 = vmatpush1.bf16.msra.mxu0 0
        %2655 = vmatprep.subr.bf16.mxu0 0
        %2656 = vmatpush1.bf16.msra.mxu0 0
        %2657 = vmatprep.subr.bf16.mxu0 0
        %2658 = vmatpush1.bf16.msra.mxu0 0
        %2659 = vmatprep.subr.bf16.mxu0 0
        %2660 = vmatpush1.bf16.msra.mxu0 0
        %2661 = vmatprep.subr.bf16.mxu0 0
        %2662 = vmatpush1.bf16.msra.mxu0 0
        %2663 = vmatprep.subr.bf16.mxu0 0
        %2664 = vmatpush1.bf16.msra.mxu0 0
        %2665 = vmatprep.subr.bf16.mxu0 0
        %2666 = vmatpush1.bf16.msra.mxu0 0
        %2667 = vmatprep.subr.bf16.mxu0 0
        %2668 = vmatpush1.bf16.msra.mxu0 0
        %2669 = vmatprep.subr.bf16.mxu0 0
        %2670 = vmatpush1.bf16.msra.mxu0 0
        %2671 = vmatprep.mubr.bf16.mxu0 0
        %2672 = vmatmul.mubr.bf16.gmra.mrb[0].mxu0 %v2637
        %v2673 = vpop.f32.mrb[0].mxu0
        %v2674 = vadd.f32 0.0, %v2673
        %v2675 = vpop.f32.mrb[0].mxu0
        %v2676 = vpop.f32.mrb[0].mxu0
        %v2677 = vpop.f32.mrb[0].mxu0
        %2678 = vdwg.mxu0
        %v2679 = vadd.f32 %v2592, %v2674
        %s2680 = scalar_lea.vmem %s3, 120
        %v2681 = vld [vmem:[%s2680] sm:$0xf]
        %v2682 = vld [vmem:[%s2680 + $0x4] sm:$0xf]
        %v2683 = vld [vmem:[%s2680 + $0x8] sm:$0xf]
        %v2684 = vld [vmem:[%s2680 + $0xc] sm:$0xf]
        %v2685 = vld [vmem:[%s2680 + $0x10] sm:$0xf]
        %v2686 = vld [vmem:[%s2680 + $0x14] sm:$0xf]
        %v2687 = vld [vmem:[%s2680 + $0x18] sm:$0xf]
        %v2688 = vld [vmem:[%s2680 + $0x1c] sm:$0xf]
        %v2689 = vld [vmem:[%s2680 + $0x20] sm:$0xf]
        %v2690 = vld [vmem:[%s2680 + $0x24] sm:$0xf]
        %v2691 = vrot.slane %v2517, 1
        %v2702 = vunpack.c.l.b16 %v2681
        %v2703 = vunpack.c.l.b16 %v2682
        %v2704 = vunpack.c.l.b16 %v2683
        %v2705 = vunpack.c.l.b16 %v2684
        %v2706 = vunpack.c.l.b16 %v2685
        %v2707 = vunpack.c.l.b16 %v2686
        %v2708 = vunpack.c.l.b16 %v2687
        %v2709 = vunpack.c.l.b16 %v2688
        %v2710 = vunpack.c.l.b16 %v2689
        %v2711 = vunpack.c.l.b16 %v2690
        %v2712 = vpack.c.b16 %v2703, %v2702
        %v2713 = vpack.c.b16 %v2705, %v2704
        %v2714 = vpack.c.b16 %v2707, %v2706
        %v2715 = vpack.c.b16 %v2709, %v2708
        %v2716 = vpack.c.b16 %v2711, %v2710
        %v2723 = vsel %vm2461, %v2691, 0
        %2725 = vmatprep.subr.bf16.mxu0 0
        %2726 = vmatpush1.bf16.msra.mxu0 %v2712
        %2727 = vmatprep.subr.bf16.mxu0 0
        %2728 = vmatpush1.bf16.msra.mxu0 %v2713
        %2729 = vmatprep.subr.bf16.mxu0 0
        %2730 = vmatpush1.bf16.msra.mxu0 %v2714
        %2731 = vmatprep.subr.bf16.mxu0 0
        %2732 = vmatpush1.bf16.msra.mxu0 %v2715
        %2733 = vmatprep.subr.bf16.mxu0 0
        %2734 = vmatpush1.bf16.msra.mxu0 %v2716
        %2735 = vmatprep.subr.bf16.mxu0 0
        %2736 = vmatpush1.bf16.msra.mxu0 0
        %2737 = vmatprep.subr.bf16.mxu0 0
        %2738 = vmatpush1.bf16.msra.mxu0 0
        %2739 = vmatprep.subr.bf16.mxu0 0
        %2740 = vmatpush1.bf16.msra.mxu0 0
        %2741 = vmatprep.subr.bf16.mxu0 0
        %2742 = vmatpush1.bf16.msra.mxu0 0
        %2743 = vmatprep.subr.bf16.mxu0 0
        %2744 = vmatpush1.bf16.msra.mxu0 0
        %2745 = vmatprep.subr.bf16.mxu0 0
        %2746 = vmatpush1.bf16.msra.mxu0 0
        %2747 = vmatprep.subr.bf16.mxu0 0
        %2748 = vmatpush1.bf16.msra.mxu0 0
        %2749 = vmatprep.subr.bf16.mxu0 0
        %2750 = vmatpush1.bf16.msra.mxu0 0
        %2751 = vmatprep.subr.bf16.mxu0 0
        %2752 = vmatpush1.bf16.msra.mxu0 0
        %2753 = vmatprep.subr.bf16.mxu0 0
        %2754 = vmatpush1.bf16.msra.mxu0 0
        %2755 = vmatprep.subr.bf16.mxu0 0
        %2756 = vmatpush1.bf16.msra.mxu0 0
        %2757 = vmatprep.mubr.bf16.mxu0 0
        %2758 = vmatmul.mubr.bf16.gmra.mrb[0].mxu0 %v2723
        %v2759 = vpop.f32.mrb[0].mxu0
        %v2760 = vadd.f32 0.0, %v2759
        %v2761 = vpop.f32.mrb[0].mxu0
        %v2762 = vpop.f32.mrb[0].mxu0
        %v2763 = vpop.f32.mrb[0].mxu0
        %2764 = vdwg.mxu0
        %v2765 = vadd.f32 %v2679, %v2760
        %v2766 = vpack.c.bf16 %v2765, %v2765
        %v2767 = vld [vmem:[%s4] sm:$0xf]
        %v2768 = vld [vmem:[%s4 + $0x4] sm:$0xf]
        %v2769 = vld [vmem:[%s4 + $0x8] sm:$0xf]
        %v2770 = vld [vmem:[%s4 + $0xc] sm:$0xf]
        %v2771 = vld [vmem:[%s4 + $0x10] sm:$0xf]
        %v2772 = vld [vmem:[%s4 + $0x14] sm:$0xf]
        %v2773 = vld [vmem:[%s4 + $0x18] sm:$0x1]
        %v2774 = vld [vmem:[%s8] sm:$0x1]
        %v2782 = vunpack.c.l.b16 %v2767
        %v2783 = vunpack.c.l.b16 %v2768
        %v2784 = vunpack.c.l.b16 %v2769
        %v2785 = vunpack.c.l.b16 %v2770
        %v2786 = vunpack.c.l.b16 %v2771
        %v2787 = vunpack.c.l.b16 %v2772
        %v2788 = vunpack.c.l.b16 %v2773
        %v2789 = vpack.c.b16 %v2783, %v2782
        %v2790 = vpack.c.b16 %v2785, %v2784
        %v2791 = vpack.c.b16 %v2787, %v2786
        %v2792 = vpack.c.b16 %v2788, %v2788
        %vm2796 = vcmask 408576
        %v2798 = vsel %vm2796, %v2766, 0
        %vm2800 = vcmask 1040384
        %v2802 = vsel %vm2800, %v2792, 0
        %2804 = vmatprep.subr.bf16.mxu0 0
        %2805 = vmatpush1.bf16.msra.mxu0 %v2789
        %2806 = vmatprep.subr.bf16.mxu0 0
        %2807 = vmatpush1.bf16.msra.mxu0 %v2790
        %2808 = vmatprep.subr.bf16.mxu0 0
        %2809 = vmatpush1.bf16.msra.mxu0 %v2791
        %2810 = vmatprep.subr.bf16.mxu0 0
        %2811 = vmatpush1.bf16.msra.mxu0 %v2802
        %2812 = vmatprep.subr.bf16.mxu0 0
        %2813 = vmatpush1.bf16.msra.mxu0 0
        %2814 = vmatprep.subr.bf16.mxu0 0
        %2815 = vmatpush1.bf16.msra.mxu0 0
        %2816 = vmatprep.subr.bf16.mxu0 0
        %2817 = vmatpush1.bf16.msra.mxu0 0
        %2818 = vmatprep.subr.bf16.mxu0 0
        %2819 = vmatpush1.bf16.msra.mxu0 0
        %2820 = vmatprep.subr.bf16.mxu0 0
        %2821 = vmatpush1.bf16.msra.mxu0 0
        %2822 = vmatprep.subr.bf16.mxu0 0
        %2823 = vmatpush1.bf16.msra.mxu0 0
        %2824 = vmatprep.subr.bf16.mxu0 0
        %2825 = vmatpush1.bf16.msra.mxu0 0
        %2826 = vmatprep.subr.bf16.mxu0 0
        %2827 = vmatpush1.bf16.msra.mxu0 0
        %2828 = vmatprep.subr.bf16.mxu0 0
        %2829 = vmatpush1.bf16.msra.mxu0 0
        %2830 = vmatprep.subr.bf16.mxu0 0
        %2831 = vmatpush1.bf16.msra.mxu0 0
        %2832 = vmatprep.subr.bf16.mxu0 0
        %2833 = vmatpush1.bf16.msra.mxu0 0
        %2834 = vmatprep.subr.bf16.mxu0 0
        %2835 = vmatpush1.bf16.msra.mxu0 0
        %2836 = vmatprep.mubr.bf16.mxu0 0
        %2837 = vmatmul.mubr.bf16.gmra.mrb[0].mxu0 %v2798
        %v2838 = vpop.f32.mrb[0].mxu0
        %v2839 = vadd.f32 %v2774, %v2838
        %v2840 = vpop.f32.mrb[0].mxu0
        %v2841 = vpop.f32.mrb[0].mxu0
        %v2842 = vpop.f32.mrb[0].mxu0
        %2843 = vdwg.mxu0
        %vm2844 = vcmask 73728
        %v2845 = vsel %vm2844, %v2839, -inf
        %2846 = vmax.xlane.f32.xlu0 %v2845
        %v2847 = vpop.xlane.xlu0 %2846
        %v2848 = vsub.f32 %v2839, %v2847
        %v2849 = vmul.f32 %v2848, 1.442695
        %v2850 = vpow.pop %v2849
        %v2851 = vsel %vm2844, %v2850, 0.0
        %2852 = vadd.xlane.f32.xlu0 %v2851
        %v2853 = vpop.xlane.xlu0 %2852
        %v2854 = vlog2.pop %v2853
        %v2855 = vmul.f32 %v2854, 0.6931472
        %v2856 = vsub.f32 %v2848, %v2855
        %2857 = vst.msk [vmem:[%s324] sm:$0x1] %vm2844, %v2856
        %s2858 = sand.u32 %s225, 1
        %s2859 = scalar_lea.sflag [#allocation3], %s2858
        %s2860 = sand.u32 %s225, 1
        %s2861 = scalar_lea.vmem [#allocation2], %s2860
        // Predicated region
        $region57: #{my_network_forward.1} parent=55 // pred_check
          %p2862 = pneg %p235
        $region58: #{my_network_forward.1} parent=55 // pred_check_branch
          %2864 = sbr.rel (%p2862) target = $region60
        $region59: #{my_network_forward.1} parent=55 // pred_region
          %s2866 = ssub.s32 16, 16
          %2867 = vsyncadd %s2859, %s2866
          %s2868 = smul.addr %s23, 16
          %s2869 = scalar_lea.hbm %s9, %s2868
          %s2871 = sshll.u32 %s2861, 4
          %s2872 = int_to_ptr.vmem [resolvable:$true] %s2871
          %2874 = dma.vmem_to_hbm [thread:$0]  %s2872, 16, %s2869, %s2859
        $region60: #{my_network_forward.1} parent=55 // pred_fallthru
          _
      $region56: #{my_network_forward.1} parent=5 // pred_fallthru
        _
      %p2875 = scmp.le.s32.totalorder 2, %s18
      // Predicated region
      $region61: #{my_network_forward.1} parent=5 // pred_check
        %p2876 = pneg %p2875
      $region62: #{my_network_forward.1} parent=5 // pred_check_branch
        %2878 = sbr.rel (%p2876) target = $region64
      $region63: #{my_network_forward.1} parent=5 // pred_region
        %s2879 = ssub.s32 %s18, 2
        // Predicated region
        $region65: #{my_network_forward.1} parent=63 // pred_check
          %p2880 = pneg %p241
        $region66: #{my_network_forward.1} parent=63 // pred_check_branch
          %2882 = sbr.rel (%p2880) target = $region68
        $region67: #{my_network_forward.1} parent=63 // pred_region
          %s2883 = sand.u32 %s226, 1
          %s2884 = scalar_lea.sflag [#allocation3], %s2883
          %s2885 = sand.u32 %s226, 1
          %s2886 = scalar_lea.vmem [#allocation2], %s2885
          %2887 = dma.done %s2884, 16
        $region68: #{my_network_forward.1} parent=63 // pred_fallthru
          _
      $region64: #{my_network_forward.1} parent=5 // pred_fallthru
        _
    $region6: #{my_network_forward.1} parent=1 // loop_footer
      %s22 = sadd.s32 1, %s18
    $region7: #{my_network_forward.1} parent=1 // loop_footer_branch
      %17 = sbr.rel target = $region3
    $region8: #{my_network_forward.1} parent=1 // loop_exit
      _
    %2888 = vsyncpa [#allocation3], 1
    %s2889 = scalar_lea.sflag [#allocation3], 1
    %2890 = vsyncpa %s2889, 1

</llo_original>
